<compile_context>
chip_gen: v7x
topology: tpu7x:2x2x1
jax: 0.10.0
libtpu: 0.0.40
codegen_flags: <defaults>
</compile_context>

<pallas_src>
import functools

import jax
import jax.numpy as jnp
import numpy as np
from jax.experimental import pallas as pl
from jax.experimental.pallas import tpu as pltpu

# ----------------------------- model config ---------------------------------
INPUT_SIZE = 8
HIDDEN_SIZE = 32            # 4H = 128 -> gates fill exactly one lane-width
NUM_LAYERS = 3
OUTPUT_SIZE = 5
BN_EPS = 1e-5


# --------------------------- fused Pallas kernel -----------------------------
def _fused_lstm_kernel(*refs, num_layers, seq_len, batch, hidden):
    """All LSTM layers + BatchNorm1d(batch stats) + FC head in one kernel.

    refs layout (inputs, output, scratch):
      [0]                        x_ref   (T*B, I)      time-major, flattened
      [1+3l, 2+3l, 3+3l]         layer l: w_ih_T (in,4H), w_hh_T (H,4H), bias (1,4H)
      [1+3L .. 4+3L]             gamma (1,H), beta (1,H), w_fc_T (H,O), b_fc (1,O)
      [5+3L]                     out_ref (B, O)
      [6+3L], [7+3L]             zin_sc (T*B,4H), seq_sc (T*B,H)   VMEM scratch
    """
    T, B, H = seq_len, batch, hidden
    x_ref = refs[0]
    gamma_ref, beta_ref, wfc_ref, bfc_ref = refs[1 + 3 * num_layers:5 + 3 * num_layers]
    out_ref = refs[5 + 3 * num_layers]
    zin_sc = refs[6 + 3 * num_layers]
    seq_sc = refs[7 + 3 * num_layers]

    h = None
    for l in range(num_layers):
        wih_ref = refs[1 + 3 * l]   # (in, 4H)  pre-transposed
        whh_ref = refs[2 + 3 * l]   # (H, 4H)   pre-transposed
        b_ref = refs[3 + 3 * l]     # (1, 4H)   b_ih + b_hh

        layer_in = x_ref[...] if l == 0 else seq_sc[...]   # (T*B, in)

        # Hoisted input projection + bias: one matmul per layer, lane-dense 4H.
        zin_sc[...] = (
            jnp.dot(layer_in, wih_ref[...], preferred_element_type=jnp.float32)
            + b_ref[...]
        )

        whh = whh_ref[...]                                  # held for the loop
        h = jnp.zeros((B, H), jnp.float32)
        c = jnp.zeros((B, H), jnp.float32)

        # Fully-unrolled serial recurrence over time (T is static).
        for t in range(T):
            z = zin_sc[t * B:(t + 1) * B, :] + jnp.dot(
                h, whh, preferred_element_type=jnp.float32)        # (B, 4H)
            sig = jax.nn.sigmoid(z)     # full-vreg EUP pass
            th = jnp.tanh(z)            # full-vreg EUP pass
            i_g = sig[:, 0:H]
            f_g = sig[:, H:2 * H]
            o_g = sig[:, 3 * H:4 * H]
            g_g = th[:, 2 * H:3 * H]
            c = f_g * c + i_g * g_g
            h = o_g * jnp.tanh(c)
            if l < num_layers - 1:      # last layer only needs the final h
                seq_sc[t * B:(t + 1) * B, :] = h

    # -------- head: BatchNorm1d (biased batch stats, training mode) + FC -----
    mean = jnp.mean(h, axis=0, keepdims=True)
    var = jnp.mean((h - mean) ** 2, axis=0, keepdims=True)
    xn = (h - mean) * jax.lax.rsqrt(var + BN_EPS)
    y = xn * gamma_ref[...] + beta_ref[...]
    out_ref[...] = (
        jnp.dot(y, wfc_ref[...], preferred_element_type=jnp.float32) + bfc_ref[...]
    )


# ------------------------------- full model ---------------------------------
@jax.jit
def lstm_model_forward(x, params):
    """x: (B, T, input_size) or (B, input_size) -> logits (B, output_size)."""
    if x.ndim == 2:
        x = x[:, None, :]                                   # unsqueeze(1)
    B, T, _ = x.shape
    H = params["layers"][0][1].shape[1]                     # w_hh: (4H, H)
    O = params["w_fc"].shape[0]
    num_layers = len(params["layers"])

    # time-major, flattened to (T*B, I) for the hoisted input projection
    x_flat = jnp.transpose(x, (1, 0, 2)).astype(jnp.float32).reshape(T * B, -1)

    args = [x_flat]
    for (w_ih, w_hh, bias) in params["layers"]:
        # pre-transpose once outside the kernel (PyTorch layout kept in params)
        args += [w_ih.T.astype(jnp.float32),
                 w_hh.T.astype(jnp.float32),
                 bias.astype(jnp.float32)]
    args += [params["gamma"], params["beta"],
             params["w_fc"].T.astype(jnp.float32), params["b_fc"]]

    return pl.pallas_call(
        functools.partial(
            _fused_lstm_kernel,
            num_layers=num_layers, seq_len=T, batch=B, hidden=H),
        out_shape=jax.ShapeDtypeStruct((B, O), jnp.float32),
        scratch_shapes=[
            pltpu.VMEM((T * B, 4 * H), jnp.float32),   # per-layer input projection
            pltpu.VMEM((T * B, H), jnp.float32),       # per-layer hidden sequence
        ],
    )(*args)


# ------------------------------ reference (JAX) ------------------------------
def ref_forward(x, params):
    if x.ndim == 2:
        x = x[:, None, :]
    B = x.shape[0]
    inp = jnp.transpose(x, (1, 0, 2)).astype(jnp.float32)
    for (w_ih, w_hh, bias) in params["layers"]:
        H = w_hh.shape[1]

        def step(carry, x_t, w_ih=w_ih, w_hh=w_hh, bias=bias, H=H):
            h, c = carry
            z = x_t @ w_ih.T + h @ w_hh.T + bias[0]
            i = jax.nn.sigmoid(z[:, :H])
            f = jax.nn.sigmoid(z[:, H:2 * H])
            g = jnp.tanh(z[:, 2 * H:3 * H])
            o = jax.nn.sigmoid(z[:, 3 * H:])
            c = f * c + i * g
            h = o * jnp.tanh(c)
            return (h, c), h

        init = (jnp.zeros((B, H), jnp.float32), jnp.zeros((B, H), jnp.float32))
        _, hs = jax.lax.scan(step, init, inp)
        inp = hs
    last = inp[-1]
    mean = last.mean(axis=0)
    var = ((last - mean) ** 2).mean(axis=0)
    xn = (last - mean) / jnp.sqrt(var + BN_EPS) * params["gamma"][0] + params["beta"][0]
    return xn @ params["w_fc"].T + params["b_fc"][0]


# ------------------------------ param init ----------------------------------
def init_params(key, input_size, hidden_size, num_layers, output_size):
    bound = 1.0 / np.sqrt(hidden_size)
    layers = []
    for layer in range(num_layers):
        in_sz = input_size if layer == 0 else hidden_size
        key, k1, k2, k3, k4 = jax.random.split(key, 5)
        w_ih = jax.random.uniform(k1, (4 * hidden_size, in_sz), jnp.float32, -bound, bound)
        w_hh = jax.random.uniform(k2, (4 * hidden_size, hidden_size), jnp.float32, -bound, bound)
        b_ih = jax.random.uniform(k3, (4 * hidden_size,), jnp.float32, -bound, bound)
        b_hh = jax.random.uniform(k4, (4 * hidden_size,), jnp.float32, -bound, bound)
        layers.append((w_ih, w_hh, (b_ih + b_hh)[None, :]))
    key, k5, k6 = jax.random.split(key, 3)
    fc_bound = 1.0 / np.sqrt(hidden_size)
    w_fc = jax.random.uniform(k5, (output_size, hidden_size), jnp.float32, -fc_bound, fc_bound)
    b_fc = jax.random.uniform(k6, (1, output_size), jnp.float32, -fc_bound, fc_bound)
    gamma = jnp.ones((1, hidden_size), jnp.float32)   # BatchNorm1d default weight
    beta = jnp.zeros((1, hidden_size), jnp.float32)   # BatchNorm1d default bias
    return {"layers": layers, "w_fc": w_fc, "b_fc": b_fc, "gamma": gamma, "beta": beta}


# --------------------------------- main --------------------------------------
if __name__ == "__main__":
    key = jax.random.PRNGKey(0)
    key, kx, kp = jax.random.split(key, 3)

    B, T = 4, 8
    x = jax.random.normal(kx, (B, T, INPUT_SIZE), jnp.float32)
    params = init_params(kp, INPUT_SIZE, HIDDEN_SIZE, NUM_LAYERS, OUTPUT_SIZE)

    out = lstm_model_forward(x, params)
    out = jax.block_until_ready(out)

    ref = jax.block_until_ready(ref_forward(x, params))
    assert out.shape == (B, OUTPUT_SIZE), out.shape
    np.testing.assert_allclose(np.asarray(out), np.asarray(ref), rtol=1e-4, atol=1e-4)

    print("KERNEL_OK")
</pallas_src>

<mosaic_0001>
module attributes {stable_mosaic.version = 11 : i64} {
  func.func @_fused_lstm_kernel(%arg0: memref<32x8xf32, #tpu.memory_space<vmem>>, %arg1: memref<8x128xf32, #tpu.memory_space<vmem>>, %arg2: memref<32x128xf32, #tpu.memory_space<vmem>>, %arg3: memref<1x128xf32, #tpu.memory_space<vmem>>, %arg4: memref<32x128xf32, #tpu.memory_space<vmem>>, %arg5: memref<32x128xf32, #tpu.memory_space<vmem>>, %arg6: memref<1x128xf32, #tpu.memory_space<vmem>>, %arg7: memref<32x128xf32, #tpu.memory_space<vmem>>, %arg8: memref<32x128xf32, #tpu.memory_space<vmem>>, %arg9: memref<1x128xf32, #tpu.memory_space<vmem>>, %arg10: memref<1x32xf32, #tpu.memory_space<vmem>>, %arg11: memref<1x32xf32, #tpu.memory_space<vmem>>, %arg12: memref<32x5xf32, #tpu.memory_space<vmem>>, %arg13: memref<1x5xf32, #tpu.memory_space<vmem>>, %arg14: memref<4x5xf32, #tpu.memory_space<vmem>>, %arg15: memref<32x128xf32, #tpu.memory_space<vmem>>, %arg16: memref<32x32xf32, #tpu.memory_space<vmem>>) attributes {dimension_semantics = [], scalar_prefetch = 0 : i64, scratch_operands = 2 : i64, tpu.core_type = #tpu.core_type<tc>} {
    %c0 = arith.constant 0 : index
    %c0_0 = arith.constant 0 : index
    %0 = vector.load %arg0[%c0, %c0_0] : memref<32x8xf32, #tpu.memory_space<vmem>>, vector<32x8xf32>
    %c0_1 = arith.constant 0 : index
    %c0_2 = arith.constant 0 : index
    %1 = vector.load %arg1[%c0_1, %c0_2] : memref<8x128xf32, #tpu.memory_space<vmem>>, vector<8x128xf32>
    %cst = arith.constant dense<0.000000e+00> : vector<32x128xf32>
    %2 = tpu.matmul %0, %1, %cst {dimension_numbers = #tpu.dot_dimension_numbers<[1], [0], [0], [1], [0, 0, 1, 1], [], []>} : vector<32x8xf32>, vector<8x128xf32>, vector<32x128xf32> -> vector<32x128xf32>
    %c0_3 = arith.constant 0 : index
    %c0_4 = arith.constant 0 : index
    %3 = vector.load %arg3[%c0_3, %c0_4] : memref<1x128xf32, #tpu.memory_space<vmem>>, vector<1x128xf32>
    %4 = vector.broadcast %3 : vector<1x128xf32> to vector<32x128xf32>
    %5 = arith.addf %2, %4 : vector<32x128xf32>
    %c0_5 = arith.constant 0 : index
    %c0_6 = arith.constant 0 : index
    %6 = vector.load %arg15[%c0_5, %c0_6] : memref<32x128xf32, #tpu.memory_space<vmem>>, vector<32x128xf32>
    tpu.vector_store %arg15[%c0_5, %c0_6], %5 {strides = array<i32>} : memref<32x128xf32, #tpu.memory_space<vmem>>, vector<32x128xf32>,
    %c0_7 = arith.constant 0 : index
    %c0_8 = arith.constant 0 : index
    %7 = vector.load %arg2[%c0_7, %c0_8] : memref<32x128xf32, #tpu.memory_space<vmem>>, vector<32x128xf32>
    %cst_9 = arith.constant 0.000000e+00 : f32
    %8 = vector.broadcast %cst_9 : f32 to vector<4x32xf32>
    %cst_10 = arith.constant 0.000000e+00 : f32
    %9 = vector.broadcast %cst_10 : f32 to vector<4x32xf32>
    %c0_11 = arith.constant 0 : index
    %c0_12 = arith.constant 0 : index
    %10 = vector.load %arg15[%c0_11, %c0_12] : memref<32x128xf32, #tpu.memory_space<vmem>>, vector<4x128xf32>
    %cst_13 = arith.constant dense<0.000000e+00> : vector<4x128xf32>
    %11 = tpu.matmul %8, %7, %cst_13 {dimension_numbers = #tpu.dot_dimension_numbers<[1], [0], [0], [1], [0, 0, 1, 1], [], []>} : vector<4x32xf32>, vector<32x128xf32>, vector<4x128xf32> -> vector<4x128xf32>
    %12 = arith.addf %10, %11 : vector<4x128xf32>
    %13 = arith.negf %12 : vector<4x128xf32>
    %14 = math.exp %13 : vector<4x128xf32>
    %cst_14 = arith.constant 1.000000e+00 : f32
    %15 = vector.broadcast %cst_14 : f32 to vector<4x128xf32>
    %16 = arith.addf %15, %14 : vector<4x128xf32>
    %17 = arith.divf %15, %16 : vector<4x128xf32>
    %18 = math.tanh %12 : vector<4x128xf32>
    %19 = vector.extract_strided_slice %17 {offsets = [0, 0], sizes = [4, 32], strides = [1, 1]} : vector<4x128xf32> to vector<4x32xf32>
    %20 = vector.extract_strided_slice %17 {offsets = [0, 32], sizes = [4, 32], strides = [1, 1]} : vector<4x128xf32> to vector<4x32xf32>
    %21 = vector.extract_strided_slice %17 {offsets = [0, 96], sizes = [4, 32], strides = [1, 1]} : vector<4x128xf32> to vector<4x32xf32>
    %22 = vector.extract_strided_slice %18 {offsets = [0, 64], sizes = [4, 32], strides = [1, 1]} : vector<4x128xf32> to vector<4x32xf32>
    %23 = arith.mulf %20, %9 : vector<4x32xf32>
    %24 = arith.mulf %19, %22 : vector<4x32xf32>
    %25 = arith.addf %23, %24 : vector<4x32xf32>
    %26 = math.tanh %25 : vector<4x32xf32>
    %27 = arith.mulf %21, %26 : vector<4x32xf32>
    %c0_15 = arith.constant 0 : index
    %c0_16 = arith.constant 0 : index
    %28 = vector.load %arg16[%c0_15, %c0_16] : memref<32x32xf32, #tpu.memory_space<vmem>>, vector<4x32xf32>
    tpu.vector_store %arg16[%c0_15, %c0_16], %27 {strides = array<i32>} : memref<32x32xf32, #tpu.memory_space<vmem>>, vector<4x32xf32>,
    %c4 = arith.constant 4 : index
    %c0_17 = arith.constant 0 : index
    %29 = vector.load %arg15[%c4, %c0_17] : memref<32x128xf32, #tpu.memory_space<vmem>>, vector<4x128xf32>
    %cst_18 = arith.constant dense<0.000000e+00> : vector<4x128xf32>
    %30 = tpu.matmul %27, %7, %cst_18 {dimension_numbers = #tpu.dot_dimension_numbers<[1], [0], [0], [1], [0, 0, 1, 1], [], []>} : vector<4x32xf32>, vector<32x128xf32>, vector<4x128xf32> -> vector<4x128xf32>
    %31 = arith.addf %29, %30 : vector<4x128xf32>
    %32 = arith.negf %31 : vector<4x128xf32>
    %33 = math.exp %32 : vector<4x128xf32>
    %cst_19 = arith.constant 1.000000e+00 : f32
    %34 = vector.broadcast %cst_19 : f32 to vector<4x128xf32>
    %35 = arith.addf %34, %33 : vector<4x128xf32>
    %36 = arith.divf %34, %35 : vector<4x128xf32>
    %37 = math.tanh %31 : vector<4x128xf32>
    %38 = vector.extract_strided_slice %36 {offsets = [0, 0], sizes = [4, 32], strides = [1, 1]} : vector<4x128xf32> to vector<4x32xf32>
    %39 = vector.extract_strided_slice %36 {offsets = [0, 32], sizes = [4, 32], strides = [1, 1]} : vector<4x128xf32> to vector<4x32xf32>
    %40 = vector.extract_strided_slice %36 {offsets = [0, 96], sizes = [4, 32], strides = [1, 1]} : vector<4x128xf32> to vector<4x32xf32>
    %41 = vector.extract_strided_slice %37 {offsets = [0, 64], sizes = [4, 32], strides = [1, 1]} : vector<4x128xf32> to vector<4x32xf32>
    %42 = arith.mulf %39, %25 : vector<4x32xf32>
    %43 = arith.mulf %38, %41 : vector<4x32xf32>
    %44 = arith.addf %42, %43 : vector<4x32xf32>
    %45 = math.tanh %44 : vector<4x32xf32>
    %46 = arith.mulf %40, %45 : vector<4x32xf32>
    %c4_20 = arith.constant 4 : index
    %c0_21 = arith.constant 0 : index
    %47 = vector.load %arg16[%c4_20, %c0_21] : memref<32x32xf32, #tpu.memory_space<vmem>>, vector<4x32xf32>
    tpu.vector_store %arg16[%c4_20, %c0_21], %46 {strides = array<i32>} : memref<32x32xf32, #tpu.memory_space<vmem>>, vector<4x32xf32>,
    %c8 = arith.constant 8 : index
    %c0_22 = arith.constant 0 : index
    %48 = vector.load %arg15[%c8, %c0_22] : memref<32x128xf32, #tpu.memory_space<vmem>>, vector<4x128xf32>
    %cst_23 = arith.constant dense<0.000000e+00> : vector<4x128xf32>
    %49 = tpu.matmul %46, %7, %cst_23 {dimension_numbers = #tpu.dot_dimension_numbers<[1], [0], [0], [1], [0, 0, 1, 1], [], []>} : vector<4x32xf32>, vector<32x128xf32>, vector<4x128xf32> -> vector<4x128xf32>
    %50 = arith.addf %48, %49 : vector<4x128xf32>
    %51 = arith.negf %50 : vector<4x128xf32>
    %52 = math.exp %51 : vector<4x128xf32>
    %cst_24 = arith.constant 1.000000e+00 : f32
    %53 = vector.broadcast %cst_24 : f32 to vector<4x128xf32>
    %54 = arith.addf %53, %52 : vector<4x128xf32>
    %55 = arith.divf %53, %54 : vector<4x128xf32>
    %56 = math.tanh %50 : vector<4x128xf32>
    %57 = vector.extract_strided_slice %55 {offsets = [0, 0], sizes = [4, 32], strides = [1, 1]} : vector<4x128xf32> to vector<4x32xf32>
    %58 = vector.extract_strided_slice %55 {offsets = [0, 32], sizes = [4, 32], strides = [1, 1]} : vector<4x128xf32> to vector<4x32xf32>
    %59 = vector.extract_strided_slice %55 {offsets = [0, 96], sizes = [4, 32], strides = [1, 1]} : vector<4x128xf32> to vector<4x32xf32>
    %60 = vector.extract_strided_slice %56 {offsets = [0, 64], sizes = [4, 32], strides = [1, 1]} : vector<4x128xf32> to vector<4x32xf32>
    %61 = arith.mulf %58, %44 : vector<4x32xf32>
    %62 = arith.mulf %57, %60 : vector<4x32xf32>
    %63 = arith.addf %61, %62 : vector<4x32xf32>
    %64 = math.tanh %63 : vector<4x32xf32>
    %65 = arith.mulf %59, %64 : vector<4x32xf32>
    %c8_25 = arith.constant 8 : index
    %c0_26 = arith.constant 0 : index
    %66 = vector.load %arg16[%c8_25, %c0_26] : memref<32x32xf32, #tpu.memory_space<vmem>>, vector<4x32xf32>
    tpu.vector_store %arg16[%c8_25, %c0_26], %65 {strides = array<i32>} : memref<32x32xf32, #tpu.memory_space<vmem>>, vector<4x32xf32>,
    %c12 = arith.constant 12 : index
    %c0_27 = arith.constant 0 : index
    %67 = vector.load %arg15[%c12, %c0_27] : memref<32x128xf32, #tpu.memory_space<vmem>>, vector<4x128xf32>
    %cst_28 = arith.constant dense<0.000000e+00> : vector<4x128xf32>
    %68 = tpu.matmul %65, %7, %cst_28 {dimension_numbers = #tpu.dot_dimension_numbers<[1], [0], [0], [1], [0, 0, 1, 1], [], []>} : vector<4x32xf32>, vector<32x128xf32>, vector<4x128xf32> -> vector<4x128xf32>
    %69 = arith.addf %67, %68 : vector<4x128xf32>
    %70 = arith.negf %69 : vector<4x128xf32>
    %71 = math.exp %70 : vector<4x128xf32>
    %cst_29 = arith.constant 1.000000e+00 : f32
    %72 = vector.broadcast %cst_29 : f32 to vector<4x128xf32>
    %73 = arith.addf %72, %71 : vector<4x128xf32>
    %74 = arith.divf %72, %73 : vector<4x128xf32>
    %75 = math.tanh %69 : vector<4x128xf32>
    %76 = vector.extract_strided_slice %74 {offsets = [0, 0], sizes = [4, 32], strides = [1, 1]} : vector<4x128xf32> to vector<4x32xf32>
    %77 = vector.extract_strided_slice %74 {offsets = [0, 32], sizes = [4, 32], strides = [1, 1]} : vector<4x128xf32> to vector<4x32xf32>
    %78 = vector.extract_strided_slice %74 {offsets = [0, 96], sizes = [4, 32], strides = [1, 1]} : vector<4x128xf32> to vector<4x32xf32>
    %79 = vector.extract_strided_slice %75 {offsets = [0, 64], sizes = [4, 32], strides = [1, 1]} : vector<4x128xf32> to vector<4x32xf32>
    %80 = arith.mulf %77, %63 : vector<4x32xf32>
    %81 = arith.mulf %76, %79 : vector<4x32xf32>
    %82 = arith.addf %80, %81 : vector<4x32xf32>
    %83 = math.tanh %82 : vector<4x32xf32>
    %84 = arith.mulf %78, %83 : vector<4x32xf32>
    %c12_30 = arith.constant 12 : index
    %c0_31 = arith.constant 0 : index
    %85 = vector.load %arg16[%c12_30, %c0_31] : memref<32x32xf32, #tpu.memory_space<vmem>>, vector<4x32xf32>
    tpu.vector_store %arg16[%c12_30, %c0_31], %84 {strides = array<i32>} : memref<32x32xf32, #tpu.memory_space<vmem>>, vector<4x32xf32>,
    %c16 = arith.constant 16 : index
    %c0_32 = arith.constant 0 : index
    %86 = vector.load %arg15[%c16, %c0_32] : memref<32x128xf32, #tpu.memory_space<vmem>>, vector<4x128xf32>
    %cst_33 = arith.constant dense<0.000000e+00> : vector<4x128xf32>
    %87 = tpu.matmul %84, %7, %cst_33 {dimension_numbers = #tpu.dot_dimension_numbers<[1], [0], [0], [1], [0, 0, 1, 1], [], []>} : vector<4x32xf32>, vector<32x128xf32>, vector<4x128xf32> -> vector<4x128xf32>
    %88 = arith.addf %86, %87 : vector<4x128xf32>
    %89 = arith.negf %88 : vector<4x128xf32>
    %90 = math.exp %89 : vector<4x128xf32>
    %cst_34 = arith.constant 1.000000e+00 : f32
    %91 = vector.broadcast %cst_34 : f32 to vector<4x128xf32>
    %92 = arith.addf %91, %90 : vector<4x128xf32>
    %93 = arith.divf %91, %92 : vector<4x128xf32>
    %94 = math.tanh %88 : vector<4x128xf32>
    %95 = vector.extract_strided_slice %93 {offsets = [0, 0], sizes = [4, 32], strides = [1, 1]} : vector<4x128xf32> to vector<4x32xf32>
    %96 = vector.extract_strided_slice %93 {offsets = [0, 32], sizes = [4, 32], strides = [1, 1]} : vector<4x128xf32> to vector<4x32xf32>
    %97 = vector.extract_strided_slice %93 {offsets = [0, 96], sizes = [4, 32], strides = [1, 1]} : vector<4x128xf32> to vector<4x32xf32>
    %98 = vector.extract_strided_slice %94 {offsets = [0, 64], sizes = [4, 32], strides = [1, 1]} : vector<4x128xf32> to vector<4x32xf32>
    %99 = arith.mulf %96, %82 : vector<4x32xf32>
    %100 = arith.mulf %95, %98 : vector<4x32xf32>
    %101 = arith.addf %99, %100 : vector<4x32xf32>
    %102 = math.tanh %101 : vector<4x32xf32>
    %103 = arith.mulf %97, %102 : vector<4x32xf32>
    %c16_35 = arith.constant 16 : index
    %c0_36 = arith.constant 0 : index
    %104 = vector.load %arg16[%c16_35, %c0_36] : memref<32x32xf32, #tpu.memory_space<vmem>>, vector<4x32xf32>
    tpu.vector_store %arg16[%c16_35, %c0_36], %103 {strides = array<i32>} : memref<32x32xf32, #tpu.memory_space<vmem>>, vector<4x32xf32>,
    %c20 = arith.constant 20 : index
    %c0_37 = arith.constant 0 : index
    %105 = vector.load %arg15[%c20, %c0_37] : memref<32x128xf32, #tpu.memory_space<vmem>>, vector<4x128xf32>
    %cst_38 = arith.constant dense<0.000000e+00> : vector<4x128xf32>
    %106 = tpu.matmul %103, %7, %cst_38 {dimension_numbers = #tpu.dot_dimension_numbers<[1], [0], [0], [1], [0, 0, 1, 1], [], []>} : vector<4x32xf32>, vector<32x128xf32>, vector<4x128xf32> -> vector<4x128xf32>
    %107 = arith.addf %105, %106 : vector<4x128xf32>
    %108 = arith.negf %107 : vector<4x128xf32>
    %109 = math.exp %108 : vector<4x128xf32>
    %cst_39 = arith.constant 1.000000e+00 : f32
    %110 = vector.broadcast %cst_39 : f32 to vector<4x128xf32>
    %111 = arith.addf %110, %109 : vector<4x128xf32>
    %112 = arith.divf %110, %111 : vector<4x128xf32>
    %113 = math.tanh %107 : vector<4x128xf32>
    %114 = vector.extract_strided_slice %112 {offsets = [0, 0], sizes = [4, 32], strides = [1, 1]} : vector<4x128xf32> to vector<4x32xf32>
    %115 = vector.extract_strided_slice %112 {offsets = [0, 32], sizes = [4, 32], strides = [1, 1]} : vector<4x128xf32> to vector<4x32xf32>
    %116 = vector.extract_strided_slice %112 {offsets = [0, 96], sizes = [4, 32], strides = [1, 1]} : vector<4x128xf32> to vector<4x32xf32>
    %117 = vector.extract_strided_slice %113 {offsets = [0, 64], sizes = [4, 32], strides = [1, 1]} : vector<4x128xf32> to vector<4x32xf32>
    %118 = arith.mulf %115, %101 : vector<4x32xf32>
    %119 = arith.mulf %114, %117 : vector<4x32xf32>
    %120 = arith.addf %118, %119 : vector<4x32xf32>
    %121 = math.tanh %120 : vector<4x32xf32>
    %122 = arith.mulf %116, %121 : vector<4x32xf32>
    %c20_40 = arith.constant 20 : index
    %c0_41 = arith.constant 0 : index
    %123 = vector.load %arg16[%c20_40, %c0_41] : memref<32x32xf32, #tpu.memory_space<vmem>>, vector<4x32xf32>
    tpu.vector_store %arg16[%c20_40, %c0_41], %122 {strides = array<i32>} : memref<32x32xf32, #tpu.memory_space<vmem>>, vector<4x32xf32>,
    %c24 = arith.constant 24 : index
    %c0_42 = arith.constant 0 : index
    %124 = vector.load %arg15[%c24, %c0_42] : memref<32x128xf32, #tpu.memory_space<vmem>>, vector<4x128xf32>
    %cst_43 = arith.constant dense<0.000000e+00> : vector<4x128xf32>
    %125 = tpu.matmul %122, %7, %cst_43 {dimension_numbers = #tpu.dot_dimension_numbers<[1], [0], [0], [1], [0, 0, 1, 1], [], []>} : vector<4x32xf32>, vector<32x128xf32>, vector<4x128xf32> -> vector<4x128xf32>
    %126 = arith.addf %124, %125 : vector<4x128xf32>
    %127 = arith.negf %126 : vector<4x128xf32>
    %128 = math.exp %127 : vector<4x128xf32>
    %cst_44 = arith.constant 1.000000e+00 : f32
    %129 = vector.broadcast %cst_44 : f32 to vector<4x128xf32>
    %130 = arith.addf %129, %128 : vector<4x128xf32>
    %131 = arith.divf %129, %130 : vector<4x128xf32>
    %132 = math.tanh %126 : vector<4x128xf32>
    %133 = vector.extract_strided_slice %131 {offsets = [0, 0], sizes = [4, 32], strides = [1, 1]} : vector<4x128xf32> to vector<4x32xf32>
    %134 = vector.extract_strided_slice %131 {offsets = [0, 32], sizes = [4, 32], strides = [1, 1]} : vector<4x128xf32> to vector<4x32xf32>
    %135 = vector.extract_strided_slice %131 {offsets = [0, 96], sizes = [4, 32], strides = [1, 1]} : vector<4x128xf32> to vector<4x32xf32>
    %136 = vector.extract_strided_slice %132 {offsets = [0, 64], sizes = [4, 32], strides = [1, 1]} : vector<4x128xf32> to vector<4x32xf32>
    %137 = arith.mulf %134, %120 : vector<4x32xf32>
    %138 = arith.mulf %133, %136 : vector<4x32xf32>
    %139 = arith.addf %137, %138 : vector<4x32xf32>
    %140 = math.tanh %139 : vector<4x32xf32>
    %141 = arith.mulf %135, %140 : vector<4x32xf32>
    %c24_45 = arith.constant 24 : index
    %c0_46 = arith.constant 0 : index
    %142 = vector.load %arg16[%c24_45, %c0_46] : memref<32x32xf32, #tpu.memory_space<vmem>>, vector<4x32xf32>
    tpu.vector_store %arg16[%c24_45, %c0_46], %141 {strides = array<i32>} : memref<32x32xf32, #tpu.memory_space<vmem>>, vector<4x32xf32>,
    %c28 = arith.constant 28 : index
    %c0_47 = arith.constant 0 : index
    %143 = vector.load %arg15[%c28, %c0_47] : memref<32x128xf32, #tpu.memory_space<vmem>>, vector<4x128xf32>
    %cst_48 = arith.constant dense<0.000000e+00> : vector<4x128xf32>
    %144 = tpu.matmul %141, %7, %cst_48 {dimension_numbers = #tpu.dot_dimension_numbers<[1], [0], [0], [1], [0, 0, 1, 1], [], []>} : vector<4x32xf32>, vector<32x128xf32>, vector<4x128xf32> -> vector<4x128xf32>
    %145 = arith.addf %143, %144 : vector<4x128xf32>
    %146 = arith.negf %145 : vector<4x128xf32>
    %147 = math.exp %146 : vector<4x128xf32>
    %cst_49 = arith.constant 1.000000e+00 : f32
    %148 = vector.broadcast %cst_49 : f32 to vector<4x128xf32>
    %149 = arith.addf %148, %147 : vector<4x128xf32>
    %150 = arith.divf %148, %149 : vector<4x128xf32>
    %151 = math.tanh %145 : vector<4x128xf32>
    %152 = vector.extract_strided_slice %150 {offsets = [0, 0], sizes = [4, 32], strides = [1, 1]} : vector<4x128xf32> to vector<4x32xf32>
    %153 = vector.extract_strided_slice %150 {offsets = [0, 32], sizes = [4, 32], strides = [1, 1]} : vector<4x128xf32> to vector<4x32xf32>
    %154 = vector.extract_strided_slice %150 {offsets = [0, 96], sizes = [4, 32], strides = [1, 1]} : vector<4x128xf32> to vector<4x32xf32>
    %155 = vector.extract_strided_slice %151 {offsets = [0, 64], sizes = [4, 32], strides = [1, 1]} : vector<4x128xf32> to vector<4x32xf32>
    %156 = arith.mulf %153, %139 : vector<4x32xf32>
    %157 = arith.mulf %152, %155 : vector<4x32xf32>
    %158 = arith.addf %156, %157 : vector<4x32xf32>
    %159 = math.tanh %158 : vector<4x32xf32>
    %160 = arith.mulf %154, %159 : vector<4x32xf32>
    %c28_50 = arith.constant 28 : index
    %c0_51 = arith.constant 0 : index
    %161 = vector.load %arg16[%c28_50, %c0_51] : memref<32x32xf32, #tpu.memory_space<vmem>>, vector<4x32xf32>
    tpu.vector_store %arg16[%c28_50, %c0_51], %160 {strides = array<i32>} : memref<32x32xf32, #tpu.memory_space<vmem>>, vector<4x32xf32>,
    %c0_52 = arith.constant 0 : index
    %c0_53 = arith.constant 0 : index
    %162 = vector.load %arg16[%c0_52, %c0_53] : memref<32x32xf32, #tpu.memory_space<vmem>>, vector<32x32xf32>
    %c0_54 = arith.constant 0 : index
    %c0_55 = arith.constant 0 : index
    %163 = vector.load %arg4[%c0_54, %c0_55] : memref<32x128xf32, #tpu.memory_space<vmem>>, vector<32x128xf32>
    %cst_56 = arith.constant dense<0.000000e+00> : vector<32x128xf32>
    %164 = tpu.matmul %162, %163, %cst_56 {dimension_numbers = #tpu.dot_dimension_numbers<[1], [0], [0], [1], [0, 0, 1, 1], [], []>} : vector<32x32xf32>, vector<32x128xf32>, vector<32x128xf32> -> vector<32x128xf32>
    %c0_57 = arith.constant 0 : index
    %c0_58 = arith.constant 0 : index
    %165 = vector.load %arg6[%c0_57, %c0_58] : memref<1x128xf32, #tpu.memory_space<vmem>>, vector<1x128xf32>
    %166 = vector.broadcast %165 : vector<1x128xf32> to vector<32x128xf32>
    %167 = arith.addf %164, %166 : vector<32x128xf32>
    %c0_59 = arith.constant 0 : index
    %c0_60 = arith.constant 0 : index
    %168 = vector.load %arg15[%c0_59, %c0_60] : memref<32x128xf32, #tpu.memory_space<vmem>>, vector<32x128xf32>
    tpu.vector_store %arg15[%c0_59, %c0_60], %167 {strides = array<i32>} : memref<32x128xf32, #tpu.memory_space<vmem>>, vector<32x128xf32>,
    %c0_61 = arith.constant 0 : index
    %c0_62 = arith.constant 0 : index
    %169 = vector.load %arg5[%c0_61, %c0_62] : memref<32x128xf32, #tpu.memory_space<vmem>>, vector<32x128xf32>
    %cst_63 = arith.constant 0.000000e+00 : f32
    %170 = vector.broadcast %cst_63 : f32 to vector<4x32xf32>
    %cst_64 = arith.constant 0.000000e+00 : f32
    %171 = vector.broadcast %cst_64 : f32 to vector<4x32xf32>
    %c0_65 = arith.constant 0 : index
    %c0_66 = arith.constant 0 : index
    %172 = vector.load %arg15[%c0_65, %c0_66] : memref<32x128xf32, #tpu.memory_space<vmem>>, vector<4x128xf32>
    %cst_67 = arith.constant dense<0.000000e+00> : vector<4x128xf32>
    %173 = tpu.matmul %170, %169, %cst_67 {dimension_numbers = #tpu.dot_dimension_numbers<[1], [0], [0], [1], [0, 0, 1, 1], [], []>} : vector<4x32xf32>, vector<32x128xf32>, vector<4x128xf32> -> vector<4x128xf32>
    %174 = arith.addf %172, %173 : vector<4x128xf32>
    %175 = arith.negf %174 : vector<4x128xf32>
    %176 = math.exp %175 : vector<4x128xf32>
    %cst_68 = arith.constant 1.000000e+00 : f32
    %177 = vector.broadcast %cst_68 : f32 to vector<4x128xf32>
    %178 = arith.addf %177, %176 : vector<4x128xf32>
    %179 = arith.divf %177, %178 : vector<4x128xf32>
    %180 = math.tanh %174 : vector<4x128xf32>
    %181 = vector.extract_strided_slice %179 {offsets = [0, 0], sizes = [4, 32], strides = [1, 1]} : vector<4x128xf32> to vector<4x32xf32>
    %182 = vector.extract_strided_slice %179 {offsets = [0, 32], sizes = [4, 32], strides = [1, 1]} : vector<4x128xf32> to vector<4x32xf32>
    %183 = vector.extract_strided_slice %179 {offsets = [0, 96], sizes = [4, 32], strides = [1, 1]} : vector<4x128xf32> to vector<4x32xf32>
    %184 = vector.extract_strided_slice %180 {offsets = [0, 64], sizes = [4, 32], strides = [1, 1]} : vector<4x128xf32> to vector<4x32xf32>
    %185 = arith.mulf %182, %171 : vector<4x32xf32>
    %186 = arith.mulf %181, %184 : vector<4x32xf32>
    %187 = arith.addf %185, %186 : vector<4x32xf32>
    %188 = math.tanh %187 : vector<4x32xf32>
    %189 = arith.mulf %183, %188 : vector<4x32xf32>
    %c0_69 = arith.constant 0 : index
    %c0_70 = arith.constant 0 : index
    %190 = vector.load %arg16[%c0_69, %c0_70] : memref<32x32xf32, #tpu.memory_space<vmem>>, vector<4x32xf32>
    tpu.vector_store %arg16[%c0_69, %c0_70], %189 {strides = array<i32>} : memref<32x32xf32, #tpu.memory_space<vmem>>, vector<4x32xf32>,
    %c4_71 = arith.constant 4 : index
    %c0_72 = arith.constant 0 : index
    %191 = vector.load %arg15[%c4_71, %c0_72] : memref<32x128xf32, #tpu.memory_space<vmem>>, vector<4x128xf32>
    %cst_73 = arith.constant dense<0.000000e+00> : vector<4x128xf32>
    %192 = tpu.matmul %189, %169, %cst_73 {dimension_numbers = #tpu.dot_dimension_numbers<[1], [0], [0], [1], [0, 0, 1, 1], [], []>} : vector<4x32xf32>, vector<32x128xf32>, vector<4x128xf32> -> vector<4x128xf32>
    %193 = arith.addf %191, %192 : vector<4x128xf32>
    %194 = arith.negf %193 : vector<4x128xf32>
    %195 = math.exp %194 : vector<4x128xf32>
    %cst_74 = arith.constant 1.000000e+00 : f32
    %196 = vector.broadcast %cst_74 : f32 to vector<4x128xf32>
    %197 = arith.addf %196, %195 : vector<4x128xf32>
    %198 = arith.divf %196, %197 : vector<4x128xf32>
    %199 = math.tanh %193 : vector<4x128xf32>
    %200 = vector.extract_strided_slice %198 {offsets = [0, 0], sizes = [4, 32], strides = [1, 1]} : vector<4x128xf32> to vector<4x32xf32>
    %201 = vector.extract_strided_slice %198 {offsets = [0, 32], sizes = [4, 32], strides = [1, 1]} : vector<4x128xf32> to vector<4x32xf32>
    %202 = vector.extract_strided_slice %198 {offsets = [0, 96], sizes = [4, 32], strides = [1, 1]} : vector<4x128xf32> to vector<4x32xf32>
    %203 = vector.extract_strided_slice %199 {offsets = [0, 64], sizes = [4, 32], strides = [1, 1]} : vector<4x128xf32> to vector<4x32xf32>
    %204 = arith.mulf %201, %187 : vector<4x32xf32>
    %205 = arith.mulf %200, %203 : vector<4x32xf32>
    %206 = arith.addf %204, %205 : vector<4x32xf32>
    %207 = math.tanh %206 : vector<4x32xf32>
    %208 = arith.mulf %202, %207 : vector<4x32xf32>
    %c4_75 = arith.constant 4 : index
    %c0_76 = arith.constant 0 : index
    %209 = vector.load %arg16[%c4_75, %c0_76] : memref<32x32xf32, #tpu.memory_space<vmem>>, vector<4x32xf32>
    tpu.vector_store %arg16[%c4_75, %c0_76], %208 {strides = array<i32>} : memref<32x32xf32, #tpu.memory_space<vmem>>, vector<4x32xf32>,
    %c8_77 = arith.constant 8 : index
    %c0_78 = arith.constant 0 : index
    %210 = vector.load %arg15[%c8_77, %c0_78] : memref<32x128xf32, #tpu.memory_space<vmem>>, vector<4x128xf32>
    %cst_79 = arith.constant dense<0.000000e+00> : vector<4x128xf32>
    %211 = tpu.matmul %208, %169, %cst_79 {dimension_numbers = #tpu.dot_dimension_numbers<[1], [0], [0], [1], [0, 0, 1, 1], [], []>} : vector<4x32xf32>, vector<32x128xf32>, vector<4x128xf32> -> vector<4x128xf32>
    %212 = arith.addf %210, %211 : vector<4x128xf32>
    %213 = arith.negf %212 : vector<4x128xf32>
    %214 = math.exp %213 : vector<4x128xf32>
    %cst_80 = arith.constant 1.000000e+00 : f32
    %215 = vector.broadcast %cst_80 : f32 to vector<4x128xf32>
    %216 = arith.addf %215, %214 : vector<4x128xf32>
    %217 = arith.divf %215, %216 : vector<4x128xf32>
    %218 = math.tanh %212 : vector<4x128xf32>
    %219 = vector.extract_strided_slice %217 {offsets = [0, 0], sizes = [4, 32], strides = [1, 1]} : vector<4x128xf32> to vector<4x32xf32>
    %220 = vector.extract_strided_slice %217 {offsets = [0, 32], sizes = [4, 32], strides = [1, 1]} : vector<4x128xf32> to vector<4x32xf32>
    %221 = vector.extract_strided_slice %217 {offsets = [0, 96], sizes = [4, 32], strides = [1, 1]} : vector<4x128xf32> to vector<4x32xf32>
    %222 = vector.extract_strided_slice %218 {offsets = [0, 64], sizes = [4, 32], strides = [1, 1]} : vector<4x128xf32> to vector<4x32xf32>
    %223 = arith.mulf %220, %206 : vector<4x32xf32>
    %224 = arith.mulf %219, %222 : vector<4x32xf32>
    %225 = arith.addf %223, %224 : vector<4x32xf32>
    %226 = math.tanh %225 : vector<4x32xf32>
    %227 = arith.mulf %221, %226 : vector<4x32xf32>
    %c8_81 = arith.constant 8 : index
    %c0_82 = arith.constant 0 : index
    %228 = vector.load %arg16[%c8_81, %c0_82] : memref<32x32xf32, #tpu.memory_space<vmem>>, vector<4x32xf32>
    tpu.vector_store %arg16[%c8_81, %c0_82], %227 {strides = array<i32>} : memref<32x32xf32, #tpu.memory_space<vmem>>, vector<4x32xf32>,
    %c12_83 = arith.constant 12 : index
    %c0_84 = arith.constant 0 : index
    %229 = vector.load %arg15[%c12_83, %c0_84] : memref<32x128xf32, #tpu.memory_space<vmem>>, vector<4x128xf32>
    %cst_85 = arith.constant dense<0.000000e+00> : vector<4x128xf32>
    %230 = tpu.matmul %227, %169, %cst_85 {dimension_numbers = #tpu.dot_dimension_numbers<[1], [0], [0], [1], [0, 0, 1, 1], [], []>} : vector<4x32xf32>, vector<32x128xf32>, vector<4x128xf32> -> vector<4x128xf32>
    %231 = arith.addf %229, %230 : vector<4x128xf32>
    %232 = arith.negf %231 : vector<4x128xf32>
    %233 = math.exp %232 : vector<4x128xf32>
    %cst_86 = arith.constant 1.000000e+00 : f32
    %234 = vector.broadcast %cst_86 : f32 to vector<4x128xf32>
    %235 = arith.addf %234, %233 : vector<4x128xf32>
    %236 = arith.divf %234, %235 : vector<4x128xf32>
    %237 = math.tanh %231 : vector<4x128xf32>
    %238 = vector.extract_strided_slice %236 {offsets = [0, 0], sizes = [4, 32], strides = [1, 1]} : vector<4x128xf32> to vector<4x32xf32>
    %239 = vector.extract_strided_slice %236 {offsets = [0, 32], sizes = [4, 32], strides = [1, 1]} : vector<4x128xf32> to vector<4x32xf32>
    %240 = vector.extract_strided_slice %236 {offsets = [0, 96], sizes = [4, 32], strides = [1, 1]} : vector<4x128xf32> to vector<4x32xf32>
    %241 = vector.extract_strided_slice %237 {offsets = [0, 64], sizes = [4, 32], strides = [1, 1]} : vector<4x128xf32> to vector<4x32xf32>
    %242 = arith.mulf %239, %225 : vector<4x32xf32>
    %243 = arith.mulf %238, %241 : vector<4x32xf32>
    %244 = arith.addf %242, %243 : vector<4x32xf32>
    %245 = math.tanh %244 : vector<4x32xf32>
    %246 = arith.mulf %240, %245 : vector<4x32xf32>
    %c12_87 = arith.constant 12 : index
    %c0_88 = arith.constant 0 : index
    %247 = vector.load %arg16[%c12_87, %c0_88] : memref<32x32xf32, #tpu.memory_space<vmem>>, vector<4x32xf32>
    tpu.vector_store %arg16[%c12_87, %c0_88], %246 {strides = array<i32>} : memref<32x32xf32, #tpu.memory_space<vmem>>, vector<4x32xf32>,
    %c16_89 = arith.constant 16 : index
    %c0_90 = arith.constant 0 : index
    %248 = vector.load %arg15[%c16_89, %c0_90] : memref<32x128xf32, #tpu.memory_space<vmem>>, vector<4x128xf32>
    %cst_91 = arith.constant dense<0.000000e+00> : vector<4x128xf32>
    %249 = tpu.matmul %246, %169, %cst_91 {dimension_numbers = #tpu.dot_dimension_numbers<[1], [0], [0], [1], [0, 0, 1, 1], [], []>} : vector<4x32xf32>, vector<32x128xf32>, vector<4x128xf32> -> vector<4x128xf32>
    %250 = arith.addf %248, %249 : vector<4x128xf32>
    %251 = arith.negf %250 : vector<4x128xf32>
    %252 = math.exp %251 : vector<4x128xf32>
    %cst_92 = arith.constant 1.000000e+00 : f32
    %253 = vector.broadcast %cst_92 : f32 to vector<4x128xf32>
    %254 = arith.addf %253, %252 : vector<4x128xf32>
    %255 = arith.divf %253, %254 : vector<4x128xf32>
    %256 = math.tanh %250 : vector<4x128xf32>
    %257 = vector.extract_strided_slice %255 {offsets = [0, 0], sizes = [4, 32], strides = [1, 1]} : vector<4x128xf32> to vector<4x32xf32>
    %258 = vector.extract_strided_slice %255 {offsets = [0, 32], sizes = [4, 32], strides = [1, 1]} : vector<4x128xf32> to vector<4x32xf32>
    %259 = vector.extract_strided_slice %255 {offsets = [0, 96], sizes = [4, 32], strides = [1, 1]} : vector<4x128xf32> to vector<4x32xf32>
    %260 = vector.extract_strided_slice %256 {offsets = [0, 64], sizes = [4, 32], strides = [1, 1]} : vector<4x128xf32> to vector<4x32xf32>
    %261 = arith.mulf %258, %244 : vector<4x32xf32>
    %262 = arith.mulf %257, %260 : vector<4x32xf32>
    %263 = arith.addf %261, %262 : vector<4x32xf32>
    %264 = math.tanh %263 : vector<4x32xf32>
    %265 = arith.mulf %259, %264 : vector<4x32xf32>
    %c16_93 = arith.constant 16 : index
    %c0_94 = arith.constant 0 : index
    %266 = vector.load %arg16[%c16_93, %c0_94] : memref<32x32xf32, #tpu.memory_space<vmem>>, vector<4x32xf32>
    tpu.vector_store %arg16[%c16_93, %c0_94], %265 {strides = array<i32>} : memref<32x32xf32, #tpu.memory_space<vmem>>, vector<4x32xf32>,
    %c20_95 = arith.constant 20 : index
    %c0_96 = arith.constant 0 : index
    %267 = vector.load %arg15[%c20_95, %c0_96] : memref<32x128xf32, #tpu.memory_space<vmem>>, vector<4x128xf32>
    %cst_97 = arith.constant dense<0.000000e+00> : vector<4x128xf32>
    %268 = tpu.matmul %265, %169, %cst_97 {dimension_numbers = #tpu.dot_dimension_numbers<[1], [0], [0], [1], [0, 0, 1, 1], [], []>} : vector<4x32xf32>, vector<32x128xf32>, vector<4x128xf32> -> vector<4x128xf32>
    %269 = arith.addf %267, %268 : vector<4x128xf32>
    %270 = arith.negf %269 : vector<4x128xf32>
    %271 = math.exp %270 : vector<4x128xf32>
    %cst_98 = arith.constant 1.000000e+00 : f32
    %272 = vector.broadcast %cst_98 : f32 to vector<4x128xf32>
    %273 = arith.addf %272, %271 : vector<4x128xf32>
    %274 = arith.divf %272, %273 : vector<4x128xf32>
    %275 = math.tanh %269 : vector<4x128xf32>
    %276 = vector.extract_strided_slice %274 {offsets = [0, 0], sizes = [4, 32], strides = [1, 1]} : vector<4x128xf32> to vector<4x32xf32>
    %277 = vector.extract_strided_slice %274 {offsets = [0, 32], sizes = [4, 32], strides = [1, 1]} : vector<4x128xf32> to vector<4x32xf32>
    %278 = vector.extract_strided_slice %274 {offsets = [0, 96], sizes = [4, 32], strides = [1, 1]} : vector<4x128xf32> to vector<4x32xf32>
    %279 = vector.extract_strided_slice %275 {offsets = [0, 64], sizes = [4, 32], strides = [1, 1]} : vector<4x128xf32> to vector<4x32xf32>
    %280 = arith.mulf %277, %263 : vector<4x32xf32>
    %281 = arith.mulf %276, %279 : vector<4x32xf32>
    %282 = arith.addf %280, %281 : vector<4x32xf32>
    %283 = math.tanh %282 : vector<4x32xf32>
    %284 = arith.mulf %278, %283 : vector<4x32xf32>
    %c20_99 = arith.constant 20 : index
    %c0_100 = arith.constant 0 : index
    %285 = vector.load %arg16[%c20_99, %c0_100] : memref<32x32xf32, #tpu.memory_space<vmem>>, vector<4x32xf32>
    tpu.vector_store %arg16[%c20_99, %c0_100], %284 {strides = array<i32>} : memref<32x32xf32, #tpu.memory_space<vmem>>, vector<4x32xf32>,
    %c24_101 = arith.constant 24 : index
    %c0_102 = arith.constant 0 : index
    %286 = vector.load %arg15[%c24_101, %c0_102] : memref<32x128xf32, #tpu.memory_space<vmem>>, vector<4x128xf32>
    %cst_103 = arith.constant dense<0.000000e+00> : vector<4x128xf32>
    %287 = tpu.matmul %284, %169, %cst_103 {dimension_numbers = #tpu.dot_dimension_numbers<[1], [0], [0], [1], [0, 0, 1, 1], [], []>} : vector<4x32xf32>, vector<32x128xf32>, vector<4x128xf32> -> vector<4x128xf32>
    %288 = arith.addf %286, %287 : vector<4x128xf32>
    %289 = arith.negf %288 : vector<4x128xf32>
    %290 = math.exp %289 : vector<4x128xf32>
    %cst_104 = arith.constant 1.000000e+00 : f32
    %291 = vector.broadcast %cst_104 : f32 to vector<4x128xf32>
    %292 = arith.addf %291, %290 : vector<4x128xf32>
    %293 = arith.divf %291, %292 : vector<4x128xf32>
    %294 = math.tanh %288 : vector<4x128xf32>
    %295 = vector.extract_strided_slice %293 {offsets = [0, 0], sizes = [4, 32], strides = [1, 1]} : vector<4x128xf32> to vector<4x32xf32>
    %296 = vector.extract_strided_slice %293 {offsets = [0, 32], sizes = [4, 32], strides = [1, 1]} : vector<4x128xf32> to vector<4x32xf32>
    %297 = vector.extract_strided_slice %293 {offsets = [0, 96], sizes = [4, 32], strides = [1, 1]} : vector<4x128xf32> to vector<4x32xf32>
    %298 = vector.extract_strided_slice %294 {offsets = [0, 64], sizes = [4, 32], strides = [1, 1]} : vector<4x128xf32> to vector<4x32xf32>
    %299 = arith.mulf %296, %282 : vector<4x32xf32>
    %300 = arith.mulf %295, %298 : vector<4x32xf32>
    %301 = arith.addf %299, %300 : vector<4x32xf32>
    %302 = math.tanh %301 : vector<4x32xf32>
    %303 = arith.mulf %297, %302 : vector<4x32xf32>
    %c24_105 = arith.constant 24 : index
    %c0_106 = arith.constant 0 : index
    %304 = vector.load %arg16[%c24_105, %c0_106] : memref<32x32xf32, #tpu.memory_space<vmem>>, vector<4x32xf32>
    tpu.vector_store %arg16[%c24_105, %c0_106], %303 {strides = array<i32>} : memref<32x32xf32, #tpu.memory_space<vmem>>, vector<4x32xf32>,
    %c28_107 = arith.constant 28 : index
    %c0_108 = arith.constant 0 : index
    %305 = vector.load %arg15[%c28_107, %c0_108] : memref<32x128xf32, #tpu.memory_space<vmem>>, vector<4x128xf32>
    %cst_109 = arith.constant dense<0.000000e+00> : vector<4x128xf32>
    %306 = tpu.matmul %303, %169, %cst_109 {dimension_numbers = #tpu.dot_dimension_numbers<[1], [0], [0], [1], [0, 0, 1, 1], [], []>} : vector<4x32xf32>, vector<32x128xf32>, vector<4x128xf32> -> vector<4x128xf32>
    %307 = arith.addf %305, %306 : vector<4x128xf32>
    %308 = arith.negf %307 : vector<4x128xf32>
    %309 = math.exp %308 : vector<4x128xf32>
    %cst_110 = arith.constant 1.000000e+00 : f32
    %310 = vector.broadcast %cst_110 : f32 to vector<4x128xf32>
    %311 = arith.addf %310, %309 : vector<4x128xf32>
    %312 = arith.divf %310, %311 : vector<4x128xf32>
    %313 = math.tanh %307 : vector<4x128xf32>
    %314 = vector.extract_strided_slice %312 {offsets = [0, 0], sizes = [4, 32], strides = [1, 1]} : vector<4x128xf32> to vector<4x32xf32>
    %315 = vector.extract_strided_slice %312 {offsets = [0, 32], sizes = [4, 32], strides = [1, 1]} : vector<4x128xf32> to vector<4x32xf32>
    %316 = vector.extract_strided_slice %312 {offsets = [0, 96], sizes = [4, 32], strides = [1, 1]} : vector<4x128xf32> to vector<4x32xf32>
    %317 = vector.extract_strided_slice %313 {offsets = [0, 64], sizes = [4, 32], strides = [1, 1]} : vector<4x128xf32> to vector<4x32xf32>
    %318 = arith.mulf %315, %301 : vector<4x32xf32>
    %319 = arith.mulf %314, %317 : vector<4x32xf32>
    %320 = arith.addf %318, %319 : vector<4x32xf32>
    %321 = math.tanh %320 : vector<4x32xf32>
    %322 = arith.mulf %316, %321 : vector<4x32xf32>
    %c28_111 = arith.constant 28 : index
    %c0_112 = arith.constant 0 : index
    %323 = vector.load %arg16[%c28_111, %c0_112] : memref<32x32xf32, #tpu.memory_space<vmem>>, vector<4x32xf32>
    tpu.vector_store %arg16[%c28_111, %c0_112], %322 {strides = array<i32>} : memref<32x32xf32, #tpu.memory_space<vmem>>, vector<4x32xf32>,
    %c0_113 = arith.constant 0 : index
    %c0_114 = arith.constant 0 : index
    %324 = vector.load %arg16[%c0_113, %c0_114] : memref<32x32xf32, #tpu.memory_space<vmem>>, vector<32x32xf32>
    %c0_115 = arith.constant 0 : index
    %c0_116 = arith.constant 0 : index
    %325 = vector.load %arg7[%c0_115, %c0_116] : memref<32x128xf32, #tpu.memory_space<vmem>>, vector<32x128xf32>
    %cst_117 = arith.constant dense<0.000000e+00> : vector<32x128xf32>
    %326 = tpu.matmul %324, %325, %cst_117 {dimension_numbers = #tpu.dot_dimension_numbers<[1], [0], [0], [1], [0, 0, 1, 1], [], []>} : vector<32x32xf32>, vector<32x128xf32>, vector<32x128xf32> -> vector<32x128xf32>
    %c0_118 = arith.constant 0 : index
    %c0_119 = arith.constant 0 : index
    %327 = vector.load %arg9[%c0_118, %c0_119] : memref<1x128xf32, #tpu.memory_space<vmem>>, vector<1x128xf32>
    %328 = vector.broadcast %327 : vector<1x128xf32> to vector<32x128xf32>
    %329 = arith.addf %326, %328 : vector<32x128xf32>
    %c0_120 = arith.constant 0 : index
    %c0_121 = arith.constant 0 : index
    %330 = vector.load %arg15[%c0_120, %c0_121] : memref<32x128xf32, #tpu.memory_space<vmem>>, vector<32x128xf32>
    tpu.vector_store %arg15[%c0_120, %c0_121], %329 {strides = array<i32>} : memref<32x128xf32, #tpu.memory_space<vmem>>, vector<32x128xf32>,
    %c0_122 = arith.constant 0 : index
    %c0_123 = arith.constant 0 : index
    %331 = vector.load %arg8[%c0_122, %c0_123] : memref<32x128xf32, #tpu.memory_space<vmem>>, vector<32x128xf32>
    %cst_124 = arith.constant 0.000000e+00 : f32
    %332 = vector.broadcast %cst_124 : f32 to vector<4x32xf32>
    %cst_125 = arith.constant 0.000000e+00 : f32
    %333 = vector.broadcast %cst_125 : f32 to vector<4x32xf32>
    %c0_126 = arith.constant 0 : index
    %c0_127 = arith.constant 0 : index
    %334 = vector.load %arg15[%c0_126, %c0_127] : memref<32x128xf32, #tpu.memory_space<vmem>>, vector<4x128xf32>
    %cst_128 = arith.constant dense<0.000000e+00> : vector<4x128xf32>
    %335 = tpu.matmul %332, %331, %cst_128 {dimension_numbers = #tpu.dot_dimension_numbers<[1], [0], [0], [1], [0, 0, 1, 1], [], []>} : vector<4x32xf32>, vector<32x128xf32>, vector<4x128xf32> -> vector<4x128xf32>
    %336 = arith.addf %334, %335 : vector<4x128xf32>
    %337 = arith.negf %336 : vector<4x128xf32>
    %338 = math.exp %337 : vector<4x128xf32>
    %cst_129 = arith.constant 1.000000e+00 : f32
    %339 = vector.broadcast %cst_129 : f32 to vector<4x128xf32>
    %340 = arith.addf %339, %338 : vector<4x128xf32>
    %341 = arith.divf %339, %340 : vector<4x128xf32>
    %342 = math.tanh %336 : vector<4x128xf32>
    %343 = vector.extract_strided_slice %341 {offsets = [0, 0], sizes = [4, 32], strides = [1, 1]} : vector<4x128xf32> to vector<4x32xf32>
    %344 = vector.extract_strided_slice %341 {offsets = [0, 32], sizes = [4, 32], strides = [1, 1]} : vector<4x128xf32> to vector<4x32xf32>
    %345 = vector.extract_strided_slice %341 {offsets = [0, 96], sizes = [4, 32], strides = [1, 1]} : vector<4x128xf32> to vector<4x32xf32>
    %346 = vector.extract_strided_slice %342 {offsets = [0, 64], sizes = [4, 32], strides = [1, 1]} : vector<4x128xf32> to vector<4x32xf32>
    %347 = arith.mulf %344, %333 : vector<4x32xf32>
    %348 = arith.mulf %343, %346 : vector<4x32xf32>
    %349 = arith.addf %347, %348 : vector<4x32xf32>
    %350 = math.tanh %349 : vector<4x32xf32>
    %351 = arith.mulf %345, %350 : vector<4x32xf32>
    %c4_130 = arith.constant 4 : index
    %c0_131 = arith.constant 0 : index
    %352 = vector.load %arg15[%c4_130, %c0_131] : memref<32x128xf32, #tpu.memory_space<vmem>>, vector<4x128xf32>
    %cst_132 = arith.constant dense<0.000000e+00> : vector<4x128xf32>
    %353 = tpu.matmul %351, %331, %cst_132 {dimension_numbers = #tpu.dot_dimension_numbers<[1], [0], [0], [1], [0, 0, 1, 1], [], []>} : vector<4x32xf32>, vector<32x128xf32>, vector<4x128xf32> -> vector<4x128xf32>
    %354 = arith.addf %352, %353 : vector<4x128xf32>
    %355 = arith.negf %354 : vector<4x128xf32>
    %356 = math.exp %355 : vector<4x128xf32>
    %cst_133 = arith.constant 1.000000e+00 : f32
    %357 = vector.broadcast %cst_133 : f32 to vector<4x128xf32>
    %358 = arith.addf %357, %356 : vector<4x128xf32>
    %359 = arith.divf %357, %358 : vector<4x128xf32>
    %360 = math.tanh %354 : vector<4x128xf32>
    %361 = vector.extract_strided_slice %359 {offsets = [0, 0], sizes = [4, 32], strides = [1, 1]} : vector<4x128xf32> to vector<4x32xf32>
    %362 = vector.extract_strided_slice %359 {offsets = [0, 32], sizes = [4, 32], strides = [1, 1]} : vector<4x128xf32> to vector<4x32xf32>
    %363 = vector.extract_strided_slice %359 {offsets = [0, 96], sizes = [4, 32], strides = [1, 1]} : vector<4x128xf32> to vector<4x32xf32>
    %364 = vector.extract_strided_slice %360 {offsets = [0, 64], sizes = [4, 32], strides = [1, 1]} : vector<4x128xf32> to vector<4x32xf32>
    %365 = arith.mulf %362, %349 : vector<4x32xf32>
    %366 = arith.mulf %361, %364 : vector<4x32xf32>
    %367 = arith.addf %365, %366 : vector<4x32xf32>
    %368 = math.tanh %367 : vector<4x32xf32>
    %369 = arith.mulf %363, %368 : vector<4x32xf32>
    %c8_134 = arith.constant 8 : index
    %c0_135 = arith.constant 0 : index
    %370 = vector.load %arg15[%c8_134, %c0_135] : memref<32x128xf32, #tpu.memory_space<vmem>>, vector<4x128xf32>
    %cst_136 = arith.constant dense<0.000000e+00> : vector<4x128xf32>
    %371 = tpu.matmul %369, %331, %cst_136 {dimension_numbers = #tpu.dot_dimension_numbers<[1], [0], [0], [1], [0, 0, 1, 1], [], []>} : vector<4x32xf32>, vector<32x128xf32>, vector<4x128xf32> -> vector<4x128xf32>
    %372 = arith.addf %370, %371 : vector<4x128xf32>
    %373 = arith.negf %372 : vector<4x128xf32>
    %374 = math.exp %373 : vector<4x128xf32>
    %cst_137 = arith.constant 1.000000e+00 : f32
    %375 = vector.broadcast %cst_137 : f32 to vector<4x128xf32>
    %376 = arith.addf %375, %374 : vector<4x128xf32>
    %377 = arith.divf %375, %376 : vector<4x128xf32>
    %378 = math.tanh %372 : vector<4x128xf32>
    %379 = vector.extract_strided_slice %377 {offsets = [0, 0], sizes = [4, 32], strides = [1, 1]} : vector<4x128xf32> to vector<4x32xf32>
    %380 = vector.extract_strided_slice %377 {offsets = [0, 32], sizes = [4, 32], strides = [1, 1]} : vector<4x128xf32> to vector<4x32xf32>
    %381 = vector.extract_strided_slice %377 {offsets = [0, 96], sizes = [4, 32], strides = [1, 1]} : vector<4x128xf32> to vector<4x32xf32>
    %382 = vector.extract_strided_slice %378 {offsets = [0, 64], sizes = [4, 32], strides = [1, 1]} : vector<4x128xf32> to vector<4x32xf32>
    %383 = arith.mulf %380, %367 : vector<4x32xf32>
    %384 = arith.mulf %379, %382 : vector<4x32xf32>
    %385 = arith.addf %383, %384 : vector<4x32xf32>
    %386 = math.tanh %385 : vector<4x32xf32>
    %387 = arith.mulf %381, %386 : vector<4x32xf32>
    %c12_138 = arith.constant 12 : index
    %c0_139 = arith.constant 0 : index
    %388 = vector.load %arg15[%c12_138, %c0_139] : memref<32x128xf32, #tpu.memory_space<vmem>>, vector<4x128xf32>
    %cst_140 = arith.constant dense<0.000000e+00> : vector<4x128xf32>
    %389 = tpu.matmul %387, %331, %cst_140 {dimension_numbers = #tpu.dot_dimension_numbers<[1], [0], [0], [1], [0, 0, 1, 1], [], []>} : vector<4x32xf32>, vector<32x128xf32>, vector<4x128xf32> -> vector<4x128xf32>
    %390 = arith.addf %388, %389 : vector<4x128xf32>
    %391 = arith.negf %390 : vector<4x128xf32>
    %392 = math.exp %391 : vector<4x128xf32>
    %cst_141 = arith.constant 1.000000e+00 : f32
    %393 = vector.broadcast %cst_141 : f32 to vector<4x128xf32>
    %394 = arith.addf %393, %392 : vector<4x128xf32>
    %395 = arith.divf %393, %394 : vector<4x128xf32>
    %396 = math.tanh %390 : vector<4x128xf32>
    %397 = vector.extract_strided_slice %395 {offsets = [0, 0], sizes = [4, 32], strides = [1, 1]} : vector<4x128xf32> to vector<4x32xf32>
    %398 = vector.extract_strided_slice %395 {offsets = [0, 32], sizes = [4, 32], strides = [1, 1]} : vector<4x128xf32> to vector<4x32xf32>
    %399 = vector.extract_strided_slice %395 {offsets = [0, 96], sizes = [4, 32], strides = [1, 1]} : vector<4x128xf32> to vector<4x32xf32>
    %400 = vector.extract_strided_slice %396 {offsets = [0, 64], sizes = [4, 32], strides = [1, 1]} : vector<4x128xf32> to vector<4x32xf32>
    %401 = arith.mulf %398, %385 : vector<4x32xf32>
    %402 = arith.mulf %397, %400 : vector<4x32xf32>
    %403 = arith.addf %401, %402 : vector<4x32xf32>
    %404 = math.tanh %403 : vector<4x32xf32>
    %405 = arith.mulf %399, %404 : vector<4x32xf32>
    %c16_142 = arith.constant 16 : index
    %c0_143 = arith.constant 0 : index
    %406 = vector.load %arg15[%c16_142, %c0_143] : memref<32x128xf32, #tpu.memory_space<vmem>>, vector<4x128xf32>
    %cst_144 = arith.constant dense<0.000000e+00> : vector<4x128xf32>
    %407 = tpu.matmul %405, %331, %cst_144 {dimension_numbers = #tpu.dot_dimension_numbers<[1], [0], [0], [1], [0, 0, 1, 1], [], []>} : vector<4x32xf32>, vector<32x128xf32>, vector<4x128xf32> -> vector<4x128xf32>
    %408 = arith.addf %406, %407 : vector<4x128xf32>
    %409 = arith.negf %408 : vector<4x128xf32>
    %410 = math.exp %409 : vector<4x128xf32>
    %cst_145 = arith.constant 1.000000e+00 : f32
    %411 = vector.broadcast %cst_145 : f32 to vector<4x128xf32>
    %412 = arith.addf %411, %410 : vector<4x128xf32>
    %413 = arith.divf %411, %412 : vector<4x128xf32>
    %414 = math.tanh %408 : vector<4x128xf32>
    %415 = vector.extract_strided_slice %413 {offsets = [0, 0], sizes = [4, 32], strides = [1, 1]} : vector<4x128xf32> to vector<4x32xf32>
    %416 = vector.extract_strided_slice %413 {offsets = [0, 32], sizes = [4, 32], strides = [1, 1]} : vector<4x128xf32> to vector<4x32xf32>
    %417 = vector.extract_strided_slice %413 {offsets = [0, 96], sizes = [4, 32], strides = [1, 1]} : vector<4x128xf32> to vector<4x32xf32>
    %418 = vector.extract_strided_slice %414 {offsets = [0, 64], sizes = [4, 32], strides = [1, 1]} : vector<4x128xf32> to vector<4x32xf32>
    %419 = arith.mulf %416, %403 : vector<4x32xf32>
    %420 = arith.mulf %415, %418 : vector<4x32xf32>
    %421 = arith.addf %419, %420 : vector<4x32xf32>
    %422 = math.tanh %421 : vector<4x32xf32>
    %423 = arith.mulf %417, %422 : vector<4x32xf32>
    %c20_146 = arith.constant 20 : index
    %c0_147 = arith.constant 0 : index
    %424 = vector.load %arg15[%c20_146, %c0_147] : memref<32x128xf32, #tpu.memory_space<vmem>>, vector<4x128xf32>
    %cst_148 = arith.constant dense<0.000000e+00> : vector<4x128xf32>
    %425 = tpu.matmul %423, %331, %cst_148 {dimension_numbers = #tpu.dot_dimension_numbers<[1], [0], [0], [1], [0, 0, 1, 1], [], []>} : vector<4x32xf32>, vector<32x128xf32>, vector<4x128xf32> -> vector<4x128xf32>
    %426 = arith.addf %424, %425 : vector<4x128xf32>
    %427 = arith.negf %426 : vector<4x128xf32>
    %428 = math.exp %427 : vector<4x128xf32>
    %cst_149 = arith.constant 1.000000e+00 : f32
    %429 = vector.broadcast %cst_149 : f32 to vector<4x128xf32>
    %430 = arith.addf %429, %428 : vector<4x128xf32>
    %431 = arith.divf %429, %430 : vector<4x128xf32>
    %432 = math.tanh %426 : vector<4x128xf32>
    %433 = vector.extract_strided_slice %431 {offsets = [0, 0], sizes = [4, 32], strides = [1, 1]} : vector<4x128xf32> to vector<4x32xf32>
    %434 = vector.extract_strided_slice %431 {offsets = [0, 32], sizes = [4, 32], strides = [1, 1]} : vector<4x128xf32> to vector<4x32xf32>
    %435 = vector.extract_strided_slice %431 {offsets = [0, 96], sizes = [4, 32], strides = [1, 1]} : vector<4x128xf32> to vector<4x32xf32>
    %436 = vector.extract_strided_slice %432 {offsets = [0, 64], sizes = [4, 32], strides = [1, 1]} : vector<4x128xf32> to vector<4x32xf32>
    %437 = arith.mulf %434, %421 : vector<4x32xf32>
    %438 = arith.mulf %433, %436 : vector<4x32xf32>
    %439 = arith.addf %437, %438 : vector<4x32xf32>
    %440 = math.tanh %439 : vector<4x32xf32>
    %441 = arith.mulf %435, %440 : vector<4x32xf32>
    %c24_150 = arith.constant 24 : index
    %c0_151 = arith.constant 0 : index
    %442 = vector.load %arg15[%c24_150, %c0_151] : memref<32x128xf32, #tpu.memory_space<vmem>>, vector<4x128xf32>
    %cst_152 = arith.constant dense<0.000000e+00> : vector<4x128xf32>
    %443 = tpu.matmul %441, %331, %cst_152 {dimension_numbers = #tpu.dot_dimension_numbers<[1], [0], [0], [1], [0, 0, 1, 1], [], []>} : vector<4x32xf32>, vector<32x128xf32>, vector<4x128xf32> -> vector<4x128xf32>
    %444 = arith.addf %442, %443 : vector<4x128xf32>
    %445 = arith.negf %444 : vector<4x128xf32>
    %446 = math.exp %445 : vector<4x128xf32>
    %cst_153 = arith.constant 1.000000e+00 : f32
    %447 = vector.broadcast %cst_153 : f32 to vector<4x128xf32>
    %448 = arith.addf %447, %446 : vector<4x128xf32>
    %449 = arith.divf %447, %448 : vector<4x128xf32>
    %450 = math.tanh %444 : vector<4x128xf32>
    %451 = vector.extract_strided_slice %449 {offsets = [0, 0], sizes = [4, 32], strides = [1, 1]} : vector<4x128xf32> to vector<4x32xf32>
    %452 = vector.extract_strided_slice %449 {offsets = [0, 32], sizes = [4, 32], strides = [1, 1]} : vector<4x128xf32> to vector<4x32xf32>
    %453 = vector.extract_strided_slice %449 {offsets = [0, 96], sizes = [4, 32], strides = [1, 1]} : vector<4x128xf32> to vector<4x32xf32>
    %454 = vector.extract_strided_slice %450 {offsets = [0, 64], sizes = [4, 32], strides = [1, 1]} : vector<4x128xf32> to vector<4x32xf32>
    %455 = arith.mulf %452, %439 : vector<4x32xf32>
    %456 = arith.mulf %451, %454 : vector<4x32xf32>
    %457 = arith.addf %455, %456 : vector<4x32xf32>
    %458 = math.tanh %457 : vector<4x32xf32>
    %459 = arith.mulf %453, %458 : vector<4x32xf32>
    %c28_154 = arith.constant 28 : index
    %c0_155 = arith.constant 0 : index
    %460 = vector.load %arg15[%c28_154, %c0_155] : memref<32x128xf32, #tpu.memory_space<vmem>>, vector<4x128xf32>
    %cst_156 = arith.constant dense<0.000000e+00> : vector<4x128xf32>
    %461 = tpu.matmul %459, %331, %cst_156 {dimension_numbers = #tpu.dot_dimension_numbers<[1], [0], [0], [1], [0, 0, 1, 1], [], []>} : vector<4x32xf32>, vector<32x128xf32>, vector<4x128xf32> -> vector<4x128xf32>
    %462 = arith.addf %460, %461 : vector<4x128xf32>
    %463 = arith.negf %462 : vector<4x128xf32>
    %464 = math.exp %463 : vector<4x128xf32>
    %cst_157 = arith.constant 1.000000e+00 : f32
    %465 = vector.broadcast %cst_157 : f32 to vector<4x128xf32>
    %466 = arith.addf %465, %464 : vector<4x128xf32>
    %467 = arith.divf %465, %466 : vector<4x128xf32>
    %468 = math.tanh %462 : vector<4x128xf32>
    %469 = vector.extract_strided_slice %467 {offsets = [0, 0], sizes = [4, 32], strides = [1, 1]} : vector<4x128xf32> to vector<4x32xf32>
    %470 = vector.extract_strided_slice %467 {offsets = [0, 32], sizes = [4, 32], strides = [1, 1]} : vector<4x128xf32> to vector<4x32xf32>
    %471 = vector.extract_strided_slice %467 {offsets = [0, 96], sizes = [4, 32], strides = [1, 1]} : vector<4x128xf32> to vector<4x32xf32>
    %472 = vector.extract_strided_slice %468 {offsets = [0, 64], sizes = [4, 32], strides = [1, 1]} : vector<4x128xf32> to vector<4x32xf32>
    %473 = arith.mulf %470, %457 : vector<4x32xf32>
    %474 = arith.mulf %469, %472 : vector<4x32xf32>
    %475 = arith.addf %473, %474 : vector<4x32xf32>
    %476 = math.tanh %475 : vector<4x32xf32>
    %477 = arith.mulf %471, %476 : vector<4x32xf32>
    %cst_158 = arith.constant dense<0.000000e+00> : vector<32xf32>
    %478 = vector.multi_reduction <add>, %477, %cst_158 [0] : vector<4x32xf32> to vector<32xf32>
    %479 = vector.shape_cast %478 : vector<32xf32> to vector<1x32xf32>
    %cst_159 = arith.constant 4.000000e+00 : f32
    %480 = vector.broadcast %cst_159 : f32 to vector<1x32xf32>
    %481 = arith.divf %479, %480 : vector<1x32xf32>
    %482 = vector.broadcast %481 : vector<1x32xf32> to vector<4x32xf32>
    %483 = arith.subf %477, %482 : vector<4x32xf32>
    %484 = arith.mulf %483, %483 : vector<4x32xf32>
    %cst_160 = arith.constant dense<0.000000e+00> : vector<32xf32>
    %485 = vector.multi_reduction <add>, %484, %cst_160 [0] : vector<4x32xf32> to vector<32xf32>
    %486 = vector.shape_cast %485 : vector<32xf32> to vector<1x32xf32>
    %cst_161 = arith.constant 4.000000e+00 : f32
    %487 = vector.broadcast %cst_161 : f32 to vector<1x32xf32>
    %488 = arith.divf %486, %487 : vector<1x32xf32>
    %489 = vector.broadcast %481 : vector<1x32xf32> to vector<4x32xf32>
    %490 = arith.subf %477, %489 : vector<4x32xf32>
    %cst_162 = arith.constant 9.99999974E-6 : f32
    %491 = vector.broadcast %cst_162 : f32 to vector<1x32xf32>
    %492 = arith.addf %488, %491 : vector<1x32xf32>
    %493 = math.rsqrt %492 : vector<1x32xf32>
    %494 = vector.broadcast %493 : vector<1x32xf32> to vector<4x32xf32>
    %495 = arith.mulf %490, %494 : vector<4x32xf32>
    %c0_163 = arith.constant 0 : index
    %c0_164 = arith.constant 0 : index
    %496 = vector.load %arg10[%c0_163, %c0_164] : memref<1x32xf32, #tpu.memory_space<vmem>>, vector<1x32xf32>
    %497 = vector.broadcast %496 : vector<1x32xf32> to vector<4x32xf32>
    %498 = arith.mulf %495, %497 : vector<4x32xf32>
    %c0_165 = arith.constant 0 : index
    %c0_166 = arith.constant 0 : index
    %499 = vector.load %arg11[%c0_165, %c0_166] : memref<1x32xf32, #tpu.memory_space<vmem>>, vector<1x32xf32>
    %500 = vector.broadcast %499 : vector<1x32xf32> to vector<4x32xf32>
    %501 = arith.addf %498, %500 : vector<4x32xf32>
    %c0_167 = arith.constant 0 : index
    %c0_168 = arith.constant 0 : index
    %502 = vector.load %arg12[%c0_167, %c0_168] : memref<32x5xf32, #tpu.memory_space<vmem>>, vector<32x5xf32>
    %cst_169 = arith.constant dense<0.000000e+00> : vector<4x5xf32>
    %503 = tpu.matmul %501, %502, %cst_169 {dimension_numbers = #tpu.dot_dimension_numbers<[1], [0], [0], [1], [0, 0, 1, 1], [], []>} : vector<4x32xf32>, vector<32x5xf32>, vector<4x5xf32> -> vector<4x5xf32>
    %c0_170 = arith.constant 0 : index
    %c0_171 = arith.constant 0 : index
    %504 = vector.load %arg13[%c0_170, %c0_171] : memref<1x5xf32, #tpu.memory_space<vmem>>, vector<1x5xf32>
    %505 = vector.broadcast %504 : vector<1x5xf32> to vector<4x5xf32>
    %506 = arith.addf %503, %505 : vector<4x5xf32>
    %c0_172 = arith.constant 0 : index
    %c0_173 = arith.constant 0 : index
    %507 = vector.load %arg14[%c0_172, %c0_173] : memref<4x5xf32, #tpu.memory_space<vmem>>, vector<4x5xf32>
    tpu.vector_store %arg14[%c0_172, %c0_173], %506 {strides = array<i32>} : memref<4x5xf32, #tpu.memory_space<vmem>>, vector<4x5xf32>,
    return
  }
}

</mosaic_0001>

<llo_original>
// kernel: lstm_model_forward.1
$region0: #{lstm_model_forward.1}
  #allocation0 [shape = 'u32[]', space=smem, size = 0x4, offset = 0x4, fixed_abs, tag = 'smem constant byte address 0x4 - core index']
  #allocation1 [shape = 'u32[144,128]{1,0:T(1,128)}', space=vmem, size = 0x12000, scoped, tag = 'internal scratch']
  #allocation2 [shape = 'f32[32,128]{1,0:T(8,128)}', space=vmem, size = 0x4000, scoped, tag = 'scratch operand']
  #allocation3 [shape = 'f32[32,32]{1,0:T(8,128)}', space=vmem, size = 0x4000, scoped, tag = 'scratch operand']
  %s0 = inlined_call_operand.vmem [shape: f32[32,8], index: 0, kind: input, shape index: {}]
  %s1 = inlined_call_operand.hbm [shape: f32[8,128], index: 1, kind: input, shape index: {}]
  %s2 = inlined_call_operand.vmem [shape: f32[32,128], index: 2, kind: input, shape index: {}]
  %s3 = inlined_call_operand.hbm [shape: f32[1,128], index: 3, kind: input, shape index: {}]
  %s4 = inlined_call_operand.vmem [shape: f32[32,128], index: 4, kind: input, shape index: {}]
  %s5 = inlined_call_operand.vmem [shape: f32[32,128], index: 5, kind: input, shape index: {}]
  %s6 = inlined_call_operand.vmem [shape: f32[1,128], index: 6, kind: input, shape index: {}]
  %s7 = inlined_call_operand.vmem [shape: f32[32,128], index: 7, kind: input, shape index: {}]
  %s8 = inlined_call_operand.vmem [shape: f32[32,128], index: 8, kind: input, shape index: {}]
  %s9 = inlined_call_operand.vmem [shape: f32[1,128], index: 9, kind: input, shape index: {}]
  %s10 = inlined_call_operand.hbm [shape: f32[1,32], index: 10, kind: input, shape index: {}]
  %s11 = inlined_call_operand.hbm [shape: f32[1,32], index: 11, kind: input, shape index: {}]
  %s12 = inlined_call_operand.vmem [shape: f32[32,5], index: 12, kind: input, shape index: {}]
  %s13 = inlined_call_operand.hbm [shape: f32[1,5], index: 13, kind: input, shape index: {}]
  %s14 = inlined_call_operand.hbm [shape: f32[4,5], index: 14, kind: output, shape index: {}]
  %s15 = sld [smem:[#allocation0]]
  $region86: #{lstm_model_forward.1} parent=0
    _
  %s17 = ssub.s32 1, %s15
  %s18 = scalar_select 0, %s17, %s15
  $region1: #{lstm_model_forward.1} parent=0
    #allocation4 [shape = 'u8[4096]{0}', space=vmem, size = 0x1000, scoped, tag = 'input window, operand 1, single buffered']
    #allocation5 [shape = 's32[1]{0}', space=sflag, size = 0x4, scoped, tag = 'scoped memory for lstm_model_forward.1']
    #allocation6 [shape = 's32[1]{0}', space=sflag, size = 0x4, scoped, tag = 'scoped memory for lstm_model_forward.1']
    #allocation7 [shape = 'u8[512]{0}', space=vmem, size = 0x400, scoped, tag = 'input window, operand 3, single buffered']
    #allocation8 [shape = 's32[1]{0}', space=sflag, size = 0x4, scoped, tag = 'scoped memory for lstm_model_forward.1']
    #allocation9 [shape = 'u8[512]{0}', space=vmem, size = 0x400, scoped, tag = 'input window, operand 10, single buffered']
    #allocation10 [shape = 'u8[512]{0}', space=vmem, size = 0x400, scoped, tag = 'input window, operand 11, single buffered']
    #allocation11 [shape = 's32[1]{0}', space=sflag, size = 0x4, scoped, tag = 'scoped memory for lstm_model_forward.1']
    #allocation12 [shape = 'u8[512]{0}', space=vmem, size = 0x400, scoped, tag = 'input window, operand 13, single buffered']
    #allocation13 [shape = 'u8[2048]{0}', space=vmem, size = 0x800, scoped, tag = 'output window, operand 0, single buffered']
    %19 = vsyncpa [#allocation5], 0
    %20 = vsyncpa [#allocation8], 0
    %21 = vsyncpa [#allocation11], 0
    %22 = vsyncpa [#allocation6], 0
    // Predicated region
    $region2: #{lstm_model_forward.1} parent=1 // pred_check
      _
    $region3: #{lstm_model_forward.1} parent=1 // pred_check_branch
      %24 = sbr.rel (0) target = $region5
    $region4: #{lstm_model_forward.1} parent=1 // pred_region
      _
    $region5: #{lstm_model_forward.1} parent=1 // pred_fallthru
      _
    // Predicated region
    $region6: #{lstm_model_forward.1} parent=1 // pred_check
      _
    $region7: #{lstm_model_forward.1} parent=1 // pred_check_branch
      %26 = sbr.rel (0) target = $region9
    $region8: #{lstm_model_forward.1} parent=1 // pred_region
      %s28 = ssub.s32 128, 128
      %29 = vsyncadd [#allocation5], %s28
      %s31 = sshll.u32 [#allocation4], 4
      %s32 = int_to_ptr.vmem [resolvable:$true] %s31
      %34 = dma.hbm_to_vmem [thread:$0]  %s1, 128, %s32, [#allocation5]
    $region9: #{lstm_model_forward.1} parent=1 // pred_fallthru
      _
    // Predicated region
    $region10: #{lstm_model_forward.1} parent=1 // pred_check
      _
    $region11: #{lstm_model_forward.1} parent=1 // pred_check_branch
      %36 = sbr.rel (0) target = $region13
    $region12: #{lstm_model_forward.1} parent=1 // pred_region
      _
    $region13: #{lstm_model_forward.1} parent=1 // pred_fallthru
      _
    // Predicated region
    $region14: #{lstm_model_forward.1} parent=1 // pred_check
      _
    $region15: #{lstm_model_forward.1} parent=1 // pred_check_branch
      %38 = sbr.rel (0) target = $region17
    $region16: #{lstm_model_forward.1} parent=1 // pred_region
      %s40 = ssub.s32 16, 16
      %41 = vsyncadd [#allocation8], %s40
      %s43 = sshll.u32 [#allocation7], 4
      %s44 = int_to_ptr.vmem [resolvable:$true] %s43
      %46 = dma.hbm_to_vmem [thread:$0]  %s3, 16, %s44, [#allocation8]
    $region17: #{lstm_model_forward.1} parent=1 // pred_fallthru
      _
    // Predicated region
    $region18: #{lstm_model_forward.1} parent=1 // pred_check
      _
    $region19: #{lstm_model_forward.1} parent=1 // pred_check_branch
      %48 = sbr.rel (0) target = $region21
    $region20: #{lstm_model_forward.1} parent=1 // pred_region
      _
    $region21: #{lstm_model_forward.1} parent=1 // pred_fallthru
      _
    // Predicated region
    $region22: #{lstm_model_forward.1} parent=1 // pred_check
      _
    $region23: #{lstm_model_forward.1} parent=1 // pred_check_branch
      %50 = sbr.rel (0) target = $region25
    $region24: #{lstm_model_forward.1} parent=1 // pred_region
      _
    $region25: #{lstm_model_forward.1} parent=1 // pred_fallthru
      _
    // Predicated region
    $region26: #{lstm_model_forward.1} parent=1 // pred_check
      _
    $region27: #{lstm_model_forward.1} parent=1 // pred_check_branch
      %52 = sbr.rel (0) target = $region29
    $region28: #{lstm_model_forward.1} parent=1 // pred_region
      _
    $region29: #{lstm_model_forward.1} parent=1 // pred_fallthru
      _
    // Predicated region
    $region30: #{lstm_model_forward.1} parent=1 // pred_check
      _
    $region31: #{lstm_model_forward.1} parent=1 // pred_check_branch
      %54 = sbr.rel (0) target = $region33
    $region32: #{lstm_model_forward.1} parent=1 // pred_region
      _
    $region33: #{lstm_model_forward.1} parent=1 // pred_fallthru
      _
    // Predicated region
    $region34: #{lstm_model_forward.1} parent=1 // pred_check
      _
    $region35: #{lstm_model_forward.1} parent=1 // pred_check_branch
      %56 = sbr.rel (0) target = $region37
    $region36: #{lstm_model_forward.1} parent=1 // pred_region
      _
    $region37: #{lstm_model_forward.1} parent=1 // pred_fallthru
      _
    // Predicated region
    $region38: #{lstm_model_forward.1} parent=1 // pred_check
      _
    $region39: #{lstm_model_forward.1} parent=1 // pred_check_branch
      %58 = sbr.rel (0) target = $region41
    $region40: #{lstm_model_forward.1} parent=1 // pred_region
      _
    $region41: #{lstm_model_forward.1} parent=1 // pred_fallthru
      _
    // Predicated region
    $region42: #{lstm_model_forward.1} parent=1 // pred_check
      _
    $region43: #{lstm_model_forward.1} parent=1 // pred_check_branch
      %60 = sbr.rel (0) target = $region45
    $region44: #{lstm_model_forward.1} parent=1 // pred_region
      %s62 = ssub.s32 16, 16
      %63 = vsyncadd [#allocation8], %s62
      %s65 = sshll.u32 [#allocation9], 4
      %s66 = int_to_ptr.vmem [resolvable:$true] %s65
      %68 = dma.hbm_to_vmem [thread:$0]  %s10, 16, %s66, [#allocation8]
    $region45: #{lstm_model_forward.1} parent=1 // pred_fallthru
      _
    // Predicated region
    $region46: #{lstm_model_forward.1} parent=1 // pred_check
      _
    $region47: #{lstm_model_forward.1} parent=1 // pred_check_branch
      %70 = sbr.rel (0) target = $region49
    $region48: #{lstm_model_forward.1} parent=1 // pred_region
      %s72 = ssub.s32 16, 16
      %73 = vsyncadd [#allocation11], %s72
      %s75 = sshll.u32 [#allocation10], 4
      %s76 = int_to_ptr.vmem [resolvable:$true] %s75
      %78 = dma.hbm_to_vmem [thread:$0]  %s11, 16, %s76, [#allocation11]
    $region49: #{lstm_model_forward.1} parent=1 // pred_fallthru
      _
    // Predicated region
    $region50: #{lstm_model_forward.1} parent=1 // pred_check
      _
    $region51: #{lstm_model_forward.1} parent=1 // pred_check_branch
      %80 = sbr.rel (0) target = $region53
    $region52: #{lstm_model_forward.1} parent=1 // pred_region
      _
    $region53: #{lstm_model_forward.1} parent=1 // pred_fallthru
      _
    // Predicated region
    $region54: #{lstm_model_forward.1} parent=1 // pred_check
      _
    $region55: #{lstm_model_forward.1} parent=1 // pred_check_branch
      %82 = sbr.rel (0) target = $region57
    $region56: #{lstm_model_forward.1} parent=1 // pred_region
      %s84 = ssub.s32 16, 16
      %85 = vsyncadd [#allocation11], %s84
      %s87 = sshll.u32 [#allocation12], 4
      %s88 = int_to_ptr.vmem [resolvable:$true] %s87
      %90 = dma.hbm_to_vmem [thread:$0]  %s13, 16, %s88, [#allocation11]
    $region57: #{lstm_model_forward.1} parent=1 // pred_fallthru
      _
    // Predicated region
    $region58: #{lstm_model_forward.1} parent=1 // pred_check
      _
    $region59: #{lstm_model_forward.1} parent=1 // pred_check_branch
      %92 = sbr.rel (0) target = $region61
    $region60: #{lstm_model_forward.1} parent=1 // pred_region
      %93 = dma.done [#allocation5], 128
    $region61: #{lstm_model_forward.1} parent=1 // pred_fallthru
      _
    // Predicated region
    $region62: #{lstm_model_forward.1} parent=1 // pred_check
      _
    $region63: #{lstm_model_forward.1} parent=1 // pred_check_branch
      %95 = sbr.rel (0) target = $region65
    $region64: #{lstm_model_forward.1} parent=1 // pred_region
      %96 = dma.done [#allocation8], 16
    $region65: #{lstm_model_forward.1} parent=1 // pred_fallthru
      _
    // Predicated region
    $region66: #{lstm_model_forward.1} parent=1 // pred_check
      _
    $region67: #{lstm_model_forward.1} parent=1 // pred_check_branch
      %98 = sbr.rel (0) target = $region69
    $region68: #{lstm_model_forward.1} parent=1 // pred_region
      %99 = dma.done [#allocation8], 16
    $region69: #{lstm_model_forward.1} parent=1 // pred_fallthru
      _
    // Predicated region
    $region70: #{lstm_model_forward.1} parent=1 // pred_check
      _
    $region71: #{lstm_model_forward.1} parent=1 // pred_check_branch
      %101 = sbr.rel (0) target = $region73
    $region72: #{lstm_model_forward.1} parent=1 // pred_region
      %102 = dma.done [#allocation11], 16
    $region73: #{lstm_model_forward.1} parent=1 // pred_fallthru
      _
    // Predicated region
    $region74: #{lstm_model_forward.1} parent=1 // pred_check
      _
    $region75: #{lstm_model_forward.1} parent=1 // pred_check_branch
      %104 = sbr.rel (0) target = $region77
    $region76: #{lstm_model_forward.1} parent=1 // pred_region
      %105 = dma.done [#allocation11], 16
    $region77: #{lstm_model_forward.1} parent=1 // pred_fallthru
      _
    %v106 = vld [vmem:[%s0] sm:$0xff]
    %v107 = vld [vmem:[%s0 + $0x8] sm:$0xff]
    %v108 = vld [vmem:[%s0 + $0x10] sm:$0xff]
    %v109 = vld [vmem:[%s0 + $0x18] sm:$0xff]
    %v110 = vld [vmem:[#allocation4] sm:$0xff]
    %v111 = vld [vmem:[#allocation7] sm:$0x1]
    %v113 = vlaneseq
    %v114 = vshrl.u32 %v113, 7
    %v115 = vsub.s32 0, %v114
    %v116 = vrot.slane %v111, %v115
    %vm118 = vcmask 64512
    %v120 = vsel %vm118, %v106, 0
    %v123 = vsel %vm118, %v107, 0
    %v126 = vsel %vm118, %v108, 0
    %v129 = vsel %vm118, %v109, 0
    %131 = vmatprep.subr.mxu0 0.0
    %132 = vmatpush1.msra.mxu0 %v110
    %133 = vmatprep.subr.mxu0 0.0
    %134 = vmatpush1.msra.mxu0 0.0
    %135 = vmatprep.subr.mxu0 0.0
    %136 = vmatpush1.msra.mxu0 0.0
    %137 = vmatprep.subr.mxu0 0.0
    %138 = vmatpush1.msra.mxu0 0.0
    %139 = vmatprep.subr.mxu0 0.0
    %140 = vmatpush1.msra.mxu0 0.0
    %141 = vmatprep.subr.mxu0 0.0
    %142 = vmatpush1.msra.mxu0 0.0
    %143 = vmatprep.subr.mxu0 0.0
    %144 = vmatpush1.msra.mxu0 0.0
    %145 = vmatprep.subr.mxu0 0.0
    %146 = vmatpush1.msra.mxu0 0.0
    %147 = vmatprep.subr.mxu0 0.0
    %148 = vmatpush1.msra.mxu0 0.0
    %149 = vmatprep.subr.mxu0 0.0
    %150 = vmatpush1.msra.mxu0 0.0
    %151 = vmatprep.subr.mxu0 0.0
    %152 = vmatpush1.msra.mxu0 0.0
    %153 = vmatprep.subr.mxu0 0.0
    %154 = vmatpush1.msra.mxu0 0.0
    %155 = vmatprep.subr.mxu0 0.0
    %156 = vmatpush1.msra.mxu0 0.0
    %157 = vmatprep.subr.mxu0 0.0
    %158 = vmatpush1.msra.mxu0 0.0
    %159 = vmatprep.subr.mxu0 0.0
    %160 = vmatpush1.msra.mxu0 0.0
    %161 = vmatprep.subr.mxu0 0.0
    %162 = vmatpush1.msra.mxu0 0.0
    %163 = vmatprep.subr.mxu0 0.0
    %164 = vmatpush1.msra.mxu0 0.0
    %165 = vmatprep.subr.mxu0 0.0
    %166 = vmatpush1.msra.mxu0 0.0
    %167 = vmatprep.subr.mxu0 0.0
    %168 = vmatpush1.msra.mxu0 0.0
    %169 = vmatprep.subr.mxu0 0.0
    %170 = vmatpush1.msra.mxu0 0.0
    %171 = vmatprep.subr.mxu0 0.0
    %172 = vmatpush1.msra.mxu0 0.0
    %173 = vmatprep.subr.mxu0 0.0
    %174 = vmatpush1.msra.mxu0 0.0
    %175 = vmatprep.subr.mxu0 0.0
    %176 = vmatpush1.msra.mxu0 0.0
    %177 = vmatprep.subr.mxu0 0.0
    %178 = vmatpush1.msra.mxu0 0.0
    %179 = vmatprep.subr.mxu0 0.0
    %180 = vmatpush1.msra.mxu0 0.0
    %181 = vmatprep.subr.mxu0 0.0
    %182 = vmatpush1.msra.mxu0 0.0
    %183 = vmatprep.subr.mxu0 0.0
    %184 = vmatpush1.msra.mxu0 0.0
    %185 = vmatprep.subr.mxu0 0.0
    %186 = vmatpush1.msra.mxu0 0.0
    %187 = vmatprep.subr.mxu0 0.0
    %188 = vmatpush1.msra.mxu0 0.0
    %189 = vmatprep.subr.mxu0 0.0
    %190 = vmatpush1.msra.mxu0 0.0
    %191 = vmatprep.subr.mxu0 0.0
    %192 = vmatpush1.msra.mxu0 0.0
    %193 = vmatprep.subr.mxu0 0.0
    %194 = vmatpush1.msra.mxu0 0.0
    %195 = vmatprep.mubr.f32.mxu0 0.0
    %196 = vmatmul.mubr.f32.gmra.mrb[0].mxu0 %v120
    %v197 = vpop.f32.mrb[0].mxu0
    %v198 = vadd.f32 %v116, %v197
    %v199 = vpop.f32.mrb[0].mxu0
    %200 = vmatprep.mubr.f32.mxu0 0.0
    %201 = vmatmul.mubr.f32.gmra.mrb[0].mxu0 %v123
    %v202 = vpop.f32.mrb[0].mxu0
    %v203 = vadd.f32 %v116, %v202
    %v204 = vpop.f32.mrb[0].mxu0
    %205 = vmatprep.mubr.f32.mxu0 0.0
    %206 = vmatmul.mubr.f32.gmra.mrb[0].mxu0 %v126
    %v207 = vpop.f32.mrb[0].mxu0
    %v208 = vadd.f32 %v116, %v207
    %v209 = vpop.f32.mrb[0].mxu0
    %210 = vmatprep.mubr.f32.mxu0 0.0
    %211 = vmatmul.mubr.f32.gmra.mrb[0].mxu0 %v129
    %v212 = vpop.f32.mrb[0].mxu0
    %v213 = vadd.f32 %v116, %v212
    %v214 = vpop.f32.mrb[0].mxu0
    %215 = vdwg.mxu0
    %216 = vst [vmem:[#allocation2] sm:$0xff] %v198
    %217 = vst [vmem:[#allocation2 + $0x8] sm:$0xff] %v203
    %218 = vst [vmem:[#allocation2 + $0x10] sm:$0xff] %v208
    %219 = vst [vmem:[#allocation2 + $0x18] sm:$0xff] %v213
    %v220 = vld [vmem:[%s2] sm:$0xff]
    %v221 = vld [vmem:[%s2 + $0x8] sm:$0xff]
    %v222 = vld [vmem:[%s2 + $0x10] sm:$0xff]
    %v223 = vld [vmem:[%s2 + $0x18] sm:$0xff]
    %v224 = vld [vmem:[#allocation2] sm:$0xf]
    %vm225 = vcmask 261120
    %v227 = vsel %vm225, 0.0, 0
    %229 = vmatprep.subr.mxu0 0.0
    %230 = vmatpush1.msra.mxu0 %v220
    %231 = vmatprep.subr.mxu0 0.0
    %232 = vmatpush1.msra.mxu0 %v221
    %233 = vmatprep.subr.mxu0 0.0
    %234 = vmatpush1.msra.mxu0 %v222
    %235 = vmatprep.subr.mxu0 0.0
    %236 = vmatpush1.msra.mxu0 %v223
    %237 = vmatprep.subr.mxu0 0.0
    %238 = vmatpush1.msra.mxu0 0.0
    %239 = vmatprep.subr.mxu0 0.0
    %240 = vmatpush1.msra.mxu0 0.0
    %241 = vmatprep.subr.mxu0 0.0
    %242 = vmatpush1.msra.mxu0 0.0
    %243 = vmatprep.subr.mxu0 0.0
    %244 = vmatpush1.msra.mxu0 0.0
    %245 = vmatprep.subr.mxu0 0.0
    %246 = vmatpush1.msra.mxu0 0.0
    %247 = vmatprep.subr.mxu0 0.0
    %248 = vmatpush1.msra.mxu0 0.0
    %249 = vmatprep.subr.mxu0 0.0
    %250 = vmatpush1.msra.mxu0 0.0
    %251 = vmatprep.subr.mxu0 0.0
    %252 = vmatpush1.msra.mxu0 0.0
    %253 = vmatprep.subr.mxu0 0.0
    %254 = vmatpush1.msra.mxu0 0.0
    %255 = vmatprep.subr.mxu0 0.0
    %256 = vmatpush1.msra.mxu0 0.0
    %257 = vmatprep.subr.mxu0 0.0
    %258 = vmatpush1.msra.mxu0 0.0
    %259 = vmatprep.subr.mxu0 0.0
    %260 = vmatpush1.msra.mxu0 0.0
    %261 = vmatprep.subr.mxu0 0.0
    %262 = vmatpush1.msra.mxu0 0.0
    %263 = vmatprep.subr.mxu0 0.0
    %264 = vmatpush1.msra.mxu0 0.0
    %265 = vmatprep.subr.mxu0 0.0
    %266 = vmatpush1.msra.mxu0 0.0
    %267 = vmatprep.subr.mxu0 0.0
    %268 = vmatpush1.msra.mxu0 0.0
    %269 = vmatprep.subr.mxu0 0.0
    %270 = vmatpush1.msra.mxu0 0.0
    %271 = vmatprep.subr.mxu0 0.0
    %272 = vmatpush1.msra.mxu0 0.0
    %273 = vmatprep.subr.mxu0 0.0
    %274 = vmatpush1.msra.mxu0 0.0
    %275 = vmatprep.subr.mxu0 0.0
    %276 = vmatpush1.msra.mxu0 0.0
    %277 = vmatprep.subr.mxu0 0.0
    %278 = vmatpush1.msra.mxu0 0.0
    %279 = vmatprep.subr.mxu0 0.0
    %280 = vmatpush1.msra.mxu0 0.0
    %281 = vmatprep.subr.mxu0 0.0
    %282 = vmatpush1.msra.mxu0 0.0
    %283 = vmatprep.subr.mxu0 0.0
    %284 = vmatpush1.msra.mxu0 0.0
    %285 = vmatprep.subr.mxu0 0.0
    %286 = vmatpush1.msra.mxu0 0.0
    %287 = vmatprep.subr.mxu0 0.0
    %288 = vmatpush1.msra.mxu0 0.0
    %289 = vmatprep.subr.mxu0 0.0
    %290 = vmatpush1.msra.mxu0 0.0
    %291 = vmatprep.subr.mxu0 0.0
    %292 = vmatpush1.msra.mxu0 0.0
    %293 = vmatprep.mubr.f32.mxu0 0.0
    %294 = vmatmul.mubr.f32.gmra.mrb[0].mxu0 %v227
    %v295 = vpop.f32.mrb[0].mxu0
    %v296 = vadd.f32 0.0, %v295
    %v297 = vpop.f32.mrb[0].mxu0
    %298 = vdwg.mxu0
    %v299 = vadd.f32 %v224, %v296
    %v300 = vxor.u32 %v299, 2147483648
    %v301 = vmul.f32 %v300, 1.442695
    %v302 = vpow.pop %v301
    %v303 = vadd.f32 %v302, 1.0
    %v304 = vrcp.pop %v303
    %v305 = vmul.f32 1.0, %v304
    %v306 = vtanh.pop %v299
    %v307 = vmul.f32 %v305, 0.0
    %309 = vrot.lane.b32.xlu0 %v306, 64
    %v310 = vpop.permute.xlu0 %309
    %v312 = vmul.f32 %v305, %v310
    %314 = vrot.lane.b32.xlu0 %v312, 32
    %v315 = vpop.permute.xlu0 %314
    %v317 = vadd.f32 %v307, %v315
    %v318 = vtanh.pop %v317
    %320 = vrot.lane.b32.xlu0 %v318, 64
    %v321 = vpop.permute.xlu0 %320
    %v323 = vmul.f32 %v305, %v321
    %325 = vrot.lane.b32.xlu0 %v323, 32
    %v326 = vpop.permute.xlu0 %325
    %vm328 = vcmask 257024
    %329 = vst.msk [vmem:[#allocation3] sm:$0xf] %vm328, %v326
    %v330 = vld [vmem:[#allocation2 + $0x4] sm:$0xf]
    %v331 = vsel %vm225, %v326, 0
    %333 = vmatprep.subr.mxu0 0.0
    %334 = vmatpush1.msra.mxu0 %v220
    %335 = vmatprep.subr.mxu0 0.0
    %336 = vmatpush1.msra.mxu0 %v221
    %337 = vmatprep.subr.mxu0 0.0
    %338 = vmatpush1.msra.mxu0 %v222
    %339 = vmatprep.subr.mxu0 0.0
    %340 = vmatpush1.msra.mxu0 %v223
    %341 = vmatprep.subr.mxu0 0.0
    %342 = vmatpush1.msra.mxu0 0.0
    %343 = vmatprep.subr.mxu0 0.0
    %344 = vmatpush1.msra.mxu0 0.0
    %345 = vmatprep.subr.mxu0 0.0
    %346 = vmatpush1.msra.mxu0 0.0
    %347 = vmatprep.subr.mxu0 0.0
    %348 = vmatpush1.msra.mxu0 0.0
    %349 = vmatprep.subr.mxu0 0.0
    %350 = vmatpush1.msra.mxu0 0.0
    %351 = vmatprep.subr.mxu0 0.0
    %352 = vmatpush1.msra.mxu0 0.0
    %353 = vmatprep.subr.mxu0 0.0
    %354 = vmatpush1.msra.mxu0 0.0
    %355 = vmatprep.subr.mxu0 0.0
    %356 = vmatpush1.msra.mxu0 0.0
    %357 = vmatprep.subr.mxu0 0.0
    %358 = vmatpush1.msra.mxu0 0.0
    %359 = vmatprep.subr.mxu0 0.0
    %360 = vmatpush1.msra.mxu0 0.0
    %361 = vmatprep.subr.mxu0 0.0
    %362 = vmatpush1.msra.mxu0 0.0
    %363 = vmatprep.subr.mxu0 0.0
    %364 = vmatpush1.msra.mxu0 0.0
    %365 = vmatprep.subr.mxu0 0.0
    %366 = vmatpush1.msra.mxu0 0.0
    %367 = vmatprep.subr.mxu0 0.0
    %368 = vmatpush1.msra.mxu0 0.0
    %369 = vmatprep.subr.mxu0 0.0
    %370 = vmatpush1.msra.mxu0 0.0
    %371 = vmatprep.subr.mxu0 0.0
    %372 = vmatpush1.msra.mxu0 0.0
    %373 = vmatprep.subr.mxu0 0.0
    %374 = vmatpush1.msra.mxu0 0.0
    %375 = vmatprep.subr.mxu0 0.0
    %376 = vmatpush1.msra.mxu0 0.0
    %377 = vmatprep.subr.mxu0 0.0
    %378 = vmatpush1.msra.mxu0 0.0
    %379 = vmatprep.subr.mxu0 0.0
    %380 = vmatpush1.msra.mxu0 0.0
    %381 = vmatprep.subr.mxu0 0.0
    %382 = vmatpush1.msra.mxu0 0.0
    %383 = vmatprep.subr.mxu0 0.0
    %384 = vmatpush1.msra.mxu0 0.0
    %385 = vmatprep.subr.mxu0 0.0
    %386 = vmatpush1.msra.mxu0 0.0
    %387 = vmatprep.subr.mxu0 0.0
    %388 = vmatpush1.msra.mxu0 0.0
    %389 = vmatprep.subr.mxu0 0.0
    %390 = vmatpush1.msra.mxu0 0.0
    %391 = vmatprep.subr.mxu0 0.0
    %392 = vmatpush1.msra.mxu0 0.0
    %393 = vmatprep.subr.mxu0 0.0
    %394 = vmatpush1.msra.mxu0 0.0
    %395 = vmatprep.subr.mxu0 0.0
    %396 = vmatpush1.msra.mxu0 0.0
    %397 = vmatprep.mubr.f32.mxu0 0.0
    %398 = vmatmul.mubr.f32.gmra.mrb[0].mxu0 %v331
    %v399 = vpop.f32.mrb[0].mxu0
    %v400 = vadd.f32 0.0, %v399
    %v401 = vpop.f32.mrb[0].mxu0
    %402 = vdwg.mxu0
    %v403 = vadd.f32 %v330, %v400
    %v404 = vxor.u32 %v403, 2147483648
    %v405 = vmul.f32 %v404, 1.442695
    %v406 = vpow.pop %v405
    %v407 = vadd.f32 %v406, 1.0
    %v408 = vrcp.pop %v407
    %v409 = vmul.f32 1.0, %v408
    %v410 = vtanh.pop %v403
    %v411 = vmul.f32 %v409, %v317
    %413 = vrot.lane.b32.xlu0 %v410, 64
    %v414 = vpop.permute.xlu0 %413
    %v416 = vmul.f32 %v409, %v414
    %418 = vrot.lane.b32.xlu0 %v416, 32
    %v419 = vpop.permute.xlu0 %418
    %v421 = vadd.f32 %v411, %v419
    %v422 = vtanh.pop %v421
    %424 = vrot.lane.b32.xlu0 %v422, 64
    %v425 = vpop.permute.xlu0 %424
    %v427 = vmul.f32 %v409, %v425
    %429 = vrot.lane.b32.xlu0 %v427, 32
    %v430 = vpop.permute.xlu0 %429
    %432 = vst.msk [vmem:[#allocation3 + $0x4] sm:$0xf] %vm328, %v430
    %v433 = vld [vmem:[#allocation2 + $0x8] sm:$0xf]
    %v434 = vsel %vm225, %v430, 0
    %436 = vmatprep.subr.mxu0 0.0
    %437 = vmatpush1.msra.mxu0 %v220
    %438 = vmatprep.subr.mxu0 0.0
    %439 = vmatpush1.msra.mxu0 %v221
    %440 = vmatprep.subr.mxu0 0.0
    %441 = vmatpush1.msra.mxu0 %v222
    %442 = vmatprep.subr.mxu0 0.0
    %443 = vmatpush1.msra.mxu0 %v223
    %444 = vmatprep.subr.mxu0 0.0
    %445 = vmatpush1.msra.mxu0 0.0
    %446 = vmatprep.subr.mxu0 0.0
    %447 = vmatpush1.msra.mxu0 0.0
    %448 = vmatprep.subr.mxu0 0.0
    %449 = vmatpush1.msra.mxu0 0.0
    %450 = vmatprep.subr.mxu0 0.0
    %451 = vmatpush1.msra.mxu0 0.0
    %452 = vmatprep.subr.mxu0 0.0
    %453 = vmatpush1.msra.mxu0 0.0
    %454 = vmatprep.subr.mxu0 0.0
    %455 = vmatpush1.msra.mxu0 0.0
    %456 = vmatprep.subr.mxu0 0.0
    %457 = vmatpush1.msra.mxu0 0.0
    %458 = vmatprep.subr.mxu0 0.0
    %459 = vmatpush1.msra.mxu0 0.0
    %460 = vmatprep.subr.mxu0 0.0
    %461 = vmatpush1.msra.mxu0 0.0
    %462 = vmatprep.subr.mxu0 0.0
    %463 = vmatpush1.msra.mxu0 0.0
    %464 = vmatprep.subr.mxu0 0.0
    %465 = vmatpush1.msra.mxu0 0.0
    %466 = vmatprep.subr.mxu0 0.0
    %467 = vmatpush1.msra.mxu0 0.0
    %468 = vmatprep.subr.mxu0 0.0
    %469 = vmatpush1.msra.mxu0 0.0
    %470 = vmatprep.subr.mxu0 0.0
    %471 = vmatpush1.msra.mxu0 0.0
    %472 = vmatprep.subr.mxu0 0.0
    %473 = vmatpush1.msra.mxu0 0.0
    %474 = vmatprep.subr.mxu0 0.0
    %475 = vmatpush1.msra.mxu0 0.0
    %476 = vmatprep.subr.mxu0 0.0
    %477 = vmatpush1.msra.mxu0 0.0
    %478 = vmatprep.subr.mxu0 0.0
    %479 = vmatpush1.msra.mxu0 0.0
    %480 = vmatprep.subr.mxu0 0.0
    %481 = vmatpush1.msra.mxu0 0.0
    %482 = vmatprep.subr.mxu0 0.0
    %483 = vmatpush1.msra.mxu0 0.0
    %484 = vmatprep.subr.mxu0 0.0
    %485 = vmatpush1.msra.mxu0 0.0
    %486 = vmatprep.subr.mxu0 0.0
    %487 = vmatpush1.msra.mxu0 0.0
    %488 = vmatprep.subr.mxu0 0.0
    %489 = vmatpush1.msra.mxu0 0.0
    %490 = vmatprep.subr.mxu0 0.0
    %491 = vmatpush1.msra.mxu0 0.0
    %492 = vmatprep.subr.mxu0 0.0
    %493 = vmatpush1.msra.mxu0 0.0
    %494 = vmatprep.subr.mxu0 0.0
    %495 = vmatpush1.msra.mxu0 0.0
    %496 = vmatprep.subr.mxu0 0.0
    %497 = vmatpush1.msra.mxu0 0.0
    %498 = vmatprep.subr.mxu0 0.0
    %499 = vmatpush1.msra.mxu0 0.0
    %500 = vmatprep.mubr.f32.mxu0 0.0
    %501 = vmatmul.mubr.f32.gmra.mrb[0].mxu0 %v434
    %v502 = vpop.f32.mrb[0].mxu0
    %v503 = vadd.f32 0.0, %v502
    %v504 = vpop.f32.mrb[0].mxu0
    %505 = vdwg.mxu0
    %v506 = vadd.f32 %v433, %v503
    %v507 = vxor.u32 %v506, 2147483648
    %v508 = vmul.f32 %v507, 1.442695
    %v509 = vpow.pop %v508
    %v510 = vadd.f32 %v509, 1.0
    %v511 = vrcp.pop %v510
    %v512 = vmul.f32 1.0, %v511
    %v513 = vtanh.pop %v506
    %v514 = vmul.f32 %v512, %v421
    %516 = vrot.lane.b32.xlu0 %v513, 64
    %v517 = vpop.permute.xlu0 %516
    %v519 = vmul.f32 %v512, %v517
    %521 = vrot.lane.b32.xlu0 %v519, 32
    %v522 = vpop.permute.xlu0 %521
    %v524 = vadd.f32 %v514, %v522
    %v525 = vtanh.pop %v524
    %527 = vrot.lane.b32.xlu0 %v525, 64
    %v528 = vpop.permute.xlu0 %527
    %v530 = vmul.f32 %v512, %v528
    %532 = vrot.lane.b32.xlu0 %v530, 32
    %v533 = vpop.permute.xlu0 %532
    %535 = vst.msk [vmem:[#allocation3 + $0x8] sm:$0xf] %vm328, %v533
    %v536 = vld [vmem:[#allocation2 + $0xc] sm:$0xf]
    %v537 = vsel %vm225, %v533, 0
    %539 = vmatprep.subr.mxu0 0.0
    %540 = vmatpush1.msra.mxu0 %v220
    %541 = vmatprep.subr.mxu0 0.0
    %542 = vmatpush1.msra.mxu0 %v221
    %543 = vmatprep.subr.mxu0 0.0
    %544 = vmatpush1.msra.mxu0 %v222
    %545 = vmatprep.subr.mxu0 0.0
    %546 = vmatpush1.msra.mxu0 %v223
    %547 = vmatprep.subr.mxu0 0.0
    %548 = vmatpush1.msra.mxu0 0.0
    %549 = vmatprep.subr.mxu0 0.0
    %550 = vmatpush1.msra.mxu0 0.0
    %551 = vmatprep.subr.mxu0 0.0
    %552 = vmatpush1.msra.mxu0 0.0
    %553 = vmatprep.subr.mxu0 0.0
    %554 = vmatpush1.msra.mxu0 0.0
    %555 = vmatprep.subr.mxu0 0.0
    %556 = vmatpush1.msra.mxu0 0.0
    %557 = vmatprep.subr.mxu0 0.0
    %558 = vmatpush1.msra.mxu0 0.0
    %559 = vmatprep.subr.mxu0 0.0
    %560 = vmatpush1.msra.mxu0 0.0
    %561 = vmatprep.subr.mxu0 0.0
    %562 = vmatpush1.msra.mxu0 0.0
    %563 = vmatprep.subr.mxu0 0.0
    %564 = vmatpush1.msra.mxu0 0.0
    %565 = vmatprep.subr.mxu0 0.0
    %566 = vmatpush1.msra.mxu0 0.0
    %567 = vmatprep.subr.mxu0 0.0
    %568 = vmatpush1.msra.mxu0 0.0
    %569 = vmatprep.subr.mxu0 0.0
    %570 = vmatpush1.msra.mxu0 0.0
    %571 = vmatprep.subr.mxu0 0.0
    %572 = vmatpush1.msra.mxu0 0.0
    %573 = vmatprep.subr.mxu0 0.0
    %574 = vmatpush1.msra.mxu0 0.0
    %575 = vmatprep.subr.mxu0 0.0
    %576 = vmatpush1.msra.mxu0 0.0
    %577 = vmatprep.subr.mxu0 0.0
    %578 = vmatpush1.msra.mxu0 0.0
    %579 = vmatprep.subr.mxu0 0.0
    %580 = vmatpush1.msra.mxu0 0.0
    %581 = vmatprep.subr.mxu0 0.0
    %582 = vmatpush1.msra.mxu0 0.0
    %583 = vmatprep.subr.mxu0 0.0
    %584 = vmatpush1.msra.mxu0 0.0
    %585 = vmatprep.subr.mxu0 0.0
    %586 = vmatpush1.msra.mxu0 0.0
    %587 = vmatprep.subr.mxu0 0.0
    %588 = vmatpush1.msra.mxu0 0.0
    %589 = vmatprep.subr.mxu0 0.0
    %590 = vmatpush1.msra.mxu0 0.0
    %591 = vmatprep.subr.mxu0 0.0
    %592 = vmatpush1.msra.mxu0 0.0
    %593 = vmatprep.subr.mxu0 0.0
    %594 = vmatpush1.msra.mxu0 0.0
    %595 = vmatprep.subr.mxu0 0.0
    %596 = vmatpush1.msra.mxu0 0.0
    %597 = vmatprep.subr.mxu0 0.0
    %598 = vmatpush1.msra.mxu0 0.0
    %599 = vmatprep.subr.mxu0 0.0
    %600 = vmatpush1.msra.mxu0 0.0
    %601 = vmatprep.subr.mxu0 0.0
    %602 = vmatpush1.msra.mxu0 0.0
    %603 = vmatprep.mubr.f32.mxu0 0.0
    %604 = vmatmul.mubr.f32.gmra.mrb[0].mxu0 %v537
    %v605 = vpop.f32.mrb[0].mxu0
    %v606 = vadd.f32 0.0, %v605
    %v607 = vpop.f32.mrb[0].mxu0
    %608 = vdwg.mxu0
    %v609 = vadd.f32 %v536, %v606
    %v610 = vxor.u32 %v609, 2147483648
    %v611 = vmul.f32 %v610, 1.442695
    %v612 = vpow.pop %v611
    %v613 = vadd.f32 %v612, 1.0
    %v614 = vrcp.pop %v613
    %v615 = vmul.f32 1.0, %v614
    %v616 = vtanh.pop %v609
    %v617 = vmul.f32 %v615, %v524
    %619 = vrot.lane.b32.xlu0 %v616, 64
    %v620 = vpop.permute.xlu0 %619
    %v622 = vmul.f32 %v615, %v620
    %624 = vrot.lane.b32.xlu0 %v622, 32
    %v625 = vpop.permute.xlu0 %624
    %v627 = vadd.f32 %v617, %v625
    %v628 = vtanh.pop %v627
    %630 = vrot.lane.b32.xlu0 %v628, 64
    %v631 = vpop.permute.xlu0 %630
    %v633 = vmul.f32 %v615, %v631
    %635 = vrot.lane.b32.xlu0 %v633, 32
    %v636 = vpop.permute.xlu0 %635
    %638 = vst.msk [vmem:[#allocation3 + $0xc] sm:$0xf] %vm328, %v636
    %v639 = vld [vmem:[#allocation2 + $0x10] sm:$0xf]
    %v640 = vsel %vm225, %v636, 0
    %642 = vmatprep.subr.mxu0 0.0
    %643 = vmatpush1.msra.mxu0 %v220
    %644 = vmatprep.subr.mxu0 0.0
    %645 = vmatpush1.msra.mxu0 %v221
    %646 = vmatprep.subr.mxu0 0.0
    %647 = vmatpush1.msra.mxu0 %v222
    %648 = vmatprep.subr.mxu0 0.0
    %649 = vmatpush1.msra.mxu0 %v223
    %650 = vmatprep.subr.mxu0 0.0
    %651 = vmatpush1.msra.mxu0 0.0
    %652 = vmatprep.subr.mxu0 0.0
    %653 = vmatpush1.msra.mxu0 0.0
    %654 = vmatprep.subr.mxu0 0.0
    %655 = vmatpush1.msra.mxu0 0.0
    %656 = vmatprep.subr.mxu0 0.0
    %657 = vmatpush1.msra.mxu0 0.0
    %658 = vmatprep.subr.mxu0 0.0
    %659 = vmatpush1.msra.mxu0 0.0
    %660 = vmatprep.subr.mxu0 0.0
    %661 = vmatpush1.msra.mxu0 0.0
    %662 = vmatprep.subr.mxu0 0.0
    %663 = vmatpush1.msra.mxu0 0.0
    %664 = vmatprep.subr.mxu0 0.0
    %665 = vmatpush1.msra.mxu0 0.0
    %666 = vmatprep.subr.mxu0 0.0
    %667 = vmatpush1.msra.mxu0 0.0
    %668 = vmatprep.subr.mxu0 0.0
    %669 = vmatpush1.msra.mxu0 0.0
    %670 = vmatprep.subr.mxu0 0.0
    %671 = vmatpush1.msra.mxu0 0.0
    %672 = vmatprep.subr.mxu0 0.0
    %673 = vmatpush1.msra.mxu0 0.0
    %674 = vmatprep.subr.mxu0 0.0
    %675 = vmatpush1.msra.mxu0 0.0
    %676 = vmatprep.subr.mxu0 0.0
    %677 = vmatpush1.msra.mxu0 0.0
    %678 = vmatprep.subr.mxu0 0.0
    %679 = vmatpush1.msra.mxu0 0.0
    %680 = vmatprep.subr.mxu0 0.0
    %681 = vmatpush1.msra.mxu0 0.0
    %682 = vmatprep.subr.mxu0 0.0
    %683 = vmatpush1.msra.mxu0 0.0
    %684 = vmatprep.subr.mxu0 0.0
    %685 = vmatpush1.msra.mxu0 0.0
    %686 = vmatprep.subr.mxu0 0.0
    %687 = vmatpush1.msra.mxu0 0.0
    %688 = vmatprep.subr.mxu0 0.0
    %689 = vmatpush1.msra.mxu0 0.0
    %690 = vmatprep.subr.mxu0 0.0
    %691 = vmatpush1.msra.mxu0 0.0
    %692 = vmatprep.subr.mxu0 0.0
    %693 = vmatpush1.msra.mxu0 0.0
    %694 = vmatprep.subr.mxu0 0.0
    %695 = vmatpush1.msra.mxu0 0.0
    %696 = vmatprep.subr.mxu0 0.0
    %697 = vmatpush1.msra.mxu0 0.0
    %698 = vmatprep.subr.mxu0 0.0
    %699 = vmatpush1.msra.mxu0 0.0
    %700 = vmatprep.subr.mxu0 0.0
    %701 = vmatpush1.msra.mxu0 0.0
    %702 = vmatprep.subr.mxu0 0.0
    %703 = vmatpush1.msra.mxu0 0.0
    %704 = vmatprep.subr.mxu0 0.0
    %705 = vmatpush1.msra.mxu0 0.0
    %706 = vmatprep.mubr.f32.mxu0 0.0
    %707 = vmatmul.mubr.f32.gmra.mrb[0].mxu0 %v640
    %v708 = vpop.f32.mrb[0].mxu0
    %v709 = vadd.f32 0.0, %v708
    %v710 = vpop.f32.mrb[0].mxu0
    %711 = vdwg.mxu0
    %v712 = vadd.f32 %v639, %v709
    %v713 = vxor.u32 %v712, 2147483648
    %v714 = vmul.f32 %v713, 1.442695
    %v715 = vpow.pop %v714
    %v716 = vadd.f32 %v715, 1.0
    %v717 = vrcp.pop %v716
    %v718 = vmul.f32 1.0, %v717
    %v719 = vtanh.pop %v712
    %v720 = vmul.f32 %v718, %v627
    %722 = vrot.lane.b32.xlu0 %v719, 64
    %v723 = vpop.permute.xlu0 %722
    %v725 = vmul.f32 %v718, %v723
    %727 = vrot.lane.b32.xlu0 %v725, 32
    %v728 = vpop.permute.xlu0 %727
    %v730 = vadd.f32 %v720, %v728
    %v731 = vtanh.pop %v730
    %733 = vrot.lane.b32.xlu0 %v731, 64
    %v734 = vpop.permute.xlu0 %733
    %v736 = vmul.f32 %v718, %v734
    %738 = vrot.lane.b32.xlu0 %v736, 32
    %v739 = vpop.permute.xlu0 %738
    %741 = vst.msk [vmem:[#allocation3 + $0x10] sm:$0xf] %vm328, %v739
    %v742 = vld [vmem:[#allocation2 + $0x14] sm:$0xf]
    %v743 = vsel %vm225, %v739, 0
    %745 = vmatprep.subr.mxu0 0.0
    %746 = vmatpush1.msra.mxu0 %v220
    %747 = vmatprep.subr.mxu0 0.0
    %748 = vmatpush1.msra.mxu0 %v221
    %749 = vmatprep.subr.mxu0 0.0
    %750 = vmatpush1.msra.mxu0 %v222
    %751 = vmatprep.subr.mxu0 0.0
    %752 = vmatpush1.msra.mxu0 %v223
    %753 = vmatprep.subr.mxu0 0.0
    %754 = vmatpush1.msra.mxu0 0.0
    %755 = vmatprep.subr.mxu0 0.0
    %756 = vmatpush1.msra.mxu0 0.0
    %757 = vmatprep.subr.mxu0 0.0
    %758 = vmatpush1.msra.mxu0 0.0
    %759 = vmatprep.subr.mxu0 0.0
    %760 = vmatpush1.msra.mxu0 0.0
    %761 = vmatprep.subr.mxu0 0.0
    %762 = vmatpush1.msra.mxu0 0.0
    %763 = vmatprep.subr.mxu0 0.0
    %764 = vmatpush1.msra.mxu0 0.0
    %765 = vmatprep.subr.mxu0 0.0
    %766 = vmatpush1.msra.mxu0 0.0
    %767 = vmatprep.subr.mxu0 0.0
    %768 = vmatpush1.msra.mxu0 0.0
    %769 = vmatprep.subr.mxu0 0.0
    %770 = vmatpush1.msra.mxu0 0.0
    %771 = vmatprep.subr.mxu0 0.0
    %772 = vmatpush1.msra.mxu0 0.0
    %773 = vmatprep.subr.mxu0 0.0
    %774 = vmatpush1.msra.mxu0 0.0
    %775 = vmatprep.subr.mxu0 0.0
    %776 = vmatpush1.msra.mxu0 0.0
    %777 = vmatprep.subr.mxu0 0.0
    %778 = vmatpush1.msra.mxu0 0.0
    %779 = vmatprep.subr.mxu0 0.0
    %780 = vmatpush1.msra.mxu0 0.0
    %781 = vmatprep.subr.mxu0 0.0
    %782 = vmatpush1.msra.mxu0 0.0
    %783 = vmatprep.subr.mxu0 0.0
    %784 = vmatpush1.msra.mxu0 0.0
    %785 = vmatprep.subr.mxu0 0.0
    %786 = vmatpush1.msra.mxu0 0.0
    %787 = vmatprep.subr.mxu0 0.0
    %788 = vmatpush1.msra.mxu0 0.0
    %789 = vmatprep.subr.mxu0 0.0
    %790 = vmatpush1.msra.mxu0 0.0
    %791 = vmatprep.subr.mxu0 0.0
    %792 = vmatpush1.msra.mxu0 0.0
    %793 = vmatprep.subr.mxu0 0.0
    %794 = vmatpush1.msra.mxu0 0.0
    %795 = vmatprep.subr.mxu0 0.0
    %796 = vmatpush1.msra.mxu0 0.0
    %797 = vmatprep.subr.mxu0 0.0
    %798 = vmatpush1.msra.mxu0 0.0
    %799 = vmatprep.subr.mxu0 0.0
    %800 = vmatpush1.msra.mxu0 0.0
    %801 = vmatprep.subr.mxu0 0.0
    %802 = vmatpush1.msra.mxu0 0.0
    %803 = vmatprep.subr.mxu0 0.0
    %804 = vmatpush1.msra.mxu0 0.0
    %805 = vmatprep.subr.mxu0 0.0
    %806 = vmatpush1.msra.mxu0 0.0
    %807 = vmatprep.subr.mxu0 0.0
    %808 = vmatpush1.msra.mxu0 0.0
    %809 = vmatprep.mubr.f32.mxu0 0.0
    %810 = vmatmul.mubr.f32.gmra.mrb[0].mxu0 %v743
    %v811 = vpop.f32.mrb[0].mxu0
    %v812 = vadd.f32 0.0, %v811
    %v813 = vpop.f32.mrb[0].mxu0
    %814 = vdwg.mxu0
    %v815 = vadd.f32 %v742, %v812
    %v816 = vxor.u32 %v815, 2147483648
    %v817 = vmul.f32 %v816, 1.442695
    %v818 = vpow.pop %v817
    %v819 = vadd.f32 %v818, 1.0
    %v820 = vrcp.pop %v819
    %v821 = vmul.f32 1.0, %v820
    %v822 = vtanh.pop %v815
    %v823 = vmul.f32 %v821, %v730
    %825 = vrot.lane.b32.xlu0 %v822, 64
    %v826 = vpop.permute.xlu0 %825
    %v828 = vmul.f32 %v821, %v826
    %830 = vrot.lane.b32.xlu0 %v828, 32
    %v831 = vpop.permute.xlu0 %830
    %v833 = vadd.f32 %v823, %v831
    %v834 = vtanh.pop %v833
    %836 = vrot.lane.b32.xlu0 %v834, 64
    %v837 = vpop.permute.xlu0 %836
    %v839 = vmul.f32 %v821, %v837
    %841 = vrot.lane.b32.xlu0 %v839, 32
    %v842 = vpop.permute.xlu0 %841
    %844 = vst.msk [vmem:[#allocation3 + $0x14] sm:$0xf] %vm328, %v842
    %v845 = vld [vmem:[#allocation2 + $0x18] sm:$0xf]
    %v846 = vsel %vm225, %v842, 0
    %848 = vmatprep.subr.mxu0 0.0
    %849 = vmatpush1.msra.mxu0 %v220
    %850 = vmatprep.subr.mxu0 0.0
    %851 = vmatpush1.msra.mxu0 %v221
    %852 = vmatprep.subr.mxu0 0.0
    %853 = vmatpush1.msra.mxu0 %v222
    %854 = vmatprep.subr.mxu0 0.0
    %855 = vmatpush1.msra.mxu0 %v223
    %856 = vmatprep.subr.mxu0 0.0
    %857 = vmatpush1.msra.mxu0 0.0
    %858 = vmatprep.subr.mxu0 0.0
    %859 = vmatpush1.msra.mxu0 0.0
    %860 = vmatprep.subr.mxu0 0.0
    %861 = vmatpush1.msra.mxu0 0.0
    %862 = vmatprep.subr.mxu0 0.0
    %863 = vmatpush1.msra.mxu0 0.0
    %864 = vmatprep.subr.mxu0 0.0
    %865 = vmatpush1.msra.mxu0 0.0
    %866 = vmatprep.subr.mxu0 0.0
    %867 = vmatpush1.msra.mxu0 0.0
    %868 = vmatprep.subr.mxu0 0.0
    %869 = vmatpush1.msra.mxu0 0.0
    %870 = vmatprep.subr.mxu0 0.0
    %871 = vmatpush1.msra.mxu0 0.0
    %872 = vmatprep.subr.mxu0 0.0
    %873 = vmatpush1.msra.mxu0 0.0
    %874 = vmatprep.subr.mxu0 0.0
    %875 = vmatpush1.msra.mxu0 0.0
    %876 = vmatprep.subr.mxu0 0.0
    %877 = vmatpush1.msra.mxu0 0.0
    %878 = vmatprep.subr.mxu0 0.0
    %879 = vmatpush1.msra.mxu0 0.0
    %880 = vmatprep.subr.mxu0 0.0
    %881 = vmatpush1.msra.mxu0 0.0
    %882 = vmatprep.subr.mxu0 0.0
    %883 = vmatpush1.msra.mxu0 0.0
    %884 = vmatprep.subr.mxu0 0.0
    %885 = vmatpush1.msra.mxu0 0.0
    %886 = vmatprep.subr.mxu0 0.0
    %887 = vmatpush1.msra.mxu0 0.0
    %888 = vmatprep.subr.mxu0 0.0
    %889 = vmatpush1.msra.mxu0 0.0
    %890 = vmatprep.subr.mxu0 0.0
    %891 = vmatpush1.msra.mxu0 0.0
    %892 = vmatprep.subr.mxu0 0.0
    %893 = vmatpush1.msra.mxu0 0.0
    %894 = vmatprep.subr.mxu0 0.0
    %895 = vmatpush1.msra.mxu0 0.0
    %896 = vmatprep.subr.mxu0 0.0
    %897 = vmatpush1.msra.mxu0 0.0
    %898 = vmatprep.subr.mxu0 0.0
    %899 = vmatpush1.msra.mxu0 0.0
    %900 = vmatprep.subr.mxu0 0.0
    %901 = vmatpush1.msra.mxu0 0.0
    %902 = vmatprep.subr.mxu0 0.0
    %903 = vmatpush1.msra.mxu0 0.0
    %904 = vmatprep.subr.mxu0 0.0
    %905 = vmatpush1.msra.mxu0 0.0
    %906 = vmatprep.subr.mxu0 0.0
    %907 = vmatpush1.msra.mxu0 0.0
    %908 = vmatprep.subr.mxu0 0.0
    %909 = vmatpush1.msra.mxu0 0.0
    %910 = vmatprep.subr.mxu0 0.0
    %911 = vmatpush1.msra.mxu0 0.0
    %912 = vmatprep.mubr.f32.mxu0 0.0
    %913 = vmatmul.mubr.f32.gmra.mrb[0].mxu0 %v846
    %v914 = vpop.f32.mrb[0].mxu0
    %v915 = vadd.f32 0.0, %v914
    %v916 = vpop.f32.mrb[0].mxu0
    %917 = vdwg.mxu0
    %v918 = vadd.f32 %v845, %v915
    %v919 = vxor.u32 %v918, 2147483648
    %v920 = vmul.f32 %v919, 1.442695
    %v921 = vpow.pop %v920
    %v922 = vadd.f32 %v921, 1.0
    %v923 = vrcp.pop %v922
    %v924 = vmul.f32 1.0, %v923
    %v925 = vtanh.pop %v918
    %v926 = vmul.f32 %v924, %v833
    %928 = vrot.lane.b32.xlu0 %v925, 64
    %v929 = vpop.permute.xlu0 %928
    %v931 = vmul.f32 %v924, %v929
    %933 = vrot.lane.b32.xlu0 %v931, 32
    %v934 = vpop.permute.xlu0 %933
    %v936 = vadd.f32 %v926, %v934
    %v937 = vtanh.pop %v936
    %939 = vrot.lane.b32.xlu0 %v937, 64
    %v940 = vpop.permute.xlu0 %939
    %v942 = vmul.f32 %v924, %v940
    %944 = vrot.lane.b32.xlu0 %v942, 32
    %v945 = vpop.permute.xlu0 %944
    %947 = vst.msk [vmem:[#allocation3 + $0x18] sm:$0xf] %vm328, %v945
    %v948 = vld [vmem:[#allocation2 + $0x1c] sm:$0xf]
    %v949 = vsel %vm225, %v945, 0
    %951 = vmatprep.subr.mxu0 0.0
    %952 = vmatpush1.msra.mxu0 %v220
    %953 = vmatprep.subr.mxu0 0.0
    %954 = vmatpush1.msra.mxu0 %v221
    %955 = vmatprep.subr.mxu0 0.0
    %956 = vmatpush1.msra.mxu0 %v222
    %957 = vmatprep.subr.mxu0 0.0
    %958 = vmatpush1.msra.mxu0 %v223
    %959 = vmatprep.subr.mxu0 0.0
    %960 = vmatpush1.msra.mxu0 0.0
    %961 = vmatprep.subr.mxu0 0.0
    %962 = vmatpush1.msra.mxu0 0.0
    %963 = vmatprep.subr.mxu0 0.0
    %964 = vmatpush1.msra.mxu0 0.0
    %965 = vmatprep.subr.mxu0 0.0
    %966 = vmatpush1.msra.mxu0 0.0
    %967 = vmatprep.subr.mxu0 0.0
    %968 = vmatpush1.msra.mxu0 0.0
    %969 = vmatprep.subr.mxu0 0.0
    %970 = vmatpush1.msra.mxu0 0.0
    %971 = vmatprep.subr.mxu0 0.0
    %972 = vmatpush1.msra.mxu0 0.0
    %973 = vmatprep.subr.mxu0 0.0
    %974 = vmatpush1.msra.mxu0 0.0
    %975 = vmatprep.subr.mxu0 0.0
    %976 = vmatpush1.msra.mxu0 0.0
    %977 = vmatprep.subr.mxu0 0.0
    %978 = vmatpush1.msra.mxu0 0.0
    %979 = vmatprep.subr.mxu0 0.0
    %980 = vmatpush1.msra.mxu0 0.0
    %981 = vmatprep.subr.mxu0 0.0
    %982 = vmatpush1.msra.mxu0 0.0
    %983 = vmatprep.subr.mxu0 0.0
    %984 = vmatpush1.msra.mxu0 0.0
    %985 = vmatprep.subr.mxu0 0.0
    %986 = vmatpush1.msra.mxu0 0.0
    %987 = vmatprep.subr.mxu0 0.0
    %988 = vmatpush1.msra.mxu0 0.0
    %989 = vmatprep.subr.mxu0 0.0
    %990 = vmatpush1.msra.mxu0 0.0
    %991 = vmatprep.subr.mxu0 0.0
    %992 = vmatpush1.msra.mxu0 0.0
    %993 = vmatprep.subr.mxu0 0.0
    %994 = vmatpush1.msra.mxu0 0.0
    %995 = vmatprep.subr.mxu0 0.0
    %996 = vmatpush1.msra.mxu0 0.0
    %997 = vmatprep.subr.mxu0 0.0
    %998 = vmatpush1.msra.mxu0 0.0
    %999 = vmatprep.subr.mxu0 0.0
    %1000 = vmatpush1.msra.mxu0 0.0
    %1001 = vmatprep.subr.mxu0 0.0
    %1002 = vmatpush1.msra.mxu0 0.0
    %1003 = vmatprep.subr.mxu0 0.0
    %1004 = vmatpush1.msra.mxu0 0.0
    %1005 = vmatprep.subr.mxu0 0.0
    %1006 = vmatpush1.msra.mxu0 0.0
    %1007 = vmatprep.subr.mxu0 0.0
    %1008 = vmatpush1.msra.mxu0 0.0
    %1009 = vmatprep.subr.mxu0 0.0
    %1010 = vmatpush1.msra.mxu0 0.0
    %1011 = vmatprep.subr.mxu0 0.0
    %1012 = vmatpush1.msra.mxu0 0.0
    %1013 = vmatprep.subr.mxu0 0.0
    %1014 = vmatpush1.msra.mxu0 0.0
    %1015 = vmatprep.mubr.f32.mxu0 0.0
    %1016 = vmatmul.mubr.f32.gmra.mrb[0].mxu0 %v949
    %v1017 = vpop.f32.mrb[0].mxu0
    %v1018 = vadd.f32 0.0, %v1017
    %v1019 = vpop.f32.mrb[0].mxu0
    %1020 = vdwg.mxu0
    %v1021 = vadd.f32 %v948, %v1018
    %v1022 = vxor.u32 %v1021, 2147483648
    %v1023 = vmul.f32 %v1022, 1.442695
    %v1024 = vpow.pop %v1023
    %v1025 = vadd.f32 %v1024, 1.0
    %v1026 = vrcp.pop %v1025
    %v1027 = vmul.f32 1.0, %v1026
    %v1028 = vtanh.pop %v1021
    %v1029 = vmul.f32 %v1027, %v936
    %1031 = vrot.lane.b32.xlu0 %v1028, 64
    %v1032 = vpop.permute.xlu0 %1031
    %v1034 = vmul.f32 %v1027, %v1032
    %1036 = vrot.lane.b32.xlu0 %v1034, 32
    %v1037 = vpop.permute.xlu0 %1036
    %v1039 = vadd.f32 %v1029, %v1037
    %v1040 = vtanh.pop %v1039
    %1042 = vrot.lane.b32.xlu0 %v1040, 64
    %v1043 = vpop.permute.xlu0 %1042
    %v1045 = vmul.f32 %v1027, %v1043
    %1047 = vrot.lane.b32.xlu0 %v1045, 32
    %v1048 = vpop.permute.xlu0 %1047
    %1050 = vst.msk [vmem:[#allocation3 + $0x1c] sm:$0xf] %vm328, %v1048
    %v1051 = vld [vmem:[#allocation3] sm:$0xff]
    %v1052 = vld [vmem:[#allocation3 + $0x8] sm:$0xff]
    %v1053 = vld [vmem:[#allocation3 + $0x10] sm:$0xff]
    %v1054 = vld [vmem:[#allocation3 + $0x18] sm:$0xff]
    %v1055 = vld [vmem:[%s4] sm:$0xff]
    %v1056 = vld [vmem:[%s4 + $0x8] sm:$0xff]
    %v1057 = vld [vmem:[%s4 + $0x10] sm:$0xff]
    %v1058 = vld [vmem:[%s4 + $0x18] sm:$0xff]
    %v1059 = vld [vmem:[%s6] sm:$0x1]
    %v1061 = vlaneseq
    %v1062 = vshrl.u32 %v1061, 7
    %v1063 = vsub.s32 0, %v1062
    %v1064 = vrot.slane %v1059, %v1063
    %v1067 = vsel %vm225, %v1051, 0
    %v1070 = vsel %vm225, %v1052, 0
    %v1073 = vsel %vm225, %v1053, 0
    %v1076 = vsel %vm225, %v1054, 0
    %1078 = vmatprep.subr.mxu0 0.0
    %1079 = vmatpush1.msra.mxu0 %v1055
    %1080 = vmatprep.subr.mxu0 0.0
    %1081 = vmatpush1.msra.mxu0 %v1056
    %1082 = vmatprep.subr.mxu0 0.0
    %1083 = vmatpush1.msra.mxu0 %v1057
    %1084 = vmatprep.subr.mxu0 0.0
    %1085 = vmatpush1.msra.mxu0 %v1058
    %1086 = vmatprep.subr.mxu0 0.0
    %1087 = vmatpush1.msra.mxu0 0.0
    %1088 = vmatprep.subr.mxu0 0.0
    %1089 = vmatpush1.msra.mxu0 0.0
    %1090 = vmatprep.subr.mxu0 0.0
    %1091 = vmatpush1.msra.mxu0 0.0
    %1092 = vmatprep.subr.mxu0 0.0
    %1093 = vmatpush1.msra.mxu0 0.0
    %1094 = vmatprep.subr.mxu0 0.0
    %1095 = vmatpush1.msra.mxu0 0.0
    %1096 = vmatprep.subr.mxu0 0.0
    %1097 = vmatpush1.msra.mxu0 0.0
    %1098 = vmatprep.subr.mxu0 0.0
    %1099 = vmatpush1.msra.mxu0 0.0
    %1100 = vmatprep.subr.mxu0 0.0
    %1101 = vmatpush1.msra.mxu0 0.0
    %1102 = vmatprep.subr.mxu0 0.0
    %1103 = vmatpush1.msra.mxu0 0.0
    %1104 = vmatprep.subr.mxu0 0.0
    %1105 = vmatpush1.msra.mxu0 0.0
    %1106 = vmatprep.subr.mxu0 0.0
    %1107 = vmatpush1.msra.mxu0 0.0
    %1108 = vmatprep.subr.mxu0 0.0
    %1109 = vmatpush1.msra.mxu0 0.0
    %1110 = vmatprep.subr.mxu0 0.0
    %1111 = vmatpush1.msra.mxu0 0.0
    %1112 = vmatprep.subr.mxu0 0.0
    %1113 = vmatpush1.msra.mxu0 0.0
    %1114 = vmatprep.subr.mxu0 0.0
    %1115 = vmatpush1.msra.mxu0 0.0
    %1116 = vmatprep.subr.mxu0 0.0
    %1117 = vmatpush1.msra.mxu0 0.0
    %1118 = vmatprep.subr.mxu0 0.0
    %1119 = vmatpush1.msra.mxu0 0.0
    %1120 = vmatprep.subr.mxu0 0.0
    %1121 = vmatpush1.msra.mxu0 0.0
    %1122 = vmatprep.subr.mxu0 0.0
    %1123 = vmatpush1.msra.mxu0 0.0
    %1124 = vmatprep.subr.mxu0 0.0
    %1125 = vmatpush1.msra.mxu0 0.0
    %1126 = vmatprep.subr.mxu0 0.0
    %1127 = vmatpush1.msra.mxu0 0.0
    %1128 = vmatprep.subr.mxu0 0.0
    %1129 = vmatpush1.msra.mxu0 0.0
    %1130 = vmatprep.subr.mxu0 0.0
    %1131 = vmatpush1.msra.mxu0 0.0
    %1132 = vmatprep.subr.mxu0 0.0
    %1133 = vmatpush1.msra.mxu0 0.0
    %1134 = vmatprep.subr.mxu0 0.0
    %1135 = vmatpush1.msra.mxu0 0.0
    %1136 = vmatprep.subr.mxu0 0.0
    %1137 = vmatpush1.msra.mxu0 0.0
    %1138 = vmatprep.subr.mxu0 0.0
    %1139 = vmatpush1.msra.mxu0 0.0
    %1140 = vmatprep.subr.mxu0 0.0
    %1141 = vmatpush1.msra.mxu0 0.0
    %1142 = vmatprep.mubr.f32.mxu0 0.0
    %1143 = vmatmul.mubr.f32.gmra.mrb[0].mxu0 %v1067
    %v1144 = vpop.f32.mrb[0].mxu0
    %v1145 = vadd.f32 %v1064, %v1144
    %v1146 = vpop.f32.mrb[0].mxu0
    %1147 = vmatprep.mubr.f32.mxu0 0.0
    %1148 = vmatmul.mubr.f32.gmra.mrb[0].mxu0 %v1070
    %v1149 = vpop.f32.mrb[0].mxu0
    %v1150 = vadd.f32 %v1064, %v1149
    %v1151 = vpop.f32.mrb[0].mxu0
    %1152 = vmatprep.mubr.f32.mxu0 0.0
    %1153 = vmatmul.mubr.f32.gmra.mrb[0].mxu0 %v1073
    %v1154 = vpop.f32.mrb[0].mxu0
    %v1155 = vadd.f32 %v1064, %v1154
    %v1156 = vpop.f32.mrb[0].mxu0
    %1157 = vmatprep.mubr.f32.mxu0 0.0
    %1158 = vmatmul.mubr.f32.gmra.mrb[0].mxu0 %v1076
    %v1159 = vpop.f32.mrb[0].mxu0
    %v1160 = vadd.f32 %v1064, %v1159
    %v1161 = vpop.f32.mrb[0].mxu0
    %1162 = vdwg.mxu0
    %1163 = vst [vmem:[#allocation2] sm:$0xff] %v1145
    %1164 = vst [vmem:[#allocation2 + $0x8] sm:$0xff] %v1150
    %1165 = vst [vmem:[#allocation2 + $0x10] sm:$0xff] %v1155
    %1166 = vst [vmem:[#allocation2 + $0x18] sm:$0xff] %v1160
    %v1167 = vld [vmem:[%s5] sm:$0xff]
    %v1168 = vld [vmem:[%s5 + $0x8] sm:$0xff]
    %v1169 = vld [vmem:[%s5 + $0x10] sm:$0xff]
    %v1170 = vld [vmem:[%s5 + $0x18] sm:$0xff]
    %v1171 = vld [vmem:[#allocation2] sm:$0xf]
    %1172 = vmatprep.subr.mxu0 0.0
    %1173 = vmatpush1.msra.mxu0 %v1167
    %1174 = vmatprep.subr.mxu0 0.0
    %1175 = vmatpush1.msra.mxu0 %v1168
    %1176 = vmatprep.subr.mxu0 0.0
    %1177 = vmatpush1.msra.mxu0 %v1169
    %1178 = vmatprep.subr.mxu0 0.0
    %1179 = vmatpush1.msra.mxu0 %v1170
    %1180 = vmatprep.subr.mxu0 0.0
    %1181 = vmatpush1.msra.mxu0 0.0
    %1182 = vmatprep.subr.mxu0 0.0
    %1183 = vmatpush1.msra.mxu0 0.0
    %1184 = vmatprep.subr.mxu0 0.0
    %1185 = vmatpush1.msra.mxu0 0.0
    %1186 = vmatprep.subr.mxu0 0.0
    %1187 = vmatpush1.msra.mxu0 0.0
    %1188 = vmatprep.subr.mxu0 0.0
    %1189 = vmatpush1.msra.mxu0 0.0
    %1190 = vmatprep.subr.mxu0 0.0
    %1191 = vmatpush1.msra.mxu0 0.0
    %1192 = vmatprep.subr.mxu0 0.0
    %1193 = vmatpush1.msra.mxu0 0.0
    %1194 = vmatprep.subr.mxu0 0.0
    %1195 = vmatpush1.msra.mxu0 0.0
    %1196 = vmatprep.subr.mxu0 0.0
    %1197 = vmatpush1.msra.mxu0 0.0
    %1198 = vmatprep.subr.mxu0 0.0
    %1199 = vmatpush1.msra.mxu0 0.0
    %1200 = vmatprep.subr.mxu0 0.0
    %1201 = vmatpush1.msra.mxu0 0.0
    %1202 = vmatprep.subr.mxu0 0.0
    %1203 = vmatpush1.msra.mxu0 0.0
    %1204 = vmatprep.subr.mxu0 0.0
    %1205 = vmatpush1.msra.mxu0 0.0
    %1206 = vmatprep.subr.mxu0 0.0
    %1207 = vmatpush1.msra.mxu0 0.0
    %1208 = vmatprep.subr.mxu0 0.0
    %1209 = vmatpush1.msra.mxu0 0.0
    %1210 = vmatprep.subr.mxu0 0.0
    %1211 = vmatpush1.msra.mxu0 0.0
    %1212 = vmatprep.subr.mxu0 0.0
    %1213 = vmatpush1.msra.mxu0 0.0
    %1214 = vmatprep.subr.mxu0 0.0
    %1215 = vmatpush1.msra.mxu0 0.0
    %1216 = vmatprep.subr.mxu0 0.0
    %1217 = vmatpush1.msra.mxu0 0.0
    %1218 = vmatprep.subr.mxu0 0.0
    %1219 = vmatpush1.msra.mxu0 0.0
    %1220 = vmatprep.subr.mxu0 0.0
    %1221 = vmatpush1.msra.mxu0 0.0
    %1222 = vmatprep.subr.mxu0 0.0
    %1223 = vmatpush1.msra.mxu0 0.0
    %1224 = vmatprep.subr.mxu0 0.0
    %1225 = vmatpush1.msra.mxu0 0.0
    %1226 = vmatprep.subr.mxu0 0.0
    %1227 = vmatpush1.msra.mxu0 0.0
    %1228 = vmatprep.subr.mxu0 0.0
    %1229 = vmatpush1.msra.mxu0 0.0
    %1230 = vmatprep.subr.mxu0 0.0
    %1231 = vmatpush1.msra.mxu0 0.0
    %1232 = vmatprep.subr.mxu0 0.0
    %1233 = vmatpush1.msra.mxu0 0.0
    %1234 = vmatprep.subr.mxu0 0.0
    %1235 = vmatpush1.msra.mxu0 0.0
    %1236 = vmatprep.mubr.f32.mxu0 0.0
    %1237 = vmatmul.mubr.f32.gmra.mrb[0].mxu0 %v227
    %v1238 = vpop.f32.mrb[0].mxu0
    %v1239 = vadd.f32 0.0, %v1238
    %v1240 = vpop.f32.mrb[0].mxu0
    %1241 = vdwg.mxu0
    %v1242 = vadd.f32 %v1171, %v1239
    %v1243 = vxor.u32 %v1242, 2147483648
    %v1244 = vmul.f32 %v1243, 1.442695
    %v1245 = vpow.pop %v1244
    %v1246 = vadd.f32 %v1245, 1.0
    %v1247 = vrcp.pop %v1246
    %v1248 = vmul.f32 1.0, %v1247
    %v1249 = vtanh.pop %v1242
    %v1250 = vmul.f32 %v1248, 0.0
    %1252 = vrot.lane.b32.xlu0 %v1249, 64
    %v1253 = vpop.permute.xlu0 %1252
    %v1255 = vmul.f32 %v1248, %v1253
    %1257 = vrot.lane.b32.xlu0 %v1255, 32
    %v1258 = vpop.permute.xlu0 %1257
    %v1260 = vadd.f32 %v1250, %v1258
    %v1261 = vtanh.pop %v1260
    %1263 = vrot.lane.b32.xlu0 %v1261, 64
    %v1264 = vpop.permute.xlu0 %1263
    %v1266 = vmul.f32 %v1248, %v1264
    %1268 = vrot.lane.b32.xlu0 %v1266, 32
    %v1269 = vpop.permute.xlu0 %1268
    %1271 = vst.msk [vmem:[#allocation3] sm:$0xf] %vm328, %v1269
    %v1272 = vld [vmem:[#allocation2 + $0x4] sm:$0xf]
    %v1273 = vsel %vm225, %v1269, 0
    %1275 = vmatprep.subr.mxu0 0.0
    %1276 = vmatpush1.msra.mxu0 %v1167
    %1277 = vmatprep.subr.mxu0 0.0
    %1278 = vmatpush1.msra.mxu0 %v1168
    %1279 = vmatprep.subr.mxu0 0.0
    %1280 = vmatpush1.msra.mxu0 %v1169
    %1281 = vmatprep.subr.mxu0 0.0
    %1282 = vmatpush1.msra.mxu0 %v1170
    %1283 = vmatprep.subr.mxu0 0.0
    %1284 = vmatpush1.msra.mxu0 0.0
    %1285 = vmatprep.subr.mxu0 0.0
    %1286 = vmatpush1.msra.mxu0 0.0
    %1287 = vmatprep.subr.mxu0 0.0
    %1288 = vmatpush1.msra.mxu0 0.0
    %1289 = vmatprep.subr.mxu0 0.0
    %1290 = vmatpush1.msra.mxu0 0.0
    %1291 = vmatprep.subr.mxu0 0.0
    %1292 = vmatpush1.msra.mxu0 0.0
    %1293 = vmatprep.subr.mxu0 0.0
    %1294 = vmatpush1.msra.mxu0 0.0
    %1295 = vmatprep.subr.mxu0 0.0
    %1296 = vmatpush1.msra.mxu0 0.0
    %1297 = vmatprep.subr.mxu0 0.0
    %1298 = vmatpush1.msra.mxu0 0.0
    %1299 = vmatprep.subr.mxu0 0.0
    %1300 = vmatpush1.msra.mxu0 0.0
    %1301 = vmatprep.subr.mxu0 0.0
    %1302 = vmatpush1.msra.mxu0 0.0
    %1303 = vmatprep.subr.mxu0 0.0
    %1304 = vmatpush1.msra.mxu0 0.0
    %1305 = vmatprep.subr.mxu0 0.0
    %1306 = vmatpush1.msra.mxu0 0.0
    %1307 = vmatprep.subr.mxu0 0.0
    %1308 = vmatpush1.msra.mxu0 0.0
    %1309 = vmatprep.subr.mxu0 0.0
    %1310 = vmatpush1.msra.mxu0 0.0
    %1311 = vmatprep.subr.mxu0 0.0
    %1312 = vmatpush1.msra.mxu0 0.0
    %1313 = vmatprep.subr.mxu0 0.0
    %1314 = vmatpush1.msra.mxu0 0.0
    %1315 = vmatprep.subr.mxu0 0.0
    %1316 = vmatpush1.msra.mxu0 0.0
    %1317 = vmatprep.subr.mxu0 0.0
    %1318 = vmatpush1.msra.mxu0 0.0
    %1319 = vmatprep.subr.mxu0 0.0
    %1320 = vmatpush1.msra.mxu0 0.0
    %1321 = vmatprep.subr.mxu0 0.0
    %1322 = vmatpush1.msra.mxu0 0.0
    %1323 = vmatprep.subr.mxu0 0.0
    %1324 = vmatpush1.msra.mxu0 0.0
    %1325 = vmatprep.subr.mxu0 0.0
    %1326 = vmatpush1.msra.mxu0 0.0
    %1327 = vmatprep.subr.mxu0 0.0
    %1328 = vmatpush1.msra.mxu0 0.0
    %1329 = vmatprep.subr.mxu0 0.0
    %1330 = vmatpush1.msra.mxu0 0.0
    %1331 = vmatprep.subr.mxu0 0.0
    %1332 = vmatpush1.msra.mxu0 0.0
    %1333 = vmatprep.subr.mxu0 0.0
    %1334 = vmatpush1.msra.mxu0 0.0
    %1335 = vmatprep.subr.mxu0 0.0
    %1336 = vmatpush1.msra.mxu0 0.0
    %1337 = vmatprep.subr.mxu0 0.0
    %1338 = vmatpush1.msra.mxu0 0.0
    %1339 = vmatprep.mubr.f32.mxu0 0.0
    %1340 = vmatmul.mubr.f32.gmra.mrb[0].mxu0 %v1273
    %v1341 = vpop.f32.mrb[0].mxu0
    %v1342 = vadd.f32 0.0, %v1341
    %v1343 = vpop.f32.mrb[0].mxu0
    %1344 = vdwg.mxu0
    %v1345 = vadd.f32 %v1272, %v1342
    %v1346 = vxor.u32 %v1345, 2147483648
    %v1347 = vmul.f32 %v1346, 1.442695
    %v1348 = vpow.pop %v1347
    %v1349 = vadd.f32 %v1348, 1.0
    %v1350 = vrcp.pop %v1349
    %v1351 = vmul.f32 1.0, %v1350
    %v1352 = vtanh.pop %v1345
    %v1353 = vmul.f32 %v1351, %v1260
    %1355 = vrot.lane.b32.xlu0 %v1352, 64
    %v1356 = vpop.permute.xlu0 %1355
    %v1358 = vmul.f32 %v1351, %v1356
    %1360 = vrot.lane.b32.xlu0 %v1358, 32
    %v1361 = vpop.permute.xlu0 %1360
    %v1363 = vadd.f32 %v1353, %v1361
    %v1364 = vtanh.pop %v1363
    %1366 = vrot.lane.b32.xlu0 %v1364, 64
    %v1367 = vpop.permute.xlu0 %1366
    %v1369 = vmul.f32 %v1351, %v1367
    %1371 = vrot.lane.b32.xlu0 %v1369, 32
    %v1372 = vpop.permute.xlu0 %1371
    %1374 = vst.msk [vmem:[#allocation3 + $0x4] sm:$0xf] %vm328, %v1372
    %v1375 = vld [vmem:[#allocation2 + $0x8] sm:$0xf]
    %v1376 = vsel %vm225, %v1372, 0
    %1378 = vmatprep.subr.mxu0 0.0
    %1379 = vmatpush1.msra.mxu0 %v1167
    %1380 = vmatprep.subr.mxu0 0.0
    %1381 = vmatpush1.msra.mxu0 %v1168
    %1382 = vmatprep.subr.mxu0 0.0
    %1383 = vmatpush1.msra.mxu0 %v1169
    %1384 = vmatprep.subr.mxu0 0.0
    %1385 = vmatpush1.msra.mxu0 %v1170
    %1386 = vmatprep.subr.mxu0 0.0
    %1387 = vmatpush1.msra.mxu0 0.0
    %1388 = vmatprep.subr.mxu0 0.0
    %1389 = vmatpush1.msra.mxu0 0.0
    %1390 = vmatprep.subr.mxu0 0.0
    %1391 = vmatpush1.msra.mxu0 0.0
    %1392 = vmatprep.subr.mxu0 0.0
    %1393 = vmatpush1.msra.mxu0 0.0
    %1394 = vmatprep.subr.mxu0 0.0
    %1395 = vmatpush1.msra.mxu0 0.0
    %1396 = vmatprep.subr.mxu0 0.0
    %1397 = vmatpush1.msra.mxu0 0.0
    %1398 = vmatprep.subr.mxu0 0.0
    %1399 = vmatpush1.msra.mxu0 0.0
    %1400 = vmatprep.subr.mxu0 0.0
    %1401 = vmatpush1.msra.mxu0 0.0
    %1402 = vmatprep.subr.mxu0 0.0
    %1403 = vmatpush1.msra.mxu0 0.0
    %1404 = vmatprep.subr.mxu0 0.0
    %1405 = vmatpush1.msra.mxu0 0.0
    %1406 = vmatprep.subr.mxu0 0.0
    %1407 = vmatpush1.msra.mxu0 0.0
    %1408 = vmatprep.subr.mxu0 0.0
    %1409 = vmatpush1.msra.mxu0 0.0
    %1410 = vmatprep.subr.mxu0 0.0
    %1411 = vmatpush1.msra.mxu0 0.0
    %1412 = vmatprep.subr.mxu0 0.0
    %1413 = vmatpush1.msra.mxu0 0.0
    %1414 = vmatprep.subr.mxu0 0.0
    %1415 = vmatpush1.msra.mxu0 0.0
    %1416 = vmatprep.subr.mxu0 0.0
    %1417 = vmatpush1.msra.mxu0 0.0
    %1418 = vmatprep.subr.mxu0 0.0
    %1419 = vmatpush1.msra.mxu0 0.0
    %1420 = vmatprep.subr.mxu0 0.0
    %1421 = vmatpush1.msra.mxu0 0.0
    %1422 = vmatprep.subr.mxu0 0.0
    %1423 = vmatpush1.msra.mxu0 0.0
    %1424 = vmatprep.subr.mxu0 0.0
    %1425 = vmatpush1.msra.mxu0 0.0
    %1426 = vmatprep.subr.mxu0 0.0
    %1427 = vmatpush1.msra.mxu0 0.0
    %1428 = vmatprep.subr.mxu0 0.0
    %1429 = vmatpush1.msra.mxu0 0.0
    %1430 = vmatprep.subr.mxu0 0.0
    %1431 = vmatpush1.msra.mxu0 0.0
    %1432 = vmatprep.subr.mxu0 0.0
    %1433 = vmatpush1.msra.mxu0 0.0
    %1434 = vmatprep.subr.mxu0 0.0
    %1435 = vmatpush1.msra.mxu0 0.0
    %1436 = vmatprep.subr.mxu0 0.0
    %1437 = vmatpush1.msra.mxu0 0.0
    %1438 = vmatprep.subr.mxu0 0.0
    %1439 = vmatpush1.msra.mxu0 0.0
    %1440 = vmatprep.subr.mxu0 0.0
    %1441 = vmatpush1.msra.mxu0 0.0
    %1442 = vmatprep.mubr.f32.mxu0 0.0
    %1443 = vmatmul.mubr.f32.gmra.mrb[0].mxu0 %v1376
    %v1444 = vpop.f32.mrb[0].mxu0
    %v1445 = vadd.f32 0.0, %v1444
    %v1446 = vpop.f32.mrb[0].mxu0
    %1447 = vdwg.mxu0
    %v1448 = vadd.f32 %v1375, %v1445
    %v1449 = vxor.u32 %v1448, 2147483648
    %v1450 = vmul.f32 %v1449, 1.442695
    %v1451 = vpow.pop %v1450
    %v1452 = vadd.f32 %v1451, 1.0
    %v1453 = vrcp.pop %v1452
    %v1454 = vmul.f32 1.0, %v1453
    %v1455 = vtanh.pop %v1448
    %v1456 = vmul.f32 %v1454, %v1363
    %1458 = vrot.lane.b32.xlu0 %v1455, 64
    %v1459 = vpop.permute.xlu0 %1458
    %v1461 = vmul.f32 %v1454, %v1459
    %1463 = vrot.lane.b32.xlu0 %v1461, 32
    %v1464 = vpop.permute.xlu0 %1463
    %v1466 = vadd.f32 %v1456, %v1464
    %v1467 = vtanh.pop %v1466
    %1469 = vrot.lane.b32.xlu0 %v1467, 64
    %v1470 = vpop.permute.xlu0 %1469
    %v1472 = vmul.f32 %v1454, %v1470
    %1474 = vrot.lane.b32.xlu0 %v1472, 32
    %v1475 = vpop.permute.xlu0 %1474
    %1477 = vst.msk [vmem:[#allocation3 + $0x8] sm:$0xf] %vm328, %v1475
    %v1478 = vld [vmem:[#allocation2 + $0xc] sm:$0xf]
    %v1479 = vsel %vm225, %v1475, 0
    %1481 = vmatprep.subr.mxu0 0.0
    %1482 = vmatpush1.msra.mxu0 %v1167
    %1483 = vmatprep.subr.mxu0 0.0
    %1484 = vmatpush1.msra.mxu0 %v1168
    %1485 = vmatprep.subr.mxu0 0.0
    %1486 = vmatpush1.msra.mxu0 %v1169
    %1487 = vmatprep.subr.mxu0 0.0
    %1488 = vmatpush1.msra.mxu0 %v1170
    %1489 = vmatprep.subr.mxu0 0.0
    %1490 = vmatpush1.msra.mxu0 0.0
    %1491 = vmatprep.subr.mxu0 0.0
    %1492 = vmatpush1.msra.mxu0 0.0
    %1493 = vmatprep.subr.mxu0 0.0
    %1494 = vmatpush1.msra.mxu0 0.0
    %1495 = vmatprep.subr.mxu0 0.0
    %1496 = vmatpush1.msra.mxu0 0.0
    %1497 = vmatprep.subr.mxu0 0.0
    %1498 = vmatpush1.msra.mxu0 0.0
    %1499 = vmatprep.subr.mxu0 0.0
    %1500 = vmatpush1.msra.mxu0 0.0
    %1501 = vmatprep.subr.mxu0 0.0
    %1502 = vmatpush1.msra.mxu0 0.0
    %1503 = vmatprep.subr.mxu0 0.0
    %1504 = vmatpush1.msra.mxu0 0.0
    %1505 = vmatprep.subr.mxu0 0.0
    %1506 = vmatpush1.msra.mxu0 0.0
    %1507 = vmatprep.subr.mxu0 0.0
    %1508 = vmatpush1.msra.mxu0 0.0
    %1509 = vmatprep.subr.mxu0 0.0
    %1510 = vmatpush1.msra.mxu0 0.0
    %1511 = vmatprep.subr.mxu0 0.0
    %1512 = vmatpush1.msra.mxu0 0.0
    %1513 = vmatprep.subr.mxu0 0.0
    %1514 = vmatpush1.msra.mxu0 0.0
    %1515 = vmatprep.subr.mxu0 0.0
    %1516 = vmatpush1.msra.mxu0 0.0
    %1517 = vmatprep.subr.mxu0 0.0
    %1518 = vmatpush1.msra.mxu0 0.0
    %1519 = vmatprep.subr.mxu0 0.0
    %1520 = vmatpush1.msra.mxu0 0.0
    %1521 = vmatprep.subr.mxu0 0.0
    %1522 = vmatpush1.msra.mxu0 0.0
    %1523 = vmatprep.subr.mxu0 0.0
    %1524 = vmatpush1.msra.mxu0 0.0
    %1525 = vmatprep.subr.mxu0 0.0
    %1526 = vmatpush1.msra.mxu0 0.0
    %1527 = vmatprep.subr.mxu0 0.0
    %1528 = vmatpush1.msra.mxu0 0.0
    %1529 = vmatprep.subr.mxu0 0.0
    %1530 = vmatpush1.msra.mxu0 0.0
    %1531 = vmatprep.subr.mxu0 0.0
    %1532 = vmatpush1.msra.mxu0 0.0
    %1533 = vmatprep.subr.mxu0 0.0
    %1534 = vmatpush1.msra.mxu0 0.0
    %1535 = vmatprep.subr.mxu0 0.0
    %1536 = vmatpush1.msra.mxu0 0.0
    %1537 = vmatprep.subr.mxu0 0.0
    %1538 = vmatpush1.msra.mxu0 0.0
    %1539 = vmatprep.subr.mxu0 0.0
    %1540 = vmatpush1.msra.mxu0 0.0
    %1541 = vmatprep.subr.mxu0 0.0
    %1542 = vmatpush1.msra.mxu0 0.0
    %1543 = vmatprep.subr.mxu0 0.0
    %1544 = vmatpush1.msra.mxu0 0.0
    %1545 = vmatprep.mubr.f32.mxu0 0.0
    %1546 = vmatmul.mubr.f32.gmra.mrb[0].mxu0 %v1479
    %v1547 = vpop.f32.mrb[0].mxu0
    %v1548 = vadd.f32 0.0, %v1547
    %v1549 = vpop.f32.mrb[0].mxu0
    %1550 = vdwg.mxu0
    %v1551 = vadd.f32 %v1478, %v1548
    %v1552 = vxor.u32 %v1551, 2147483648
    %v1553 = vmul.f32 %v1552, 1.442695
    %v1554 = vpow.pop %v1553
    %v1555 = vadd.f32 %v1554, 1.0
    %v1556 = vrcp.pop %v1555
    %v1557 = vmul.f32 1.0, %v1556
    %v1558 = vtanh.pop %v1551
    %v1559 = vmul.f32 %v1557, %v1466
    %1561 = vrot.lane.b32.xlu0 %v1558, 64
    %v1562 = vpop.permute.xlu0 %1561
    %v1564 = vmul.f32 %v1557, %v1562
    %1566 = vrot.lane.b32.xlu0 %v1564, 32
    %v1567 = vpop.permute.xlu0 %1566
    %v1569 = vadd.f32 %v1559, %v1567
    %v1570 = vtanh.pop %v1569
    %1572 = vrot.lane.b32.xlu0 %v1570, 64
    %v1573 = vpop.permute.xlu0 %1572
    %v1575 = vmul.f32 %v1557, %v1573
    %1577 = vrot.lane.b32.xlu0 %v1575, 32
    %v1578 = vpop.permute.xlu0 %1577
    %1580 = vst.msk [vmem:[#allocation3 + $0xc] sm:$0xf] %vm328, %v1578
    %v1581 = vld [vmem:[#allocation2 + $0x10] sm:$0xf]
    %v1582 = vsel %vm225, %v1578, 0
    %1584 = vmatprep.subr.mxu0 0.0
    %1585 = vmatpush1.msra.mxu0 %v1167
    %1586 = vmatprep.subr.mxu0 0.0
    %1587 = vmatpush1.msra.mxu0 %v1168
    %1588 = vmatprep.subr.mxu0 0.0
    %1589 = vmatpush1.msra.mxu0 %v1169
    %1590 = vmatprep.subr.mxu0 0.0
    %1591 = vmatpush1.msra.mxu0 %v1170
    %1592 = vmatprep.subr.mxu0 0.0
    %1593 = vmatpush1.msra.mxu0 0.0
    %1594 = vmatprep.subr.mxu0 0.0
    %1595 = vmatpush1.msra.mxu0 0.0
    %1596 = vmatprep.subr.mxu0 0.0
    %1597 = vmatpush1.msra.mxu0 0.0
    %1598 = vmatprep.subr.mxu0 0.0
    %1599 = vmatpush1.msra.mxu0 0.0
    %1600 = vmatprep.subr.mxu0 0.0
    %1601 = vmatpush1.msra.mxu0 0.0
    %1602 = vmatprep.subr.mxu0 0.0
    %1603 = vmatpush1.msra.mxu0 0.0
    %1604 = vmatprep.subr.mxu0 0.0
    %1605 = vmatpush1.msra.mxu0 0.0
    %1606 = vmatprep.subr.mxu0 0.0
    %1607 = vmatpush1.msra.mxu0 0.0
    %1608 = vmatprep.subr.mxu0 0.0
    %1609 = vmatpush1.msra.mxu0 0.0
    %1610 = vmatprep.subr.mxu0 0.0
    %1611 = vmatpush1.msra.mxu0 0.0
    %1612 = vmatprep.subr.mxu0 0.0
    %1613 = vmatpush1.msra.mxu0 0.0
    %1614 = vmatprep.subr.mxu0 0.0
    %1615 = vmatpush1.msra.mxu0 0.0
    %1616 = vmatprep.subr.mxu0 0.0
    %1617 = vmatpush1.msra.mxu0 0.0
    %1618 = vmatprep.subr.mxu0 0.0
    %1619 = vmatpush1.msra.mxu0 0.0
    %1620 = vmatprep.subr.mxu0 0.0
    %1621 = vmatpush1.msra.mxu0 0.0
    %1622 = vmatprep.subr.mxu0 0.0
    %1623 = vmatpush1.msra.mxu0 0.0
    %1624 = vmatprep.subr.mxu0 0.0
    %1625 = vmatpush1.msra.mxu0 0.0
    %1626 = vmatprep.subr.mxu0 0.0
    %1627 = vmatpush1.msra.mxu0 0.0
    %1628 = vmatprep.subr.mxu0 0.0
    %1629 = vmatpush1.msra.mxu0 0.0
    %1630 = vmatprep.subr.mxu0 0.0
    %1631 = vmatpush1.msra.mxu0 0.0
    %1632 = vmatprep.subr.mxu0 0.0
    %1633 = vmatpush1.msra.mxu0 0.0
    %1634 = vmatprep.subr.mxu0 0.0
    %1635 = vmatpush1.msra.mxu0 0.0
    %1636 = vmatprep.subr.mxu0 0.0
    %1637 = vmatpush1.msra.mxu0 0.0
    %1638 = vmatprep.subr.mxu0 0.0
    %1639 = vmatpush1.msra.mxu0 0.0
    %1640 = vmatprep.subr.mxu0 0.0
    %1641 = vmatpush1.msra.mxu0 0.0
    %1642 = vmatprep.subr.mxu0 0.0
    %1643 = vmatpush1.msra.mxu0 0.0
    %1644 = vmatprep.subr.mxu0 0.0
    %1645 = vmatpush1.msra.mxu0 0.0
    %1646 = vmatprep.subr.mxu0 0.0
    %1647 = vmatpush1.msra.mxu0 0.0
    %1648 = vmatprep.mubr.f32.mxu0 0.0
    %1649 = vmatmul.mubr.f32.gmra.mrb[0].mxu0 %v1582
    %v1650 = vpop.f32.mrb[0].mxu0
    %v1651 = vadd.f32 0.0, %v1650
    %v1652 = vpop.f32.mrb[0].mxu0
    %1653 = vdwg.mxu0
    %v1654 = vadd.f32 %v1581, %v1651
    %v1655 = vxor.u32 %v1654, 2147483648
    %v1656 = vmul.f32 %v1655, 1.442695
    %v1657 = vpow.pop %v1656
    %v1658 = vadd.f32 %v1657, 1.0
    %v1659 = vrcp.pop %v1658
    %v1660 = vmul.f32 1.0, %v1659
    %v1661 = vtanh.pop %v1654
    %v1662 = vmul.f32 %v1660, %v1569
    %1664 = vrot.lane.b32.xlu0 %v1661, 64
    %v1665 = vpop.permute.xlu0 %1664
    %v1667 = vmul.f32 %v1660, %v1665
    %1669 = vrot.lane.b32.xlu0 %v1667, 32
    %v1670 = vpop.permute.xlu0 %1669
    %v1672 = vadd.f32 %v1662, %v1670
    %v1673 = vtanh.pop %v1672
    %1675 = vrot.lane.b32.xlu0 %v1673, 64
    %v1676 = vpop.permute.xlu0 %1675
    %v1678 = vmul.f32 %v1660, %v1676
    %1680 = vrot.lane.b32.xlu0 %v1678, 32
    %v1681 = vpop.permute.xlu0 %1680
    %1683 = vst.msk [vmem:[#allocation3 + $0x10] sm:$0xf] %vm328, %v1681
    %v1684 = vld [vmem:[#allocation2 + $0x14] sm:$0xf]
    %v1685 = vsel %vm225, %v1681, 0
    %1687 = vmatprep.subr.mxu0 0.0
    %1688 = vmatpush1.msra.mxu0 %v1167
    %1689 = vmatprep.subr.mxu0 0.0
    %1690 = vmatpush1.msra.mxu0 %v1168
    %1691 = vmatprep.subr.mxu0 0.0
    %1692 = vmatpush1.msra.mxu0 %v1169
    %1693 = vmatprep.subr.mxu0 0.0
    %1694 = vmatpush1.msra.mxu0 %v1170
    %1695 = vmatprep.subr.mxu0 0.0
    %1696 = vmatpush1.msra.mxu0 0.0
    %1697 = vmatprep.subr.mxu0 0.0
    %1698 = vmatpush1.msra.mxu0 0.0
    %1699 = vmatprep.subr.mxu0 0.0
    %1700 = vmatpush1.msra.mxu0 0.0
    %1701 = vmatprep.subr.mxu0 0.0
    %1702 = vmatpush1.msra.mxu0 0.0
    %1703 = vmatprep.subr.mxu0 0.0
    %1704 = vmatpush1.msra.mxu0 0.0
    %1705 = vmatprep.subr.mxu0 0.0
    %1706 = vmatpush1.msra.mxu0 0.0
    %1707 = vmatprep.subr.mxu0 0.0
    %1708 = vmatpush1.msra.mxu0 0.0
    %1709 = vmatprep.subr.mxu0 0.0
    %1710 = vmatpush1.msra.mxu0 0.0
    %1711 = vmatprep.subr.mxu0 0.0
    %1712 = vmatpush1.msra.mxu0 0.0
    %1713 = vmatprep.subr.mxu0 0.0
    %1714 = vmatpush1.msra.mxu0 0.0
    %1715 = vmatprep.subr.mxu0 0.0
    %1716 = vmatpush1.msra.mxu0 0.0
    %1717 = vmatprep.subr.mxu0 0.0
    %1718 = vmatpush1.msra.mxu0 0.0
    %1719 = vmatprep.subr.mxu0 0.0
    %1720 = vmatpush1.msra.mxu0 0.0
    %1721 = vmatprep.subr.mxu0 0.0
    %1722 = vmatpush1.msra.mxu0 0.0
    %1723 = vmatprep.subr.mxu0 0.0
    %1724 = vmatpush1.msra.mxu0 0.0
    %1725 = vmatprep.subr.mxu0 0.0
    %1726 = vmatpush1.msra.mxu0 0.0
    %1727 = vmatprep.subr.mxu0 0.0
    %1728 = vmatpush1.msra.mxu0 0.0
    %1729 = vmatprep.subr.mxu0 0.0
    %1730 = vmatpush1.msra.mxu0 0.0
    %1731 = vmatprep.subr.mxu0 0.0
    %1732 = vmatpush1.msra.mxu0 0.0
    %1733 = vmatprep.subr.mxu0 0.0
    %1734 = vmatpush1.msra.mxu0 0.0
    %1735 = vmatprep.subr.mxu0 0.0
    %1736 = vmatpush1.msra.mxu0 0.0
    %1737 = vmatprep.subr.mxu0 0.0
    %1738 = vmatpush1.msra.mxu0 0.0
    %1739 = vmatprep.subr.mxu0 0.0
    %1740 = vmatpush1.msra.mxu0 0.0
    %1741 = vmatprep.subr.mxu0 0.0
    %1742 = vmatpush1.msra.mxu0 0.0
    %1743 = vmatprep.subr.mxu0 0.0
    %1744 = vmatpush1.msra.mxu0 0.0
    %1745 = vmatprep.subr.mxu0 0.0
    %1746 = vmatpush1.msra.mxu0 0.0
    %1747 = vmatprep.subr.mxu0 0.0
    %1748 = vmatpush1.msra.mxu0 0.0
    %1749 = vmatprep.subr.mxu0 0.0
    %1750 = vmatpush1.msra.mxu0 0.0
    %1751 = vmatprep.mubr.f32.mxu0 0.0
    %1752 = vmatmul.mubr.f32.gmra.mrb[0].mxu0 %v1685
    %v1753 = vpop.f32.mrb[0].mxu0
    %v1754 = vadd.f32 0.0, %v1753
    %v1755 = vpop.f32.mrb[0].mxu0
    %1756 = vdwg.mxu0
    %v1757 = vadd.f32 %v1684, %v1754
    %v1758 = vxor.u32 %v1757, 2147483648
    %v1759 = vmul.f32 %v1758, 1.442695
    %v1760 = vpow.pop %v1759
    %v1761 = vadd.f32 %v1760, 1.0
    %v1762 = vrcp.pop %v1761
    %v1763 = vmul.f32 1.0, %v1762
    %v1764 = vtanh.pop %v1757
    %v1765 = vmul.f32 %v1763, %v1672
    %1767 = vrot.lane.b32.xlu0 %v1764, 64
    %v1768 = vpop.permute.xlu0 %1767
    %v1770 = vmul.f32 %v1763, %v1768
    %1772 = vrot.lane.b32.xlu0 %v1770, 32
    %v1773 = vpop.permute.xlu0 %1772
    %v1775 = vadd.f32 %v1765, %v1773
    %v1776 = vtanh.pop %v1775
    %1778 = vrot.lane.b32.xlu0 %v1776, 64
    %v1779 = vpop.permute.xlu0 %1778
    %v1781 = vmul.f32 %v1763, %v1779
    %1783 = vrot.lane.b32.xlu0 %v1781, 32
    %v1784 = vpop.permute.xlu0 %1783
    %1786 = vst.msk [vmem:[#allocation3 + $0x14] sm:$0xf] %vm328, %v1784
    %v1787 = vld [vmem:[#allocation2 + $0x18] sm:$0xf]
    %v1788 = vsel %vm225, %v1784, 0
    %1790 = vmatprep.subr.mxu0 0.0
    %1791 = vmatpush1.msra.mxu0 %v1167
    %1792 = vmatprep.subr.mxu0 0.0
    %1793 = vmatpush1.msra.mxu0 %v1168
    %1794 = vmatprep.subr.mxu0 0.0
    %1795 = vmatpush1.msra.mxu0 %v1169
    %1796 = vmatprep.subr.mxu0 0.0
    %1797 = vmatpush1.msra.mxu0 %v1170
    %1798 = vmatprep.subr.mxu0 0.0
    %1799 = vmatpush1.msra.mxu0 0.0
    %1800 = vmatprep.subr.mxu0 0.0
    %1801 = vmatpush1.msra.mxu0 0.0
    %1802 = vmatprep.subr.mxu0 0.0
    %1803 = vmatpush1.msra.mxu0 0.0
    %1804 = vmatprep.subr.mxu0 0.0
    %1805 = vmatpush1.msra.mxu0 0.0
    %1806 = vmatprep.subr.mxu0 0.0
    %1807 = vmatpush1.msra.mxu0 0.0
    %1808 = vmatprep.subr.mxu0 0.0
    %1809 = vmatpush1.msra.mxu0 0.0
    %1810 = vmatprep.subr.mxu0 0.0
    %1811 = vmatpush1.msra.mxu0 0.0
    %1812 = vmatprep.subr.mxu0 0.0
    %1813 = vmatpush1.msra.mxu0 0.0
    %1814 = vmatprep.subr.mxu0 0.0
    %1815 = vmatpush1.msra.mxu0 0.0
    %1816 = vmatprep.subr.mxu0 0.0
    %1817 = vmatpush1.msra.mxu0 0.0
    %1818 = vmatprep.subr.mxu0 0.0
    %1819 = vmatpush1.msra.mxu0 0.0
    %1820 = vmatprep.subr.mxu0 0.0
    %1821 = vmatpush1.msra.mxu0 0.0
    %1822 = vmatprep.subr.mxu0 0.0
    %1823 = vmatpush1.msra.mxu0 0.0
    %1824 = vmatprep.subr.mxu0 0.0
    %1825 = vmatpush1.msra.mxu0 0.0
    %1826 = vmatprep.subr.mxu0 0.0
    %1827 = vmatpush1.msra.mxu0 0.0
    %1828 = vmatprep.subr.mxu0 0.0
    %1829 = vmatpush1.msra.mxu0 0.0
    %1830 = vmatprep.subr.mxu0 0.0
    %1831 = vmatpush1.msra.mxu0 0.0
    %1832 = vmatprep.subr.mxu0 0.0
    %1833 = vmatpush1.msra.mxu0 0.0
    %1834 = vmatprep.subr.mxu0 0.0
    %1835 = vmatpush1.msra.mxu0 0.0
    %1836 = vmatprep.subr.mxu0 0.0
    %1837 = vmatpush1.msra.mxu0 0.0
    %1838 = vmatprep.subr.mxu0 0.0
    %1839 = vmatpush1.msra.mxu0 0.0
    %1840 = vmatprep.subr.mxu0 0.0
    %1841 = vmatpush1.msra.mxu0 0.0
    %1842 = vmatprep.subr.mxu0 0.0
    %1843 = vmatpush1.msra.mxu0 0.0
    %1844 = vmatprep.subr.mxu0 0.0
    %1845 = vmatpush1.msra.mxu0 0.0
    %1846 = vmatprep.subr.mxu0 0.0
    %1847 = vmatpush1.msra.mxu0 0.0
    %1848 = vmatprep.subr.mxu0 0.0
    %1849 = vmatpush1.msra.mxu0 0.0
    %1850 = vmatprep.subr.mxu0 0.0
    %1851 = vmatpush1.msra.mxu0 0.0
    %1852 = vmatprep.subr.mxu0 0.0
    %1853 = vmatpush1.msra.mxu0 0.0
    %1854 = vmatprep.mubr.f32.mxu0 0.0
    %1855 = vmatmul.mubr.f32.gmra.mrb[0].mxu0 %v1788
    %v1856 = vpop.f32.mrb[0].mxu0
    %v1857 = vadd.f32 0.0, %v1856
    %v1858 = vpop.f32.mrb[0].mxu0
    %1859 = vdwg.mxu0
    %v1860 = vadd.f32 %v1787, %v1857
    %v1861 = vxor.u32 %v1860, 2147483648
    %v1862 = vmul.f32 %v1861, 1.442695
    %v1863 = vpow.pop %v1862
    %v1864 = vadd.f32 %v1863, 1.0
    %v1865 = vrcp.pop %v1864
    %v1866 = vmul.f32 1.0, %v1865
    %v1867 = vtanh.pop %v1860
    %v1868 = vmul.f32 %v1866, %v1775
    %1870 = vrot.lane.b32.xlu0 %v1867, 64
    %v1871 = vpop.permute.xlu0 %1870
    %v1873 = vmul.f32 %v1866, %v1871
    %1875 = vrot.lane.b32.xlu0 %v1873, 32
    %v1876 = vpop.permute.xlu0 %1875
    %v1878 = vadd.f32 %v1868, %v1876
    %v1879 = vtanh.pop %v1878
    %1881 = vrot.lane.b32.xlu0 %v1879, 64
    %v1882 = vpop.permute.xlu0 %1881
    %v1884 = vmul.f32 %v1866, %v1882
    %1886 = vrot.lane.b32.xlu0 %v1884, 32
    %v1887 = vpop.permute.xlu0 %1886
    %1889 = vst.msk [vmem:[#allocation3 + $0x18] sm:$0xf] %vm328, %v1887
    %v1890 = vld [vmem:[#allocation2 + $0x1c] sm:$0xf]
    %v1891 = vsel %vm225, %v1887, 0
    %1893 = vmatprep.subr.mxu0 0.0
    %1894 = vmatpush1.msra.mxu0 %v1167
    %1895 = vmatprep.subr.mxu0 0.0
    %1896 = vmatpush1.msra.mxu0 %v1168
    %1897 = vmatprep.subr.mxu0 0.0
    %1898 = vmatpush1.msra.mxu0 %v1169
    %1899 = vmatprep.subr.mxu0 0.0
    %1900 = vmatpush1.msra.mxu0 %v1170
    %1901 = vmatprep.subr.mxu0 0.0
    %1902 = vmatpush1.msra.mxu0 0.0
    %1903 = vmatprep.subr.mxu0 0.0
    %1904 = vmatpush1.msra.mxu0 0.0
    %1905 = vmatprep.subr.mxu0 0.0
    %1906 = vmatpush1.msra.mxu0 0.0
    %1907 = vmatprep.subr.mxu0 0.0
    %1908 = vmatpush1.msra.mxu0 0.0
    %1909 = vmatprep.subr.mxu0 0.0
    %1910 = vmatpush1.msra.mxu0 0.0
    %1911 = vmatprep.subr.mxu0 0.0
    %1912 = vmatpush1.msra.mxu0 0.0
    %1913 = vmatprep.subr.mxu0 0.0
    %1914 = vmatpush1.msra.mxu0 0.0
    %1915 = vmatprep.subr.mxu0 0.0
    %1916 = vmatpush1.msra.mxu0 0.0
    %1917 = vmatprep.subr.mxu0 0.0
    %1918 = vmatpush1.msra.mxu0 0.0
    %1919 = vmatprep.subr.mxu0 0.0
    %1920 = vmatpush1.msra.mxu0 0.0
    %1921 = vmatprep.subr.mxu0 0.0
    %1922 = vmatpush1.msra.mxu0 0.0
    %1923 = vmatprep.subr.mxu0 0.0
    %1924 = vmatpush1.msra.mxu0 0.0
    %1925 = vmatprep.subr.mxu0 0.0
    %1926 = vmatpush1.msra.mxu0 0.0
    %1927 = vmatprep.subr.mxu0 0.0
    %1928 = vmatpush1.msra.mxu0 0.0
    %1929 = vmatprep.subr.mxu0 0.0
    %1930 = vmatpush1.msra.mxu0 0.0
    %1931 = vmatprep.subr.mxu0 0.0
    %1932 = vmatpush1.msra.mxu0 0.0
    %1933 = vmatprep.subr.mxu0 0.0
    %1934 = vmatpush1.msra.mxu0 0.0
    %1935 = vmatprep.subr.mxu0 0.0
    %1936 = vmatpush1.msra.mxu0 0.0
    %1937 = vmatprep.subr.mxu0 0.0
    %1938 = vmatpush1.msra.mxu0 0.0
    %1939 = vmatprep.subr.mxu0 0.0
    %1940 = vmatpush1.msra.mxu0 0.0
    %1941 = vmatprep.subr.mxu0 0.0
    %1942 = vmatpush1.msra.mxu0 0.0
    %1943 = vmatprep.subr.mxu0 0.0
    %1944 = vmatpush1.msra.mxu0 0.0
    %1945 = vmatprep.subr.mxu0 0.0
    %1946 = vmatpush1.msra.mxu0 0.0
    %1947 = vmatprep.subr.mxu0 0.0
    %1948 = vmatpush1.msra.mxu0 0.0
    %1949 = vmatprep.subr.mxu0 0.0
    %1950 = vmatpush1.msra.mxu0 0.0
    %1951 = vmatprep.subr.mxu0 0.0
    %1952 = vmatpush1.msra.mxu0 0.0
    %1953 = vmatprep.subr.mxu0 0.0
    %1954 = vmatpush1.msra.mxu0 0.0
    %1955 = vmatprep.subr.mxu0 0.0
    %1956 = vmatpush1.msra.mxu0 0.0
    %1957 = vmatprep.mubr.f32.mxu0 0.0
    %1958 = vmatmul.mubr.f32.gmra.mrb[0].mxu0 %v1891
    %v1959 = vpop.f32.mrb[0].mxu0
    %v1960 = vadd.f32 0.0, %v1959
    %v1961 = vpop.f32.mrb[0].mxu0
    %1962 = vdwg.mxu0
    %v1963 = vadd.f32 %v1890, %v1960
    %v1964 = vxor.u32 %v1963, 2147483648
    %v1965 = vmul.f32 %v1964, 1.442695
    %v1966 = vpow.pop %v1965
    %v1967 = vadd.f32 %v1966, 1.0
    %v1968 = vrcp.pop %v1967
    %v1969 = vmul.f32 1.0, %v1968
    %v1970 = vtanh.pop %v1963
    %v1971 = vmul.f32 %v1969, %v1878
    %1973 = vrot.lane.b32.xlu0 %v1970, 64
    %v1974 = vpop.permute.xlu0 %1973
    %v1976 = vmul.f32 %v1969, %v1974
    %1978 = vrot.lane.b32.xlu0 %v1976, 32
    %v1979 = vpop.permute.xlu0 %1978
    %v1981 = vadd.f32 %v1971, %v1979
    %v1982 = vtanh.pop %v1981
    %1984 = vrot.lane.b32.xlu0 %v1982, 64
    %v1985 = vpop.permute.xlu0 %1984
    %v1987 = vmul.f32 %v1969, %v1985
    %1989 = vrot.lane.b32.xlu0 %v1987, 32
    %v1990 = vpop.permute.xlu0 %1989
    %1992 = vst.msk [vmem:[#allocation3 + $0x1c] sm:$0xf] %vm328, %v1990
    %v1993 = vld [vmem:[#allocation3] sm:$0xff]
    %v1994 = vld [vmem:[#allocation3 + $0x8] sm:$0xff]
    %v1995 = vld [vmem:[#allocation3 + $0x10] sm:$0xff]
    %v1996 = vld [vmem:[#allocation3 + $0x18] sm:$0xff]
    %v1997 = vld [vmem:[%s7] sm:$0xff]
    %v1998 = vld [vmem:[%s7 + $0x8] sm:$0xff]
    %v1999 = vld [vmem:[%s7 + $0x10] sm:$0xff]
    %v2000 = vld [vmem:[%s7 + $0x18] sm:$0xff]
    %v2001 = vld [vmem:[%s9] sm:$0x1]
    %v2003 = vlaneseq
    %v2004 = vshrl.u32 %v2003, 7
    %v2005 = vsub.s32 0, %v2004
    %v2006 = vrot.slane %v2001, %v2005
    %v2009 = vsel %vm225, %v1993, 0
    %v2012 = vsel %vm225, %v1994, 0
    %v2015 = vsel %vm225, %v1995, 0
    %v2018 = vsel %vm225, %v1996, 0
    %2020 = vmatprep.subr.mxu0 0.0
    %2021 = vmatpush1.msra.mxu0 %v1997
    %2022 = vmatprep.subr.mxu0 0.0
    %2023 = vmatpush1.msra.mxu0 %v1998
    %2024 = vmatprep.subr.mxu0 0.0
    %2025 = vmatpush1.msra.mxu0 %v1999
    %2026 = vmatprep.subr.mxu0 0.0
    %2027 = vmatpush1.msra.mxu0 %v2000
    %2028 = vmatprep.subr.mxu0 0.0
    %2029 = vmatpush1.msra.mxu0 0.0
    %2030 = vmatprep.subr.mxu0 0.0
    %2031 = vmatpush1.msra.mxu0 0.0
    %2032 = vmatprep.subr.mxu0 0.0
    %2033 = vmatpush1.msra.mxu0 0.0
    %2034 = vmatprep.subr.mxu0 0.0
    %2035 = vmatpush1.msra.mxu0 0.0
    %2036 = vmatprep.subr.mxu0 0.0
    %2037 = vmatpush1.msra.mxu0 0.0
    %2038 = vmatprep.subr.mxu0 0.0
    %2039 = vmatpush1.msra.mxu0 0.0
    %2040 = vmatprep.subr.mxu0 0.0
    %2041 = vmatpush1.msra.mxu0 0.0
    %2042 = vmatprep.subr.mxu0 0.0
    %2043 = vmatpush1.msra.mxu0 0.0
    %2044 = vmatprep.subr.mxu0 0.0
    %2045 = vmatpush1.msra.mxu0 0.0
    %2046 = vmatprep.subr.mxu0 0.0
    %2047 = vmatpush1.msra.mxu0 0.0
    %2048 = vmatprep.subr.mxu0 0.0
    %2049 = vmatpush1.msra.mxu0 0.0
    %2050 = vmatprep.subr.mxu0 0.0
    %2051 = vmatpush1.msra.mxu0 0.0
    %2052 = vmatprep.subr.mxu0 0.0
    %2053 = vmatpush1.msra.mxu0 0.0
    %2054 = vmatprep.subr.mxu0 0.0
    %2055 = vmatpush1.msra.mxu0 0.0
    %2056 = vmatprep.subr.mxu0 0.0
    %2057 = vmatpush1.msra.mxu0 0.0
    %2058 = vmatprep.subr.mxu0 0.0
    %2059 = vmatpush1.msra.mxu0 0.0
    %2060 = vmatprep.subr.mxu0 0.0
    %2061 = vmatpush1.msra.mxu0 0.0
    %2062 = vmatprep.subr.mxu0 0.0
    %2063 = vmatpush1.msra.mxu0 0.0
    %2064 = vmatprep.subr.mxu0 0.0
    %2065 = vmatpush1.msra.mxu0 0.0
    %2066 = vmatprep.subr.mxu0 0.0
    %2067 = vmatpush1.msra.mxu0 0.0
    %2068 = vmatprep.subr.mxu0 0.0
    %2069 = vmatpush1.msra.mxu0 0.0
    %2070 = vmatprep.subr.mxu0 0.0
    %2071 = vmatpush1.msra.mxu0 0.0
    %2072 = vmatprep.subr.mxu0 0.0
    %2073 = vmatpush1.msra.mxu0 0.0
    %2074 = vmatprep.subr.mxu0 0.0
    %2075 = vmatpush1.msra.mxu0 0.0
    %2076 = vmatprep.subr.mxu0 0.0
    %2077 = vmatpush1.msra.mxu0 0.0
    %2078 = vmatprep.subr.mxu0 0.0
    %2079 = vmatpush1.msra.mxu0 0.0
    %2080 = vmatprep.subr.mxu0 0.0
    %2081 = vmatpush1.msra.mxu0 0.0
    %2082 = vmatprep.subr.mxu0 0.0
    %2083 = vmatpush1.msra.mxu0 0.0
    %2084 = vmatprep.mubr.f32.mxu0 0.0
    %2085 = vmatmul.mubr.f32.gmra.mrb[0].mxu0 %v2009
    %v2086 = vpop.f32.mrb[0].mxu0
    %v2087 = vadd.f32 %v2006, %v2086
    %v2088 = vpop.f32.mrb[0].mxu0
    %2089 = vmatprep.mubr.f32.mxu0 0.0
    %2090 = vmatmul.mubr.f32.gmra.mrb[0].mxu0 %v2012
    %v2091 = vpop.f32.mrb[0].mxu0
    %v2092 = vadd.f32 %v2006, %v2091
    %v2093 = vpop.f32.mrb[0].mxu0
    %2094 = vmatprep.mubr.f32.mxu0 0.0
    %2095 = vmatmul.mubr.f32.gmra.mrb[0].mxu0 %v2015
    %v2096 = vpop.f32.mrb[0].mxu0
    %v2097 = vadd.f32 %v2006, %v2096
    %v2098 = vpop.f32.mrb[0].mxu0
    %2099 = vmatprep.mubr.f32.mxu0 0.0
    %2100 = vmatmul.mubr.f32.gmra.mrb[0].mxu0 %v2018
    %v2101 = vpop.f32.mrb[0].mxu0
    %v2102 = vadd.f32 %v2006, %v2101
    %v2103 = vpop.f32.mrb[0].mxu0
    %2104 = vdwg.mxu0
    %2105 = vst [vmem:[#allocation2] sm:$0xff] %v2087
    %2106 = vst [vmem:[#allocation2 + $0x8] sm:$0xff] %v2092
    %2107 = vst [vmem:[#allocation2 + $0x10] sm:$0xff] %v2097
    %2108 = vst [vmem:[#allocation2 + $0x18] sm:$0xff] %v2102
    %v2109 = vld [vmem:[%s8] sm:$0xff]
    %v2110 = vld [vmem:[%s8 + $0x8] sm:$0xff]
    %v2111 = vld [vmem:[%s8 + $0x10] sm:$0xff]
    %v2112 = vld [vmem:[%s8 + $0x18] sm:$0xff]
    %v2113 = vld [vmem:[#allocation2] sm:$0xf]
    %2114 = vmatprep.subr.mxu0 0.0
    %2115 = vmatpush1.msra.mxu0 %v2109
    %2116 = vmatprep.subr.mxu0 0.0
    %2117 = vmatpush1.msra.mxu0 %v2110
    %2118 = vmatprep.subr.mxu0 0.0
    %2119 = vmatpush1.msra.mxu0 %v2111
    %2120 = vmatprep.subr.mxu0 0.0
    %2121 = vmatpush1.msra.mxu0 %v2112
    %2122 = vmatprep.subr.mxu0 0.0
    %2123 = vmatpush1.msra.mxu0 0.0
    %2124 = vmatprep.subr.mxu0 0.0
    %2125 = vmatpush1.msra.mxu0 0.0
    %2126 = vmatprep.subr.mxu0 0.0
    %2127 = vmatpush1.msra.mxu0 0.0
    %2128 = vmatprep.subr.mxu0 0.0
    %2129 = vmatpush1.msra.mxu0 0.0
    %2130 = vmatprep.subr.mxu0 0.0
    %2131 = vmatpush1.msra.mxu0 0.0
    %2132 = vmatprep.subr.mxu0 0.0
    %2133 = vmatpush1.msra.mxu0 0.0
    %2134 = vmatprep.subr.mxu0 0.0
    %2135 = vmatpush1.msra.mxu0 0.0
    %2136 = vmatprep.subr.mxu0 0.0
    %2137 = vmatpush1.msra.mxu0 0.0
    %2138 = vmatprep.subr.mxu0 0.0
    %2139 = vmatpush1.msra.mxu0 0.0
    %2140 = vmatprep.subr.mxu0 0.0
    %2141 = vmatpush1.msra.mxu0 0.0
    %2142 = vmatprep.subr.mxu0 0.0
    %2143 = vmatpush1.msra.mxu0 0.0
    %2144 = vmatprep.subr.mxu0 0.0
    %2145 = vmatpush1.msra.mxu0 0.0
    %2146 = vmatprep.subr.mxu0 0.0
    %2147 = vmatpush1.msra.mxu0 0.0
    %2148 = vmatprep.subr.mxu0 0.0
    %2149 = vmatpush1.msra.mxu0 0.0
    %2150 = vmatprep.subr.mxu0 0.0
    %2151 = vmatpush1.msra.mxu0 0.0
    %2152 = vmatprep.subr.mxu0 0.0
    %2153 = vmatpush1.msra.mxu0 0.0
    %2154 = vmatprep.subr.mxu0 0.0
    %2155 = vmatpush1.msra.mxu0 0.0
    %2156 = vmatprep.subr.mxu0 0.0
    %2157 = vmatpush1.msra.mxu0 0.0
    %2158 = vmatprep.subr.mxu0 0.0
    %2159 = vmatpush1.msra.mxu0 0.0
    %2160 = vmatprep.subr.mxu0 0.0
    %2161 = vmatpush1.msra.mxu0 0.0
    %2162 = vmatprep.subr.mxu0 0.0
    %2163 = vmatpush1.msra.mxu0 0.0
    %2164 = vmatprep.subr.mxu0 0.0
    %2165 = vmatpush1.msra.mxu0 0.0
    %2166 = vmatprep.subr.mxu0 0.0
    %2167 = vmatpush1.msra.mxu0 0.0
    %2168 = vmatprep.subr.mxu0 0.0
    %2169 = vmatpush1.msra.mxu0 0.0
    %2170 = vmatprep.subr.mxu0 0.0
    %2171 = vmatpush1.msra.mxu0 0.0
    %2172 = vmatprep.subr.mxu0 0.0
    %2173 = vmatpush1.msra.mxu0 0.0
    %2174 = vmatprep.subr.mxu0 0.0
    %2175 = vmatpush1.msra.mxu0 0.0
    %2176 = vmatprep.subr.mxu0 0.0
    %2177 = vmatpush1.msra.mxu0 0.0
    %2178 = vmatprep.mubr.f32.mxu0 0.0
    %2179 = vmatmul.mubr.f32.gmra.mrb[0].mxu0 %v227
    %v2180 = vpop.f32.mrb[0].mxu0
    %v2181 = vadd.f32 0.0, %v2180
    %v2182 = vpop.f32.mrb[0].mxu0
    %2183 = vdwg.mxu0
    %v2184 = vadd.f32 %v2113, %v2181
    %v2185 = vxor.u32 %v2184, 2147483648
    %v2186 = vmul.f32 %v2185, 1.442695
    %v2187 = vpow.pop %v2186
    %v2188 = vadd.f32 %v2187, 1.0
    %v2189 = vrcp.pop %v2188
    %v2190 = vmul.f32 1.0, %v2189
    %v2191 = vtanh.pop %v2184
    %v2192 = vmul.f32 %v2190, 0.0
    %2194 = vrot.lane.b32.xlu0 %v2191, 64
    %v2195 = vpop.permute.xlu0 %2194
    %v2197 = vmul.f32 %v2190, %v2195
    %2199 = vrot.lane.b32.xlu0 %v2197, 32
    %v2200 = vpop.permute.xlu0 %2199
    %v2202 = vadd.f32 %v2192, %v2200
    %v2203 = vtanh.pop %v2202
    %2205 = vrot.lane.b32.xlu0 %v2203, 64
    %v2206 = vpop.permute.xlu0 %2205
    %v2208 = vmul.f32 %v2190, %v2206
    %v2209 = vld [vmem:[#allocation2 + $0x4] sm:$0xf]
    %2211 = vrot.lane.b32.xlu0 %v2208, 32
    %v2212 = vpop.permute.xlu0 %2211
    %v2213 = vsel %vm225, %v2212, 0
    %2215 = vmatprep.subr.mxu0 0.0
    %2216 = vmatpush1.msra.mxu0 %v2109
    %2217 = vmatprep.subr.mxu0 0.0
    %2218 = vmatpush1.msra.mxu0 %v2110
    %2219 = vmatprep.subr.mxu0 0.0
    %2220 = vmatpush1.msra.mxu0 %v2111
    %2221 = vmatprep.subr.mxu0 0.0
    %2222 = vmatpush1.msra.mxu0 %v2112
    %2223 = vmatprep.subr.mxu0 0.0
    %2224 = vmatpush1.msra.mxu0 0.0
    %2225 = vmatprep.subr.mxu0 0.0
    %2226 = vmatpush1.msra.mxu0 0.0
    %2227 = vmatprep.subr.mxu0 0.0
    %2228 = vmatpush1.msra.mxu0 0.0
    %2229 = vmatprep.subr.mxu0 0.0
    %2230 = vmatpush1.msra.mxu0 0.0
    %2231 = vmatprep.subr.mxu0 0.0
    %2232 = vmatpush1.msra.mxu0 0.0
    %2233 = vmatprep.subr.mxu0 0.0
    %2234 = vmatpush1.msra.mxu0 0.0
    %2235 = vmatprep.subr.mxu0 0.0
    %2236 = vmatpush1.msra.mxu0 0.0
    %2237 = vmatprep.subr.mxu0 0.0
    %2238 = vmatpush1.msra.mxu0 0.0
    %2239 = vmatprep.subr.mxu0 0.0
    %2240 = vmatpush1.msra.mxu0 0.0
    %2241 = vmatprep.subr.mxu0 0.0
    %2242 = vmatpush1.msra.mxu0 0.0
    %2243 = vmatprep.subr.mxu0 0.0
    %2244 = vmatpush1.msra.mxu0 0.0
    %2245 = vmatprep.subr.mxu0 0.0
    %2246 = vmatpush1.msra.mxu0 0.0
    %2247 = vmatprep.subr.mxu0 0.0
    %2248 = vmatpush1.msra.mxu0 0.0
    %2249 = vmatprep.subr.mxu0 0.0
    %2250 = vmatpush1.msra.mxu0 0.0
    %2251 = vmatprep.subr.mxu0 0.0
    %2252 = vmatpush1.msra.mxu0 0.0
    %2253 = vmatprep.subr.mxu0 0.0
    %2254 = vmatpush1.msra.mxu0 0.0
    %2255 = vmatprep.subr.mxu0 0.0
    %2256 = vmatpush1.msra.mxu0 0.0
    %2257 = vmatprep.subr.mxu0 0.0
    %2258 = vmatpush1.msra.mxu0 0.0
    %2259 = vmatprep.subr.mxu0 0.0
    %2260 = vmatpush1.msra.mxu0 0.0
    %2261 = vmatprep.subr.mxu0 0.0
    %2262 = vmatpush1.msra.mxu0 0.0
    %2263 = vmatprep.subr.mxu0 0.0
    %2264 = vmatpush1.msra.mxu0 0.0
    %2265 = vmatprep.subr.mxu0 0.0
    %2266 = vmatpush1.msra.mxu0 0.0
    %2267 = vmatprep.subr.mxu0 0.0
    %2268 = vmatpush1.msra.mxu0 0.0
    %2269 = vmatprep.subr.mxu0 0.0
    %2270 = vmatpush1.msra.mxu0 0.0
    %2271 = vmatprep.subr.mxu0 0.0
    %2272 = vmatpush1.msra.mxu0 0.0
    %2273 = vmatprep.subr.mxu0 0.0
    %2274 = vmatpush1.msra.mxu0 0.0
    %2275 = vmatprep.subr.mxu0 0.0
    %2276 = vmatpush1.msra.mxu0 0.0
    %2277 = vmatprep.subr.mxu0 0.0
    %2278 = vmatpush1.msra.mxu0 0.0
    %2279 = vmatprep.mubr.f32.mxu0 0.0
    %2280 = vmatmul.mubr.f32.gmra.mrb[0].mxu0 %v2213
    %v2281 = vpop.f32.mrb[0].mxu0
    %v2282 = vadd.f32 0.0, %v2281
    %v2283 = vpop.f32.mrb[0].mxu0
    %2284 = vdwg.mxu0
    %v2285 = vadd.f32 %v2209, %v2282
    %v2286 = vxor.u32 %v2285, 2147483648
    %v2287 = vmul.f32 %v2286, 1.442695
    %v2288 = vpow.pop %v2287
    %v2289 = vadd.f32 %v2288, 1.0
    %v2290 = vrcp.pop %v2289
    %v2291 = vmul.f32 1.0, %v2290
    %v2292 = vtanh.pop %v2285
    %v2293 = vmul.f32 %v2291, %v2202
    %2295 = vrot.lane.b32.xlu0 %v2292, 64
    %v2296 = vpop.permute.xlu0 %2295
    %v2298 = vmul.f32 %v2291, %v2296
    %2300 = vrot.lane.b32.xlu0 %v2298, 32
    %v2301 = vpop.permute.xlu0 %2300
    %v2303 = vadd.f32 %v2293, %v2301
    %v2304 = vtanh.pop %v2303
    %2306 = vrot.lane.b32.xlu0 %v2304, 64
    %v2307 = vpop.permute.xlu0 %2306
    %v2309 = vmul.f32 %v2291, %v2307
    %v2310 = vld [vmem:[#allocation2 + $0x8] sm:$0xf]
    %2312 = vrot.lane.b32.xlu0 %v2309, 32
    %v2313 = vpop.permute.xlu0 %2312
    %v2314 = vsel %vm225, %v2313, 0
    %2316 = vmatprep.subr.mxu0 0.0
    %2317 = vmatpush1.msra.mxu0 %v2109
    %2318 = vmatprep.subr.mxu0 0.0
    %2319 = vmatpush1.msra.mxu0 %v2110
    %2320 = vmatprep.subr.mxu0 0.0
    %2321 = vmatpush1.msra.mxu0 %v2111
    %2322 = vmatprep.subr.mxu0 0.0
    %2323 = vmatpush1.msra.mxu0 %v2112
    %2324 = vmatprep.subr.mxu0 0.0
    %2325 = vmatpush1.msra.mxu0 0.0
    %2326 = vmatprep.subr.mxu0 0.0
    %2327 = vmatpush1.msra.mxu0 0.0
    %2328 = vmatprep.subr.mxu0 0.0
    %2329 = vmatpush1.msra.mxu0 0.0
    %2330 = vmatprep.subr.mxu0 0.0
    %2331 = vmatpush1.msra.mxu0 0.0
    %2332 = vmatprep.subr.mxu0 0.0
    %2333 = vmatpush1.msra.mxu0 0.0
    %2334 = vmatprep.subr.mxu0 0.0
    %2335 = vmatpush1.msra.mxu0 0.0
    %2336 = vmatprep.subr.mxu0 0.0
    %2337 = vmatpush1.msra.mxu0 0.0
    %2338 = vmatprep.subr.mxu0 0.0
    %2339 = vmatpush1.msra.mxu0 0.0
    %2340 = vmatprep.subr.mxu0 0.0
    %2341 = vmatpush1.msra.mxu0 0.0
    %2342 = vmatprep.subr.mxu0 0.0
    %2343 = vmatpush1.msra.mxu0 0.0
    %2344 = vmatprep.subr.mxu0 0.0
    %2345 = vmatpush1.msra.mxu0 0.0
    %2346 = vmatprep.subr.mxu0 0.0
    %2347 = vmatpush1.msra.mxu0 0.0
    %2348 = vmatprep.subr.mxu0 0.0
    %2349 = vmatpush1.msra.mxu0 0.0
    %2350 = vmatprep.subr.mxu0 0.0
    %2351 = vmatpush1.msra.mxu0 0.0
    %2352 = vmatprep.subr.mxu0 0.0
    %2353 = vmatpush1.msra.mxu0 0.0
    %2354 = vmatprep.subr.mxu0 0.0
    %2355 = vmatpush1.msra.mxu0 0.0
    %2356 = vmatprep.subr.mxu0 0.0
    %2357 = vmatpush1.msra.mxu0 0.0
    %2358 = vmatprep.subr.mxu0 0.0
    %2359 = vmatpush1.msra.mxu0 0.0
    %2360 = vmatprep.subr.mxu0 0.0
    %2361 = vmatpush1.msra.mxu0 0.0
    %2362 = vmatprep.subr.mxu0 0.0
    %2363 = vmatpush1.msra.mxu0 0.0
    %2364 = vmatprep.subr.mxu0 0.0
    %2365 = vmatpush1.msra.mxu0 0.0
    %2366 = vmatprep.subr.mxu0 0.0
    %2367 = vmatpush1.msra.mxu0 0.0
    %2368 = vmatprep.subr.mxu0 0.0
    %2369 = vmatpush1.msra.mxu0 0.0
    %2370 = vmatprep.subr.mxu0 0.0
    %2371 = vmatpush1.msra.mxu0 0.0
    %2372 = vmatprep.subr.mxu0 0.0
    %2373 = vmatpush1.msra.mxu0 0.0
    %2374 = vmatprep.subr.mxu0 0.0
    %2375 = vmatpush1.msra.mxu0 0.0
    %2376 = vmatprep.subr.mxu0 0.0
    %2377 = vmatpush1.msra.mxu0 0.0
    %2378 = vmatprep.subr.mxu0 0.0
    %2379 = vmatpush1.msra.mxu0 0.0
    %2380 = vmatprep.mubr.f32.mxu0 0.0
    %2381 = vmatmul.mubr.f32.gmra.mrb[0].mxu0 %v2314
    %v2382 = vpop.f32.mrb[0].mxu0
    %v2383 = vadd.f32 0.0, %v2382
    %v2384 = vpop.f32.mrb[0].mxu0
    %2385 = vdwg.mxu0
    %v2386 = vadd.f32 %v2310, %v2383
    %v2387 = vxor.u32 %v2386, 2147483648
    %v2388 = vmul.f32 %v2387, 1.442695
    %v2389 = vpow.pop %v2388
    %v2390 = vadd.f32 %v2389, 1.0
    %v2391 = vrcp.pop %v2390
    %v2392 = vmul.f32 1.0, %v2391
    %v2393 = vtanh.pop %v2386
    %v2394 = vmul.f32 %v2392, %v2303
    %2396 = vrot.lane.b32.xlu0 %v2393, 64
    %v2397 = vpop.permute.xlu0 %2396
    %v2399 = vmul.f32 %v2392, %v2397
    %2401 = vrot.lane.b32.xlu0 %v2399, 32
    %v2402 = vpop.permute.xlu0 %2401
    %v2404 = vadd.f32 %v2394, %v2402
    %v2405 = vtanh.pop %v2404
    %2407 = vrot.lane.b32.xlu0 %v2405, 64
    %v2408 = vpop.permute.xlu0 %2407
    %v2410 = vmul.f32 %v2392, %v2408
    %v2411 = vld [vmem:[#allocation2 + $0xc] sm:$0xf]
    %2413 = vrot.lane.b32.xlu0 %v2410, 32
    %v2414 = vpop.permute.xlu0 %2413
    %v2415 = vsel %vm225, %v2414, 0
    %2417 = vmatprep.subr.mxu0 0.0
    %2418 = vmatpush1.msra.mxu0 %v2109
    %2419 = vmatprep.subr.mxu0 0.0
    %2420 = vmatpush1.msra.mxu0 %v2110
    %2421 = vmatprep.subr.mxu0 0.0
    %2422 = vmatpush1.msra.mxu0 %v2111
    %2423 = vmatprep.subr.mxu0 0.0
    %2424 = vmatpush1.msra.mxu0 %v2112
    %2425 = vmatprep.subr.mxu0 0.0
    %2426 = vmatpush1.msra.mxu0 0.0
    %2427 = vmatprep.subr.mxu0 0.0
    %2428 = vmatpush1.msra.mxu0 0.0
    %2429 = vmatprep.subr.mxu0 0.0
    %2430 = vmatpush1.msra.mxu0 0.0
    %2431 = vmatprep.subr.mxu0 0.0
    %2432 = vmatpush1.msra.mxu0 0.0
    %2433 = vmatprep.subr.mxu0 0.0
    %2434 = vmatpush1.msra.mxu0 0.0
    %2435 = vmatprep.subr.mxu0 0.0
    %2436 = vmatpush1.msra.mxu0 0.0
    %2437 = vmatprep.subr.mxu0 0.0
    %2438 = vmatpush1.msra.mxu0 0.0
    %2439 = vmatprep.subr.mxu0 0.0
    %2440 = vmatpush1.msra.mxu0 0.0
    %2441 = vmatprep.subr.mxu0 0.0
    %2442 = vmatpush1.msra.mxu0 0.0
    %2443 = vmatprep.subr.mxu0 0.0
    %2444 = vmatpush1.msra.mxu0 0.0
    %2445 = vmatprep.subr.mxu0 0.0
    %2446 = vmatpush1.msra.mxu0 0.0
    %2447 = vmatprep.subr.mxu0 0.0
    %2448 = vmatpush1.msra.mxu0 0.0
    %2449 = vmatprep.subr.mxu0 0.0
    %2450 = vmatpush1.msra.mxu0 0.0
    %2451 = vmatprep.subr.mxu0 0.0
    %2452 = vmatpush1.msra.mxu0 0.0
    %2453 = vmatprep.subr.mxu0 0.0
    %2454 = vmatpush1.msra.mxu0 0.0
    %2455 = vmatprep.subr.mxu0 0.0
    %2456 = vmatpush1.msra.mxu0 0.0
    %2457 = vmatprep.subr.mxu0 0.0
    %2458 = vmatpush1.msra.mxu0 0.0
    %2459 = vmatprep.subr.mxu0 0.0
    %2460 = vmatpush1.msra.mxu0 0.0
    %2461 = vmatprep.subr.mxu0 0.0
    %2462 = vmatpush1.msra.mxu0 0.0
    %2463 = vmatprep.subr.mxu0 0.0
    %2464 = vmatpush1.msra.mxu0 0.0
    %2465 = vmatprep.subr.mxu0 0.0
    %2466 = vmatpush1.msra.mxu0 0.0
    %2467 = vmatprep.subr.mxu0 0.0
    %2468 = vmatpush1.msra.mxu0 0.0
    %2469 = vmatprep.subr.mxu0 0.0
    %2470 = vmatpush1.msra.mxu0 0.0
    %2471 = vmatprep.subr.mxu0 0.0
    %2472 = vmatpush1.msra.mxu0 0.0
    %2473 = vmatprep.subr.mxu0 0.0
    %2474 = vmatpush1.msra.mxu0 0.0
    %2475 = vmatprep.subr.mxu0 0.0
    %2476 = vmatpush1.msra.mxu0 0.0
    %2477 = vmatprep.subr.mxu0 0.0
    %2478 = vmatpush1.msra.mxu0 0.0
    %2479 = vmatprep.subr.mxu0 0.0
    %2480 = vmatpush1.msra.mxu0 0.0
    %2481 = vmatprep.mubr.f32.mxu0 0.0
    %2482 = vmatmul.mubr.f32.gmra.mrb[0].mxu0 %v2415
    %v2483 = vpop.f32.mrb[0].mxu0
    %v2484 = vadd.f32 0.0, %v2483
    %v2485 = vpop.f32.mrb[0].mxu0
    %2486 = vdwg.mxu0
    %v2487 = vadd.f32 %v2411, %v2484
    %v2488 = vxor.u32 %v2487, 2147483648
    %v2489 = vmul.f32 %v2488, 1.442695
    %v2490 = vpow.pop %v2489
    %v2491 = vadd.f32 %v2490, 1.0
    %v2492 = vrcp.pop %v2491
    %v2493 = vmul.f32 1.0, %v2492
    %v2494 = vtanh.pop %v2487
    %v2495 = vmul.f32 %v2493, %v2404
    %2497 = vrot.lane.b32.xlu0 %v2494, 64
    %v2498 = vpop.permute.xlu0 %2497
    %v2500 = vmul.f32 %v2493, %v2498
    %2502 = vrot.lane.b32.xlu0 %v2500, 32
    %v2503 = vpop.permute.xlu0 %2502
    %v2505 = vadd.f32 %v2495, %v2503
    %v2506 = vtanh.pop %v2505
    %2508 = vrot.lane.b32.xlu0 %v2506, 64
    %v2509 = vpop.permute.xlu0 %2508
    %v2511 = vmul.f32 %v2493, %v2509
    %v2512 = vld [vmem:[#allocation2 + $0x10] sm:$0xf]
    %2514 = vrot.lane.b32.xlu0 %v2511, 32
    %v2515 = vpop.permute.xlu0 %2514
    %v2516 = vsel %vm225, %v2515, 0
    %2518 = vmatprep.subr.mxu0 0.0
    %2519 = vmatpush1.msra.mxu0 %v2109
    %2520 = vmatprep.subr.mxu0 0.0
    %2521 = vmatpush1.msra.mxu0 %v2110
    %2522 = vmatprep.subr.mxu0 0.0
    %2523 = vmatpush1.msra.mxu0 %v2111
    %2524 = vmatprep.subr.mxu0 0.0
    %2525 = vmatpush1.msra.mxu0 %v2112
    %2526 = vmatprep.subr.mxu0 0.0
    %2527 = vmatpush1.msra.mxu0 0.0
    %2528 = vmatprep.subr.mxu0 0.0
    %2529 = vmatpush1.msra.mxu0 0.0
    %2530 = vmatprep.subr.mxu0 0.0
    %2531 = vmatpush1.msra.mxu0 0.0
    %2532 = vmatprep.subr.mxu0 0.0
    %2533 = vmatpush1.msra.mxu0 0.0
    %2534 = vmatprep.subr.mxu0 0.0
    %2535 = vmatpush1.msra.mxu0 0.0
    %2536 = vmatprep.subr.mxu0 0.0
    %2537 = vmatpush1.msra.mxu0 0.0
    %2538 = vmatprep.subr.mxu0 0.0
    %2539 = vmatpush1.msra.mxu0 0.0
    %2540 = vmatprep.subr.mxu0 0.0
    %2541 = vmatpush1.msra.mxu0 0.0
    %2542 = vmatprep.subr.mxu0 0.0
    %2543 = vmatpush1.msra.mxu0 0.0
    %2544 = vmatprep.subr.mxu0 0.0
    %2545 = vmatpush1.msra.mxu0 0.0
    %2546 = vmatprep.subr.mxu0 0.0
    %2547 = vmatpush1.msra.mxu0 0.0
    %2548 = vmatprep.subr.mxu0 0.0
    %2549 = vmatpush1.msra.mxu0 0.0
    %2550 = vmatprep.subr.mxu0 0.0
    %2551 = vmatpush1.msra.mxu0 0.0
    %2552 = vmatprep.subr.mxu0 0.0
    %2553 = vmatpush1.msra.mxu0 0.0
    %2554 = vmatprep.subr.mxu0 0.0
    %2555 = vmatpush1.msra.mxu0 0.0
    %2556 = vmatprep.subr.mxu0 0.0
    %2557 = vmatpush1.msra.mxu0 0.0
    %2558 = vmatprep.subr.mxu0 0.0
    %2559 = vmatpush1.msra.mxu0 0.0
    %2560 = vmatprep.subr.mxu0 0.0
    %2561 = vmatpush1.msra.mxu0 0.0
    %2562 = vmatprep.subr.mxu0 0.0
    %2563 = vmatpush1.msra.mxu0 0.0
    %2564 = vmatprep.subr.mxu0 0.0
    %2565 = vmatpush1.msra.mxu0 0.0
    %2566 = vmatprep.subr.mxu0 0.0
    %2567 = vmatpush1.msra.mxu0 0.0
    %2568 = vmatprep.subr.mxu0 0.0
    %2569 = vmatpush1.msra.mxu0 0.0
    %2570 = vmatprep.subr.mxu0 0.0
    %2571 = vmatpush1.msra.mxu0 0.0
    %2572 = vmatprep.subr.mxu0 0.0
    %2573 = vmatpush1.msra.mxu0 0.0
    %2574 = vmatprep.subr.mxu0 0.0
    %2575 = vmatpush1.msra.mxu0 0.0
    %2576 = vmatprep.subr.mxu0 0.0
    %2577 = vmatpush1.msra.mxu0 0.0
    %2578 = vmatprep.subr.mxu0 0.0
    %2579 = vmatpush1.msra.mxu0 0.0
    %2580 = vmatprep.subr.mxu0 0.0
    %2581 = vmatpush1.msra.mxu0 0.0
    %2582 = vmatprep.mubr.f32.mxu0 0.0
    %2583 = vmatmul.mubr.f32.gmra.mrb[0].mxu0 %v2516
    %v2584 = vpop.f32.mrb[0].mxu0
    %v2585 = vadd.f32 0.0, %v2584
    %v2586 = vpop.f32.mrb[0].mxu0
    %2587 = vdwg.mxu0
    %v2588 = vadd.f32 %v2512, %v2585
    %v2589 = vxor.u32 %v2588, 2147483648
    %v2590 = vmul.f32 %v2589, 1.442695
    %v2591 = vpow.pop %v2590
    %v2592 = vadd.f32 %v2591, 1.0
    %v2593 = vrcp.pop %v2592
    %v2594 = vmul.f32 1.0, %v2593
    %v2595 = vtanh.pop %v2588
    %v2596 = vmul.f32 %v2594, %v2505
    %2598 = vrot.lane.b32.xlu0 %v2595, 64
    %v2599 = vpop.permute.xlu0 %2598
    %v2601 = vmul.f32 %v2594, %v2599
    %2603 = vrot.lane.b32.xlu0 %v2601, 32
    %v2604 = vpop.permute.xlu0 %2603
    %v2606 = vadd.f32 %v2596, %v2604
    %v2607 = vtanh.pop %v2606
    %2609 = vrot.lane.b32.xlu0 %v2607, 64
    %v2610 = vpop.permute.xlu0 %2609
    %v2612 = vmul.f32 %v2594, %v2610
    %v2613 = vld [vmem:[#allocation2 + $0x14] sm:$0xf]
    %2615 = vrot.lane.b32.xlu0 %v2612, 32
    %v2616 = vpop.permute.xlu0 %2615
    %v2617 = vsel %vm225, %v2616, 0
    %2619 = vmatprep.subr.mxu0 0.0
    %2620 = vmatpush1.msra.mxu0 %v2109
    %2621 = vmatprep.subr.mxu0 0.0
    %2622 = vmatpush1.msra.mxu0 %v2110
    %2623 = vmatprep.subr.mxu0 0.0
    %2624 = vmatpush1.msra.mxu0 %v2111
    %2625 = vmatprep.subr.mxu0 0.0
    %2626 = vmatpush1.msra.mxu0 %v2112
    %2627 = vmatprep.subr.mxu0 0.0
    %2628 = vmatpush1.msra.mxu0 0.0
    %2629 = vmatprep.subr.mxu0 0.0
    %2630 = vmatpush1.msra.mxu0 0.0
    %2631 = vmatprep.subr.mxu0 0.0
    %2632 = vmatpush1.msra.mxu0 0.0
    %2633 = vmatprep.subr.mxu0 0.0
    %2634 = vmatpush1.msra.mxu0 0.0
    %2635 = vmatprep.subr.mxu0 0.0
    %2636 = vmatpush1.msra.mxu0 0.0
    %2637 = vmatprep.subr.mxu0 0.0
    %2638 = vmatpush1.msra.mxu0 0.0
    %2639 = vmatprep.subr.mxu0 0.0
    %2640 = vmatpush1.msra.mxu0 0.0
    %2641 = vmatprep.subr.mxu0 0.0
    %2642 = vmatpush1.msra.mxu0 0.0
    %2643 = vmatprep.subr.mxu0 0.0
    %2644 = vmatpush1.msra.mxu0 0.0
    %2645 = vmatprep.subr.mxu0 0.0
    %2646 = vmatpush1.msra.mxu0 0.0
    %2647 = vmatprep.subr.mxu0 0.0
    %2648 = vmatpush1.msra.mxu0 0.0
    %2649 = vmatprep.subr.mxu0 0.0
    %2650 = vmatpush1.msra.mxu0 0.0
    %2651 = vmatprep.subr.mxu0 0.0
    %2652 = vmatpush1.msra.mxu0 0.0
    %2653 = vmatprep.subr.mxu0 0.0
    %2654 = vmatpush1.msra.mxu0 0.0
    %2655 = vmatprep.subr.mxu0 0.0
    %2656 = vmatpush1.msra.mxu0 0.0
    %2657 = vmatprep.subr.mxu0 0.0
    %2658 = vmatpush1.msra.mxu0 0.0
    %2659 = vmatprep.subr.mxu0 0.0
    %2660 = vmatpush1.msra.mxu0 0.0
    %2661 = vmatprep.subr.mxu0 0.0
    %2662 = vmatpush1.msra.mxu0 0.0
    %2663 = vmatprep.subr.mxu0 0.0
    %2664 = vmatpush1.msra.mxu0 0.0
    %2665 = vmatprep.subr.mxu0 0.0
    %2666 = vmatpush1.msra.mxu0 0.0
    %2667 = vmatprep.subr.mxu0 0.0
    %2668 = vmatpush1.msra.mxu0 0.0
    %2669 = vmatprep.subr.mxu0 0.0
    %2670 = vmatpush1.msra.mxu0 0.0
    %2671 = vmatprep.subr.mxu0 0.0
    %2672 = vmatpush1.msra.mxu0 0.0
    %2673 = vmatprep.subr.mxu0 0.0
    %2674 = vmatpush1.msra.mxu0 0.0
    %2675 = vmatprep.subr.mxu0 0.0
    %2676 = vmatpush1.msra.mxu0 0.0
    %2677 = vmatprep.subr.mxu0 0.0
    %2678 = vmatpush1.msra.mxu0 0.0
    %2679 = vmatprep.subr.mxu0 0.0
    %2680 = vmatpush1.msra.mxu0 0.0
    %2681 = vmatprep.subr.mxu0 0.0
    %2682 = vmatpush1.msra.mxu0 0.0
    %2683 = vmatprep.mubr.f32.mxu0 0.0
    %2684 = vmatmul.mubr.f32.gmra.mrb[0].mxu0 %v2617
    %v2685 = vpop.f32.mrb[0].mxu0
    %v2686 = vadd.f32 0.0, %v2685
    %v2687 = vpop.f32.mrb[0].mxu0
    %2688 = vdwg.mxu0
    %v2689 = vadd.f32 %v2613, %v2686
    %v2690 = vxor.u32 %v2689, 2147483648
    %v2691 = vmul.f32 %v2690, 1.442695
    %v2692 = vpow.pop %v2691
    %v2693 = vadd.f32 %v2692, 1.0
    %v2694 = vrcp.pop %v2693
    %v2695 = vmul.f32 1.0, %v2694
    %v2696 = vtanh.pop %v2689
    %v2697 = vmul.f32 %v2695, %v2606
    %2699 = vrot.lane.b32.xlu0 %v2696, 64
    %v2700 = vpop.permute.xlu0 %2699
    %v2702 = vmul.f32 %v2695, %v2700
    %2704 = vrot.lane.b32.xlu0 %v2702, 32
    %v2705 = vpop.permute.xlu0 %2704
    %v2707 = vadd.f32 %v2697, %v2705
    %v2708 = vtanh.pop %v2707
    %2710 = vrot.lane.b32.xlu0 %v2708, 64
    %v2711 = vpop.permute.xlu0 %2710
    %v2713 = vmul.f32 %v2695, %v2711
    %v2714 = vld [vmem:[#allocation2 + $0x18] sm:$0xf]
    %2716 = vrot.lane.b32.xlu0 %v2713, 32
    %v2717 = vpop.permute.xlu0 %2716
    %v2718 = vsel %vm225, %v2717, 0
    %2720 = vmatprep.subr.mxu0 0.0
    %2721 = vmatpush1.msra.mxu0 %v2109
    %2722 = vmatprep.subr.mxu0 0.0
    %2723 = vmatpush1.msra.mxu0 %v2110
    %2724 = vmatprep.subr.mxu0 0.0
    %2725 = vmatpush1.msra.mxu0 %v2111
    %2726 = vmatprep.subr.mxu0 0.0
    %2727 = vmatpush1.msra.mxu0 %v2112
    %2728 = vmatprep.subr.mxu0 0.0
    %2729 = vmatpush1.msra.mxu0 0.0
    %2730 = vmatprep.subr.mxu0 0.0
    %2731 = vmatpush1.msra.mxu0 0.0
    %2732 = vmatprep.subr.mxu0 0.0
    %2733 = vmatpush1.msra.mxu0 0.0
    %2734 = vmatprep.subr.mxu0 0.0
    %2735 = vmatpush1.msra.mxu0 0.0
    %2736 = vmatprep.subr.mxu0 0.0
    %2737 = vmatpush1.msra.mxu0 0.0
    %2738 = vmatprep.subr.mxu0 0.0
    %2739 = vmatpush1.msra.mxu0 0.0
    %2740 = vmatprep.subr.mxu0 0.0
    %2741 = vmatpush1.msra.mxu0 0.0
    %2742 = vmatprep.subr.mxu0 0.0
    %2743 = vmatpush1.msra.mxu0 0.0
    %2744 = vmatprep.subr.mxu0 0.0
    %2745 = vmatpush1.msra.mxu0 0.0
    %2746 = vmatprep.subr.mxu0 0.0
    %2747 = vmatpush1.msra.mxu0 0.0
    %2748 = vmatprep.subr.mxu0 0.0
    %2749 = vmatpush1.msra.mxu0 0.0
    %2750 = vmatprep.subr.mxu0 0.0
    %2751 = vmatpush1.msra.mxu0 0.0
    %2752 = vmatprep.subr.mxu0 0.0
    %2753 = vmatpush1.msra.mxu0 0.0
    %2754 = vmatprep.subr.mxu0 0.0
    %2755 = vmatpush1.msra.mxu0 0.0
    %2756 = vmatprep.subr.mxu0 0.0
    %2757 = vmatpush1.msra.mxu0 0.0
    %2758 = vmatprep.subr.mxu0 0.0
    %2759 = vmatpush1.msra.mxu0 0.0
    %2760 = vmatprep.subr.mxu0 0.0
    %2761 = vmatpush1.msra.mxu0 0.0
    %2762 = vmatprep.subr.mxu0 0.0
    %2763 = vmatpush1.msra.mxu0 0.0
    %2764 = vmatprep.subr.mxu0 0.0
    %2765 = vmatpush1.msra.mxu0 0.0
    %2766 = vmatprep.subr.mxu0 0.0
    %2767 = vmatpush1.msra.mxu0 0.0
    %2768 = vmatprep.subr.mxu0 0.0
    %2769 = vmatpush1.msra.mxu0 0.0
    %2770 = vmatprep.subr.mxu0 0.0
    %2771 = vmatpush1.msra.mxu0 0.0
    %2772 = vmatprep.subr.mxu0 0.0
    %2773 = vmatpush1.msra.mxu0 0.0
    %2774 = vmatprep.subr.mxu0 0.0
    %2775 = vmatpush1.msra.mxu0 0.0
    %2776 = vmatprep.subr.mxu0 0.0
    %2777 = vmatpush1.msra.mxu0 0.0
    %2778 = vmatprep.subr.mxu0 0.0
    %2779 = vmatpush1.msra.mxu0 0.0
    %2780 = vmatprep.subr.mxu0 0.0
    %2781 = vmatpush1.msra.mxu0 0.0
    %2782 = vmatprep.subr.mxu0 0.0
    %2783 = vmatpush1.msra.mxu0 0.0
    %2784 = vmatprep.mubr.f32.mxu0 0.0
    %2785 = vmatmul.mubr.f32.gmra.mrb[0].mxu0 %v2718
    %v2786 = vpop.f32.mrb[0].mxu0
    %v2787 = vadd.f32 0.0, %v2786
    %v2788 = vpop.f32.mrb[0].mxu0
    %2789 = vdwg.mxu0
    %v2790 = vadd.f32 %v2714, %v2787
    %v2791 = vxor.u32 %v2790, 2147483648
    %v2792 = vmul.f32 %v2791, 1.442695
    %v2793 = vpow.pop %v2792
    %v2794 = vadd.f32 %v2793, 1.0
    %v2795 = vrcp.pop %v2794
    %v2796 = vmul.f32 1.0, %v2795
    %v2797 = vtanh.pop %v2790
    %v2798 = vmul.f32 %v2796, %v2707
    %2800 = vrot.lane.b32.xlu0 %v2797, 64
    %v2801 = vpop.permute.xlu0 %2800
    %v2803 = vmul.f32 %v2796, %v2801
    %2805 = vrot.lane.b32.xlu0 %v2803, 32
    %v2806 = vpop.permute.xlu0 %2805
    %v2808 = vadd.f32 %v2798, %v2806
    %v2809 = vtanh.pop %v2808
    %2811 = vrot.lane.b32.xlu0 %v2809, 64
    %v2812 = vpop.permute.xlu0 %2811
    %v2814 = vmul.f32 %v2796, %v2812
    %v2815 = vld [vmem:[#allocation2 + $0x1c] sm:$0xf]
    %2817 = vrot.lane.b32.xlu0 %v2814, 32
    %v2818 = vpop.permute.xlu0 %2817
    %v2819 = vsel %vm225, %v2818, 0
    %2821 = vmatprep.subr.mxu0 0.0
    %2822 = vmatpush1.msra.mxu0 %v2109
    %2823 = vmatprep.subr.mxu0 0.0
    %2824 = vmatpush1.msra.mxu0 %v2110
    %2825 = vmatprep.subr.mxu0 0.0
    %2826 = vmatpush1.msra.mxu0 %v2111
    %2827 = vmatprep.subr.mxu0 0.0
    %2828 = vmatpush1.msra.mxu0 %v2112
    %2829 = vmatprep.subr.mxu0 0.0
    %2830 = vmatpush1.msra.mxu0 0.0
    %2831 = vmatprep.subr.mxu0 0.0
    %2832 = vmatpush1.msra.mxu0 0.0
    %2833 = vmatprep.subr.mxu0 0.0
    %2834 = vmatpush1.msra.mxu0 0.0
    %2835 = vmatprep.subr.mxu0 0.0
    %2836 = vmatpush1.msra.mxu0 0.0
    %2837 = vmatprep.subr.mxu0 0.0
    %2838 = vmatpush1.msra.mxu0 0.0
    %2839 = vmatprep.subr.mxu0 0.0
    %2840 = vmatpush1.msra.mxu0 0.0
    %2841 = vmatprep.subr.mxu0 0.0
    %2842 = vmatpush1.msra.mxu0 0.0
    %2843 = vmatprep.subr.mxu0 0.0
    %2844 = vmatpush1.msra.mxu0 0.0
    %2845 = vmatprep.subr.mxu0 0.0
    %2846 = vmatpush1.msra.mxu0 0.0
    %2847 = vmatprep.subr.mxu0 0.0
    %2848 = vmatpush1.msra.mxu0 0.0
    %2849 = vmatprep.subr.mxu0 0.0
    %2850 = vmatpush1.msra.mxu0 0.0
    %2851 = vmatprep.subr.mxu0 0.0
    %2852 = vmatpush1.msra.mxu0 0.0
    %2853 = vmatprep.subr.mxu0 0.0
    %2854 = vmatpush1.msra.mxu0 0.0
    %2855 = vmatprep.subr.mxu0 0.0
    %2856 = vmatpush1.msra.mxu0 0.0
    %2857 = vmatprep.subr.mxu0 0.0
    %2858 = vmatpush1.msra.mxu0 0.0
    %2859 = vmatprep.subr.mxu0 0.0
    %2860 = vmatpush1.msra.mxu0 0.0
    %2861 = vmatprep.subr.mxu0 0.0
    %2862 = vmatpush1.msra.mxu0 0.0
    %2863 = vmatprep.subr.mxu0 0.0
    %2864 = vmatpush1.msra.mxu0 0.0
    %2865 = vmatprep.subr.mxu0 0.0
    %2866 = vmatpush1.msra.mxu0 0.0
    %2867 = vmatprep.subr.mxu0 0.0
    %2868 = vmatpush1.msra.mxu0 0.0
    %2869 = vmatprep.subr.mxu0 0.0
    %2870 = vmatpush1.msra.mxu0 0.0
    %2871 = vmatprep.subr.mxu0 0.0
    %2872 = vmatpush1.msra.mxu0 0.0
    %2873 = vmatprep.subr.mxu0 0.0
    %2874 = vmatpush1.msra.mxu0 0.0
    %2875 = vmatprep.subr.mxu0 0.0
    %2876 = vmatpush1.msra.mxu0 0.0
    %2877 = vmatprep.subr.mxu0 0.0
    %2878 = vmatpush1.msra.mxu0 0.0
    %2879 = vmatprep.subr.mxu0 0.0
    %2880 = vmatpush1.msra.mxu0 0.0
    %2881 = vmatprep.subr.mxu0 0.0
    %2882 = vmatpush1.msra.mxu0 0.0
    %2883 = vmatprep.subr.mxu0 0.0
    %2884 = vmatpush1.msra.mxu0 0.0
    %2885 = vmatprep.mubr.f32.mxu0 0.0
    %2886 = vmatmul.mubr.f32.gmra.mrb[0].mxu0 %v2819
    %v2887 = vpop.f32.mrb[0].mxu0
    %v2888 = vadd.f32 0.0, %v2887
    %v2889 = vpop.f32.mrb[0].mxu0
    %2890 = vdwg.mxu0
    %v2891 = vadd.f32 %v2815, %v2888
    %v2892 = vxor.u32 %v2891, 2147483648
    %v2893 = vmul.f32 %v2892, 1.442695
    %v2894 = vpow.pop %v2893
    %v2895 = vadd.f32 %v2894, 1.0
    %v2896 = vrcp.pop %v2895
    %v2897 = vmul.f32 1.0, %v2896
    %v2898 = vtanh.pop %v2891
    %v2899 = vmul.f32 %v2897, %v2808
    %2901 = vrot.lane.b32.xlu0 %v2898, 64
    %v2902 = vpop.permute.xlu0 %2901
    %v2904 = vmul.f32 %v2897, %v2902
    %2906 = vrot.lane.b32.xlu0 %v2904, 32
    %v2907 = vpop.permute.xlu0 %2906
    %v2909 = vadd.f32 %v2899, %v2907
    %v2910 = vtanh.pop %v2909
    %2912 = vrot.lane.b32.xlu0 %v2910, 64
    %v2913 = vpop.permute.xlu0 %2912
    %v2915 = vmul.f32 %v2897, %v2913
    %vm2916 = vcmask 1044224
    %v2917 = vsel %vm2916, %v2915, 0.0
    %v2918 = vrot.slane %v2917, 4
    %v2919 = vadd.f32 %v2917, %v2918
    %v2920 = vrot.slane %v2919, 2
    %v2921 = vadd.f32 %v2919, %v2920
    %v2922 = vrot.slane %v2921, 1
    %v2923 = vadd.f32 %v2921, %v2922
    %v2924 = vrcp.pop 4.0
    %v2925 = vmul.f32 %v2923, %v2924
    %v2926 = vsub.f32 %v2915, %v2925
    %v2927 = vmul.f32 %v2926, %v2926
    %v2928 = vsel %vm2916, %v2927, 0.0
    %v2929 = vrot.slane %v2928, 4
    %v2930 = vadd.f32 %v2928, %v2929
    %v2931 = vrot.slane %v2930, 2
    %v2932 = vadd.f32 %v2930, %v2931
    %v2933 = vrot.slane %v2932, 1
    %v2934 = vadd.f32 %v2932, %v2933
    %v2935 = vmul.f32 %v2934, %v2924
    %v2936 = vadd.f32 %v2935, 1e-05
    %v2937 = vrsqrt.pop %v2936
    %v2938 = vmul.f32 %v2926, %v2937
    %v2939 = vld [vmem:[#allocation9] sm:$0x1]
    %v2941 = vlaneseq
    %v2942 = vshrl.u32 %v2941, 7
    %v2943 = vsub.s32 0, %v2942
    %v2944 = vrot.slane %v2939, %v2943
    %2945 = vrot.lane.b32.xlu0 %v2944, 96
    %v2946 = vpop.permute.xlu0 %2945
    %v2948 = vmul.f32 %v2938, %v2946
    %v2949 = vld [vmem:[#allocation10] sm:$0x1]
    %v2951 = vlaneseq
    %v2952 = vshrl.u32 %v2951, 7
    %v2953 = vsub.s32 0, %v2952
    %v2954 = vrot.slane %v2949, %v2953
    %2955 = vrot.lane.b32.xlu0 %v2954, 96
    %v2956 = vpop.permute.xlu0 %2955
    %v2958 = vadd.f32 %v2948, %v2956
    %v2959 = vld [vmem:[%s12] sm:$0xff]
    %v2960 = vld [vmem:[%s12 + $0x8] sm:$0xff]
    %v2961 = vld [vmem:[%s12 + $0x10] sm:$0xff]
    %v2962 = vld [vmem:[%s12 + $0x18] sm:$0xff]
    %v2963 = vld [vmem:[#allocation12] sm:$0x1]
    %v2965 = vlaneseq
    %v2966 = vshrl.u32 %v2965, 7
    %v2967 = vsub.s32 0, %v2966
    %v2968 = vrot.slane %v2963, %v2967
    %2971 = vrot.lane.b32.xlu0 %v2958, 32
    %v2972 = vpop.permute.xlu0 %2971
    %v2973 = vsel %vm225, %v2972, 0
    %2975 = vmatprep.subr.mxu0 0.0
    %2976 = vmatpush1.msra.mxu0 %v2959
    %2977 = vmatprep.subr.mxu0 0.0
    %2978 = vmatpush1.msra.mxu0 %v2960
    %2979 = vmatprep.subr.mxu0 0.0
    %2980 = vmatpush1.msra.mxu0 %v2961
    %2981 = vmatprep.subr.mxu0 0.0
    %2982 = vmatpush1.msra.mxu0 %v2962
    %2983 = vmatprep.subr.mxu0 0.0
    %2984 = vmatpush1.msra.mxu0 0.0
    %2985 = vmatprep.subr.mxu0 0.0
    %2986 = vmatpush1.msra.mxu0 0.0
    %2987 = vmatprep.subr.mxu0 0.0
    %2988 = vmatpush1.msra.mxu0 0.0
    %2989 = vmatprep.subr.mxu0 0.0
    %2990 = vmatpush1.msra.mxu0 0.0
    %2991 = vmatprep.subr.mxu0 0.0
    %2992 = vmatpush1.msra.mxu0 0.0
    %2993 = vmatprep.subr.mxu0 0.0
    %2994 = vmatpush1.msra.mxu0 0.0
    %2995 = vmatprep.subr.mxu0 0.0
    %2996 = vmatpush1.msra.mxu0 0.0
    %2997 = vmatprep.subr.mxu0 0.0
    %2998 = vmatpush1.msra.mxu0 0.0
    %2999 = vmatprep.subr.mxu0 0.0
    %3000 = vmatpush1.msra.mxu0 0.0
    %3001 = vmatprep.subr.mxu0 0.0
    %3002 = vmatpush1.msra.mxu0 0.0
    %3003 = vmatprep.subr.mxu0 0.0
    %3004 = vmatpush1.msra.mxu0 0.0
    %3005 = vmatprep.subr.mxu0 0.0
    %3006 = vmatpush1.msra.mxu0 0.0
    %3007 = vmatprep.subr.mxu0 0.0
    %3008 = vmatpush1.msra.mxu0 0.0
    %3009 = vmatprep.subr.mxu0 0.0
    %3010 = vmatpush1.msra.mxu0 0.0
    %3011 = vmatprep.subr.mxu0 0.0
    %3012 = vmatpush1.msra.mxu0 0.0
    %3013 = vmatprep.subr.mxu0 0.0
    %3014 = vmatpush1.msra.mxu0 0.0
    %3015 = vmatprep.subr.mxu0 0.0
    %3016 = vmatpush1.msra.mxu0 0.0
    %3017 = vmatprep.subr.mxu0 0.0
    %3018 = vmatpush1.msra.mxu0 0.0
    %3019 = vmatprep.subr.mxu0 0.0
    %3020 = vmatpush1.msra.mxu0 0.0
    %3021 = vmatprep.subr.mxu0 0.0
    %3022 = vmatpush1.msra.mxu0 0.0
    %3023 = vmatprep.subr.mxu0 0.0
    %3024 = vmatpush1.msra.mxu0 0.0
    %3025 = vmatprep.subr.mxu0 0.0
    %3026 = vmatpush1.msra.mxu0 0.0
    %3027 = vmatprep.subr.mxu0 0.0
    %3028 = vmatpush1.msra.mxu0 0.0
    %3029 = vmatprep.subr.mxu0 0.0
    %3030 = vmatpush1.msra.mxu0 0.0
    %3031 = vmatprep.subr.mxu0 0.0
    %3032 = vmatpush1.msra.mxu0 0.0
    %3033 = vmatprep.subr.mxu0 0.0
    %3034 = vmatpush1.msra.mxu0 0.0
    %3035 = vmatprep.subr.mxu0 0.0
    %3036 = vmatpush1.msra.mxu0 0.0
    %3037 = vmatprep.subr.mxu0 0.0
    %3038 = vmatpush1.msra.mxu0 0.0
    %3039 = vmatprep.mubr.f32.mxu0 0.0
    %3040 = vmatmul.mubr.f32.gmra.mrb[0].mxu0 %v2973
    %v3041 = vpop.f32.mrb[0].mxu0
    %v3042 = vadd.f32 %v2968, %v3041
    %v3043 = vpop.f32.mrb[0].mxu0
    %3044 = vdwg.mxu0
    %vm3045 = vcmask 35840
    %3046 = vst.msk [vmem:[#allocation13] sm:$0xf] %vm3045, %v3042
    // Predicated region
    $region78: #{lstm_model_forward.1} parent=1 // pred_check
      _
    $region79: #{lstm_model_forward.1} parent=1 // pred_check_branch
      %3048 = sbr.rel (0) target = $region81
    $region80: #{lstm_model_forward.1} parent=1 // pred_region
      %s3050 = ssub.s32 64, 64
      %3051 = vsyncadd [#allocation6], %s3050
      %s3053 = sshll.u32 [#allocation13], 4
      %s3054 = int_to_ptr.vmem [resolvable:$true] %s3053
      %3056 = dma.vmem_to_hbm [thread:$0]  %s3054, 64, %s14, [#allocation6]
    $region81: #{lstm_model_forward.1} parent=1 // pred_fallthru
      _
    // Predicated region
    $region82: #{lstm_model_forward.1} parent=1 // pred_check
      _
    $region83: #{lstm_model_forward.1} parent=1 // pred_check_branch
      %3058 = sbr.rel (0) target = $region85
    $region84: #{lstm_model_forward.1} parent=1 // pred_region
      %3059 = dma.done [#allocation6], 64
    $region85: #{lstm_model_forward.1} parent=1 // pred_fallthru
      _
    %3060 = vsyncpa [#allocation5], 1
    %3061 = vsyncpa [#allocation8], 1
    %3062 = vsyncpa [#allocation11], 1
    %3063 = vsyncpa [#allocation6], 1

</llo_original>
